<compile_context>
chip_gen: v7x
topology: tpu7x:2x2x1
jax: 0.10.0
libtpu: 0.0.40
codegen_flags: <defaults>
</compile_context>

<pallas_src>
import numpy as np
import jax
import jax.numpy as jnp
from jax import lax
from jax.experimental import pallas as pl
from jax.experimental.pallas import tpu as pltpu

_EPS = 1e-5
# Tap order matches PyTorch conv weight layout: k = kh*3 + kw, (dh, dw) = (kh-1, kw-1).
_TAPS = tuple((dh, dw) for dh in (-1, 0, 1) for dw in (-1, 0, 1))


# --------------------------------------------------------------------------- #
# Kernel
# --------------------------------------------------------------------------- #
def _make_col_masks(height, width):
    """(2, H*W) f32 masks: row 0 = valid pixels for dw=-1 taps, row 1 = dw=+1 taps.

    Row (dh) out-of-bounds taps read the zero halo, so only the column-wrap reads
    (dw != 0 at the left/right image border) need explicit masking.
    """
    col = np.arange(height * width) % width
    left = (col >= 1).astype(np.float32)
    right = (col <= width - 2).astype(np.float32)
    return jnp.asarray(np.stack([left, right], axis=0))


def _make_fused_kernel(width, hw, pad, cin, c3, c5, c7):
    def fill_im2col(src_ref, dst_ref, mask_ref, ch):
        """Stack 9 masked, shifted (ch, hw) slices of a halo-padded ref into dst."""
        for k, (dh, dw) in enumerate(_TAPS):
            off = pad + dh * width + dw          # always in [0, 2*pad]: in-bounds slice
            xs = src_ref[:, off:off + hw]
            if dw == -1:                         # left image border column wrap
                xs = xs * mask_ref[0:1, :]
            elif dw == 1:                        # right image border column wrap
                xs = xs * mask_ref[1:2, :]
            dst_ref[k * ch:(k + 1) * ch, :] = xs

    def kernel(x_ref, mask_ref,
               w3_ref, b3_ref, w5_ref, b5_ref, w7_ref, b7_ref,
               ws3_ref, ws5_ref, ws7_ref,
               sc3_ref, sh3_ref, sc5_ref, sh5_ref, sc7_ref, sh7_ref,
               o_ref,
               x_halo, a_halo, b_halo, im3_ref, im5_ref, im7_ref):
        # Zero the halo buffers every step (cheap at this size and megacore-safe:
        # program_id(0)==0 may never run on the second TensorCore).
        x_halo[...] = jnp.zeros_like(x_halo)
        a_halo[...] = jnp.zeros_like(a_halo)
        b_halo[...] = jnp.zeros_like(b_halo)

        x = x_ref[...].astype(jnp.float32)
        x_halo[:, pad:pad + hw] = x

        # a = relu(BN(conv3x3(x)))  -- one im2col matmul, BN folded into w3/b3.
        fill_im2col(x_halo, im3_ref, mask_ref, cin)
        a = jnp.maximum(
            jnp.dot(w3_ref[...], im3_ref[...], preferred_element_type=jnp.float32)
            + b3_ref[...], 0.0)
        a_halo[:, pad:pad + hw] = a

        # b = relu(BN(conv3x3(a)))
        fill_im2col(a_halo, im5_ref, mask_ref, c3)
        b = jnp.maximum(
            jnp.dot(w5_ref[...], im5_ref[...], preferred_element_type=jnp.float32)
            + b5_ref[...], 0.0)
        b_halo[:, pad:pad + hw] = b

        # c = relu(BN(conv3x3(b)))
        fill_im2col(b_halo, im7_ref, mask_ref, c5)
        c = jnp.maximum(
            jnp.dot(w7_ref[...], im7_ref[...], preferred_element_type=jnp.float32)
            + b7_ref[...], 0.0)

        # Fused tail:
        #   out = relu( (s2*s1) * concat[a,b,c] + s2*BN_sc(conv1x1(x)) + shift_total )
        # computed per branch and written directly into the output sublane slices
        # (no materialized concat, no full-width temporary). Shortcut weights are
        # pre-split per branch so no unaligned sublane slicing of a (51, hw) value.
        s3 = jnp.dot(ws3_ref[...], x, preferred_element_type=jnp.float32)
        s5 = jnp.dot(ws5_ref[...], x, preferred_element_type=jnp.float32)
        s7 = jnp.dot(ws7_ref[...], x, preferred_element_type=jnp.float32)
        o_ref[0:c3, :] = jnp.maximum(
            sc3_ref[...] * a + s3 + sh3_ref[...], 0.0).astype(o_ref.dtype)
        o_ref[c3:c3 + c5, :] = jnp.maximum(
            sc5_ref[...] * b + s5 + sh5_ref[...], 0.0).astype(o_ref.dtype)
        o_ref[c3 + c5:c3 + c5 + c7, :] = jnp.maximum(
            sc7_ref[...] * c + s7 + sh7_ref[...], 0.0).astype(o_ref.dtype)

    return kernel


# --------------------------------------------------------------------------- #
# Parameter folding + forward
# --------------------------------------------------------------------------- #
def _bn_scale_shift(p):
    s = p["gamma"] / jnp.sqrt(p["var"] + _EPS)
    return s, p["beta"] - s * p["mean"]


def _fold_conv_bn(p):
    """Fold inference-mode BN into the conv weight / bias."""
    s, t = _bn_scale_shift(p)
    w = p["w"] * s[:, None, None, None]
    bias = s * p["b"] + t
    return w, bias


def _to_im2col(w):
    """(Cout, Cin, 3, 3) -> (Cout, 9*Cin); column order = tap-major (matching _TAPS)."""
    co, ci = w.shape[0], w.shape[1]
    return jnp.transpose(w, (0, 2, 3, 1)).reshape(co, 9 * ci)


def multiresblock_forward(x_nchw, params):
    n, cin, height, width = x_nchw.shape
    hw = height * width
    pad = width + 1                      # zero halo: every conv tap is an in-bounds slice
    hwp = hw + 2 * pad

    # Fold BatchNorms of the Conv2d_batchnorm sub-blocks into weights/biases.
    wa, ba = _fold_conv_bn(params["conv_3x3"])
    wb, bb = _fold_conv_bn(params["conv_5x5"])
    wc, bc = _fold_conv_bn(params["conv_7x7"])
    wsc, bsc = _fold_conv_bn(params["shortcut"])
    c3, c5, c7 = wa.shape[0], wb.shape[0], wc.shape[0]
    cout = c3 + c5 + c7

    # Fold BN1 / BN2 / shortcut into the tail's affine parameters:
    #   out = relu( (s2*s1)*cat + conv1x1_{wsc*s2}(x) + s2*(t1 + bsc) + t2 )
    # (note: the (s2*s1) scale must stay AFTER the branch ReLUs; gamma may be <0.)
    s1, t1 = _bn_scale_shift(params["bn1"])
    s2, t2 = _bn_scale_shift(params["bn2"])
    scale_cat = s2 * s1
    shift_tot = s2 * (t1 + bsc) + t2
    wsc_fin = (wsc * s2[:, None, None, None])[:, :, 0, 0]        # (cout, cin)

    masks = _make_col_masks(height, width)
    x_flat = x_nchw.reshape(n, cin, hw)

    def col(v):
        return v[:, None]

    kernel = _make_fused_kernel(width, hw, pad, cin, c3, c5, c7)
    out = pl.pallas_call(
        kernel,
        out_shape=jax.ShapeDtypeStruct((n, cout, hw), x_nchw.dtype),
        grid_spec=pltpu.PrefetchScalarGridSpec(
            num_scalar_prefetch=0,
            grid=(n,),
            in_specs=[
                pl.BlockSpec((None, cin, hw), lambda i: (i, 0, 0)),   # x (N,Cin,HW)
                pl.BlockSpec((2, hw), lambda i: (0, 0)),              # column masks
                pl.BlockSpec((c3, 9 * cin), lambda i: (0, 0)),        # conv_3x3 im2col w
                pl.BlockSpec((c3, 1), lambda i: (0, 0)),              # conv_3x3 bias
                pl.BlockSpec((c5, 9 * c3), lambda i: (0, 0)),         # conv_5x5 im2col w
                pl.BlockSpec((c5, 1), lambda i: (0, 0)),              # conv_5x5 bias
                pl.BlockSpec((c7, 9 * c5), lambda i: (0, 0)),         # conv_7x7 im2col w
                pl.BlockSpec((c7, 1), lambda i: (0, 0)),              # conv_7x7 bias
                pl.BlockSpec((c3, cin), lambda i: (0, 0)),            # shortcut w (a rows)
                pl.BlockSpec((c5, cin), lambda i: (0, 0)),            # shortcut w (b rows)
                pl.BlockSpec((c7, cin), lambda i: (0, 0)),            # shortcut w (c rows)
                pl.BlockSpec((c3, 1), lambda i: (0, 0)),              # scale  (a rows)
                pl.BlockSpec((c3, 1), lambda i: (0, 0)),              # shift  (a rows)
                pl.BlockSpec((c5, 1), lambda i: (0, 0)),              # scale  (b rows)
                pl.BlockSpec((c5, 1), lambda i: (0, 0)),              # shift  (b rows)
                pl.BlockSpec((c7, 1), lambda i: (0, 0)),              # scale  (c rows)
                pl.BlockSpec((c7, 1), lambda i: (0, 0)),              # shift  (c rows)
            ],
            out_specs=pl.BlockSpec((None, cout, hw), lambda i: (i, 0, 0)),
            scratch_shapes=[
                pltpu.VMEM((cin, hwp), jnp.float32),                  # x halo
                pltpu.VMEM((c3, hwp), jnp.float32),                   # a halo
                pltpu.VMEM((c5, hwp), jnp.float32),                   # b halo
                pltpu.VMEM((9 * cin, hw), jnp.float32),               # im2col(x)
                pltpu.VMEM((9 * c3, hw), jnp.float32),                # im2col(a)
                pltpu.VMEM((9 * c5, hw), jnp.float32),                # im2col(b)
            ],
        ),
        compiler_params=pltpu.CompilerParams(
            dimension_semantics=("parallel",)),
    )(x_flat, masks,
      _to_im2col(wa), col(ba), _to_im2col(wb), col(bb), _to_im2col(wc), col(bc),
      wsc_fin[:c3], wsc_fin[c3:c3 + c5], wsc_fin[c3 + c5:],
      col(scale_cat[:c3]), col(shift_tot[:c3]),
      col(scale_cat[c3:c3 + c5]), col(shift_tot[c3:c3 + c5]),
      col(scale_cat[c3 + c5:]), col(shift_tot[c3 + c5:]))
    return out.reshape(n, cout, height, width)        # already NCHW


# --------------------------------------------------------------------------- #
# Pure-JAX reference (for verification) and synthetic parameters
# --------------------------------------------------------------------------- #
def _conv_bn_ref(x, p, act):
    kh, kw = p["w"].shape[2], p["w"].shape[3]
    y = lax.conv_general_dilated(
        x, p["w"], window_strides=(1, 1),
        padding=((kh // 2, kh // 2), (kw // 2, kw // 2)),
        dimension_numbers=("NCHW", "OIHW", "NCHW"))
    y = y + p["b"][None, :, None, None]
    y = (p["gamma"][None, :, None, None]
         * (y - p["mean"][None, :, None, None])
         / jnp.sqrt(p["var"][None, :, None, None] + _EPS)
         + p["beta"][None, :, None, None])
    return jnp.maximum(y, 0.0) if act else y


def _bn_ref(x, p):
    return (p["gamma"][None, :, None, None]
            * (x - p["mean"][None, :, None, None])
            / jnp.sqrt(p["var"][None, :, None, None] + _EPS)
            + p["beta"][None, :, None, None])


def multiresblock_reference(x, params):
    shrtct = _conv_bn_ref(x, params["shortcut"], act=False)
    a = _conv_bn_ref(x, params["conv_3x3"], act=True)
    b = _conv_bn_ref(a, params["conv_5x5"], act=True)
    c = _conv_bn_ref(b, params["conv_7x7"], act=True)
    cat = jnp.concatenate([a, b, c], axis=1)
    y = _bn_ref(cat, params["bn1"]) + shrtct
    y = _bn_ref(y, params["bn2"])
    return jnp.maximum(y, 0.0)


def make_params(key, num_in_channels, num_filters, alpha=1.67):
    w_total = num_filters * alpha
    c3 = int(w_total * 0.167)
    c5 = int(w_total * 0.333)
    c7 = int(w_total * 0.5)
    cout = c3 + c5 + c7
    keys = iter(jax.random.split(key, 40))

    def conv_bn(ci, co, k):
        return dict(
            w=0.1 * jax.random.normal(next(keys), (co, ci, k, k), jnp.float32),
            b=0.1 * jax.random.normal(next(keys), (co,), jnp.float32),
            gamma=1.0 + 0.1 * jax.random.normal(next(keys), (co,), jnp.float32),
            beta=0.1 * jax.random.normal(next(keys), (co,), jnp.float32),
            mean=0.1 * jax.random.normal(next(keys), (co,), jnp.float32),
            var=jax.random.uniform(next(keys), (co,), jnp.float32, 0.5, 1.5),
        )

    def bn(co):
        return dict(
            gamma=1.0 + 0.1 * jax.random.normal(next(keys), (co,), jnp.float32),
            beta=0.1 * jax.random.normal(next(keys), (co,), jnp.float32),
            mean=0.1 * jax.random.normal(next(keys), (co,), jnp.float32),
            var=jax.random.uniform(next(keys), (co,), jnp.float32, 0.5, 1.5),
        )

    params = dict(
        shortcut=conv_bn(num_in_channels, cout, 1),
        conv_3x3=conv_bn(num_in_channels, c3, 3),
        conv_5x5=conv_bn(c3, c5, 3),
        conv_7x7=conv_bn(c5, c7, 3),
        bn1=bn(cout),
        bn2=bn(cout),
    )
    return params, cout


if __name__ == "__main__":
    # Multiresblock(num_in_channels=4, num_filters=32) -> channels 8 + 17 + 26 = 51
    batch, num_in_channels, height, width, num_filters = 2, 4, 16, 16, 32

    key = jax.random.PRNGKey(0)
    kx, kp = jax.random.split(key)
    x = jax.random.normal(kx, (batch, num_in_channels, height, width), jnp.float32)
    params, cout = make_params(kp, num_in_channels, num_filters)

    fwd = jax.jit(multiresblock_forward)
    out = jax.block_until_ready(fwd(x, params))
    assert out.shape == (batch, cout, height, width)

    ref = multiresblock_reference(x, params)
    max_err = float(jnp.max(jnp.abs(out - ref)))
    assert jnp.allclose(out, ref, atol=2e-4, rtol=2e-4), max_err

    print("KERNEL_OK")
</pallas_src>

<mosaic_0001>
module attributes {stable_mosaic.version = 11 : i64} {
  func.func @kernel(%arg0: i32, %arg1: memref<1x4x256xf32, #tpu.memory_space<vmem>>, %arg2: memref<2x256xf32, #tpu.memory_space<vmem>>, %arg3: memref<8x36xf32, #tpu.memory_space<vmem>>, %arg4: memref<8x1xf32, #tpu.memory_space<vmem>>, %arg5: memref<17x72xf32, #tpu.memory_space<vmem>>, %arg6: memref<17x1xf32, #tpu.memory_space<vmem>>, %arg7: memref<26x153xf32, #tpu.memory_space<vmem>>, %arg8: memref<26x1xf32, #tpu.memory_space<vmem>>, %arg9: memref<8x4xf32, #tpu.memory_space<vmem>>, %arg10: memref<17x4xf32, #tpu.memory_space<vmem>>, %arg11: memref<26x4xf32, #tpu.memory_space<vmem>>, %arg12: memref<8x1xf32, #tpu.memory_space<vmem>>, %arg13: memref<8x1xf32, #tpu.memory_space<vmem>>, %arg14: memref<17x1xf32, #tpu.memory_space<vmem>>, %arg15: memref<17x1xf32, #tpu.memory_space<vmem>>, %arg16: memref<26x1xf32, #tpu.memory_space<vmem>>, %arg17: memref<26x1xf32, #tpu.memory_space<vmem>>, %arg18: memref<1x51x256xf32, #tpu.memory_space<vmem>>, %arg19: memref<4x290xf32, #tpu.memory_space<vmem>>, %arg20: memref<8x290xf32, #tpu.memory_space<vmem>>, %arg21: memref<17x290xf32, #tpu.memory_space<vmem>>, %arg22: memref<36x256xf32, #tpu.memory_space<vmem>>, %arg23: memref<72x256xf32, #tpu.memory_space<vmem>>, %arg24: memref<153x256xf32, #tpu.memory_space<vmem>>) attributes {dimension_semantics = [#tpu.dimension_semantics<parallel>], iteration_bounds = array<i64: 2>, scalar_prefetch = 0 : i64, scratch_operands = 6 : i64, tpu.core_type = #tpu.core_type<tc>, window_params = [{transform_indices = @transform_0, window_bounds = array<i64: 1, 4, 256>}, {pipeline_mode = #tpu.pipeline_mode<synchronous>, transform_indices = @transform_1, window_bounds = array<i64: 2, 256>}, {pipeline_mode = #tpu.pipeline_mode<synchronous>, transform_indices = @transform_2, window_bounds = array<i64: 8, 36>}, {pipeline_mode = #tpu.pipeline_mode<synchronous>, transform_indices = @transform_3, window_bounds = array<i64: 8, 1>}, {pipeline_mode = #tpu.pipeline_mode<synchronous>, transform_indices = @transform_4, window_bounds = array<i64: 17, 72>}, {pipeline_mode = #tpu.pipeline_mode<synchronous>, transform_indices = @transform_5, window_bounds = array<i64: 17, 1>}, {pipeline_mode = #tpu.pipeline_mode<synchronous>, transform_indices = @transform_6, window_bounds = array<i64: 26, 153>}, {pipeline_mode = #tpu.pipeline_mode<synchronous>, transform_indices = @transform_7, window_bounds = array<i64: 26, 1>}, {pipeline_mode = #tpu.pipeline_mode<synchronous>, transform_indices = @transform_8, window_bounds = array<i64: 8, 4>}, {pipeline_mode = #tpu.pipeline_mode<synchronous>, transform_indices = @transform_9, window_bounds = array<i64: 17, 4>}, {pipeline_mode = #tpu.pipeline_mode<synchronous>, transform_indices = @transform_10, window_bounds = array<i64: 26, 4>}, {pipeline_mode = #tpu.pipeline_mode<synchronous>, transform_indices = @transform_11, window_bounds = array<i64: 8, 1>}, {pipeline_mode = #tpu.pipeline_mode<synchronous>, transform_indices = @transform_12, window_bounds = array<i64: 8, 1>}, {pipeline_mode = #tpu.pipeline_mode<synchronous>, transform_indices = @transform_13, window_bounds = array<i64: 17, 1>}, {pipeline_mode = #tpu.pipeline_mode<synchronous>, transform_indices = @transform_14, window_bounds = array<i64: 17, 1>}, {pipeline_mode = #tpu.pipeline_mode<synchronous>, transform_indices = @transform_15, window_bounds = array<i64: 26, 1>}, {pipeline_mode = #tpu.pipeline_mode<synchronous>, transform_indices = @transform_16, window_bounds = array<i64: 26, 1>}, {transform_indices = @transform_17, window_bounds = array<i64: 1, 51, 256>}]} {
    %cst = arith.constant 0.000000e+00 : f32
    %0 = vector.broadcast %cst : f32 to vector<4x290xf32>
    %c0 = arith.constant 0 : index
    %c0_0 = arith.constant 0 : index
    %1 = vector.load %arg19[%c0, %c0_0] : memref<4x290xf32, #tpu.memory_space<vmem>>, vector<4x290xf32>
    tpu.vector_store %arg19[%c0, %c0_0], %0 {strides = array<i32>} : memref<4x290xf32, #tpu.memory_space<vmem>>, vector<4x290xf32>,
    %cst_1 = arith.constant 0.000000e+00 : f32
    %2 = vector.broadcast %cst_1 : f32 to vector<8x290xf32>
    %c0_2 = arith.constant 0 : index
    %c0_3 = arith.constant 0 : index
    %3 = vector.load %arg20[%c0_2, %c0_3] : memref<8x290xf32, #tpu.memory_space<vmem>>, vector<8x290xf32>
    tpu.vector_store %arg20[%c0_2, %c0_3], %2 {strides = array<i32>} : memref<8x290xf32, #tpu.memory_space<vmem>>, vector<8x290xf32>,
    %cst_4 = arith.constant 0.000000e+00 : f32
    %4 = vector.broadcast %cst_4 : f32 to vector<17x290xf32>
    %c0_5 = arith.constant 0 : index
    %c0_6 = arith.constant 0 : index
    %5 = vector.load %arg21[%c0_5, %c0_6] : memref<17x290xf32, #tpu.memory_space<vmem>>, vector<17x290xf32>
    tpu.vector_store %arg21[%c0_5, %c0_6], %4 {strides = array<i32>} : memref<17x290xf32, #tpu.memory_space<vmem>>, vector<17x290xf32>,
    %c0_7 = arith.constant 0 : index
    %c0_8 = arith.constant 0 : index
    %c0_9 = arith.constant 0 : index
    %6 = vector.load %arg1[%c0_7, %c0_8, %c0_9] : memref<1x4x256xf32, #tpu.memory_space<vmem>>, vector<1x4x256xf32>
    %7 = vector.shape_cast %6 : vector<1x4x256xf32> to vector<4x256xf32>
    %c0_10 = arith.constant 0 : index
    %c17 = arith.constant 17 : index
    %8 = vector.load %arg19[%c0_10, %c17] : memref<4x290xf32, #tpu.memory_space<vmem>>, vector<4x256xf32>
    tpu.vector_store %arg19[%c0_10, %c17], %7 {strides = array<i32>} : memref<4x290xf32, #tpu.memory_space<vmem>>, vector<4x256xf32>,
    %c0_11 = arith.constant 0 : index
    %c0_12 = arith.constant 0 : index
    %9 = vector.load %arg19[%c0_11, %c0_12] : memref<4x290xf32, #tpu.memory_space<vmem>>, vector<4x256xf32>
    %c0_13 = arith.constant 0 : index
    %c0_14 = arith.constant 0 : index
    %10 = vector.load %arg2[%c0_13, %c0_14] : memref<2x256xf32, #tpu.memory_space<vmem>>, vector<1x256xf32>
    %11 = vector.broadcast %10 : vector<1x256xf32> to vector<4x256xf32>
    %12 = arith.mulf %9, %11 : vector<4x256xf32>
    %c0_15 = arith.constant 0 : index
    %c0_16 = arith.constant 0 : index
    %13 = vector.load %arg22[%c0_15, %c0_16] : memref<36x256xf32, #tpu.memory_space<vmem>>, vector<4x256xf32>
    tpu.vector_store %arg22[%c0_15, %c0_16], %12 {strides = array<i32>} : memref<36x256xf32, #tpu.memory_space<vmem>>, vector<4x256xf32>,
    %c0_17 = arith.constant 0 : index
    %c1 = arith.constant 1 : index
    %14 = vector.load %arg19[%c0_17, %c1] : memref<4x290xf32, #tpu.memory_space<vmem>>, vector<4x256xf32>
    %c4 = arith.constant 4 : index
    %c0_18 = arith.constant 0 : index
    %15 = vector.load %arg22[%c4, %c0_18] : memref<36x256xf32, #tpu.memory_space<vmem>>, vector<4x256xf32>
    tpu.vector_store %arg22[%c4, %c0_18], %14 {strides = array<i32>} : memref<36x256xf32, #tpu.memory_space<vmem>>, vector<4x256xf32>,
    %c0_19 = arith.constant 0 : index
    %c2 = arith.constant 2 : index
    %16 = vector.load %arg19[%c0_19, %c2] : memref<4x290xf32, #tpu.memory_space<vmem>>, vector<4x256xf32>
    %c1_20 = arith.constant 1 : index
    %c0_21 = arith.constant 0 : index
    %17 = vector.load %arg2[%c1_20, %c0_21] : memref<2x256xf32, #tpu.memory_space<vmem>>, vector<1x256xf32>
    %18 = vector.broadcast %17 : vector<1x256xf32> to vector<4x256xf32>
    %19 = arith.mulf %16, %18 : vector<4x256xf32>
    %c8 = arith.constant 8 : index
    %c0_22 = arith.constant 0 : index
    %20 = vector.load %arg22[%c8, %c0_22] : memref<36x256xf32, #tpu.memory_space<vmem>>, vector<4x256xf32>
    tpu.vector_store %arg22[%c8, %c0_22], %19 {strides = array<i32>} : memref<36x256xf32, #tpu.memory_space<vmem>>, vector<4x256xf32>,
    %c0_23 = arith.constant 0 : index
    %c16 = arith.constant 16 : index
    %21 = vector.load %arg19[%c0_23, %c16] : memref<4x290xf32, #tpu.memory_space<vmem>>, vector<4x256xf32>
    %c0_24 = arith.constant 0 : index
    %c0_25 = arith.constant 0 : index
    %22 = vector.load %arg2[%c0_24, %c0_25] : memref<2x256xf32, #tpu.memory_space<vmem>>, vector<1x256xf32>
    %23 = vector.broadcast %22 : vector<1x256xf32> to vector<4x256xf32>
    %24 = arith.mulf %21, %23 : vector<4x256xf32>
    %c12 = arith.constant 12 : index
    %c0_26 = arith.constant 0 : index
    %25 = vector.load %arg22[%c12, %c0_26] : memref<36x256xf32, #tpu.memory_space<vmem>>, vector<4x256xf32>
    tpu.vector_store %arg22[%c12, %c0_26], %24 {strides = array<i32>} : memref<36x256xf32, #tpu.memory_space<vmem>>, vector<4x256xf32>,
    %c0_27 = arith.constant 0 : index
    %c17_28 = arith.constant 17 : index
    %26 = vector.load %arg19[%c0_27, %c17_28] : memref<4x290xf32, #tpu.memory_space<vmem>>, vector<4x256xf32>
    %c16_29 = arith.constant 16 : index
    %c0_30 = arith.constant 0 : index
    %27 = vector.load %arg22[%c16_29, %c0_30] : memref<36x256xf32, #tpu.memory_space<vmem>>, vector<4x256xf32>
    tpu.vector_store %arg22[%c16_29, %c0_30], %26 {strides = array<i32>} : memref<36x256xf32, #tpu.memory_space<vmem>>, vector<4x256xf32>,
    %c0_31 = arith.constant 0 : index
    %c18 = arith.constant 18 : index
    %28 = vector.load %arg19[%c0_31, %c18] : memref<4x290xf32, #tpu.memory_space<vmem>>, vector<4x256xf32>
    %c1_32 = arith.constant 1 : index
    %c0_33 = arith.constant 0 : index
    %29 = vector.load %arg2[%c1_32, %c0_33] : memref<2x256xf32, #tpu.memory_space<vmem>>, vector<1x256xf32>
    %30 = vector.broadcast %29 : vector<1x256xf32> to vector<4x256xf32>
    %31 = arith.mulf %28, %30 : vector<4x256xf32>
    %c20 = arith.constant 20 : index
    %c0_34 = arith.constant 0 : index
    %32 = vector.load %arg22[%c20, %c0_34] : memref<36x256xf32, #tpu.memory_space<vmem>>, vector<4x256xf32>
    tpu.vector_store %arg22[%c20, %c0_34], %31 {strides = array<i32>} : memref<36x256xf32, #tpu.memory_space<vmem>>, vector<4x256xf32>,
    %c0_35 = arith.constant 0 : index
    %c32 = arith.constant 32 : index
    %33 = vector.load %arg19[%c0_35, %c32] : memref<4x290xf32, #tpu.memory_space<vmem>>, vector<4x256xf32>
    %c0_36 = arith.constant 0 : index
    %c0_37 = arith.constant 0 : index
    %34 = vector.load %arg2[%c0_36, %c0_37] : memref<2x256xf32, #tpu.memory_space<vmem>>, vector<1x256xf32>
    %35 = vector.broadcast %34 : vector<1x256xf32> to vector<4x256xf32>
    %36 = arith.mulf %33, %35 : vector<4x256xf32>
    %c24 = arith.constant 24 : index
    %c0_38 = arith.constant 0 : index
    %37 = vector.load %arg22[%c24, %c0_38] : memref<36x256xf32, #tpu.memory_space<vmem>>, vector<4x256xf32>
    tpu.vector_store %arg22[%c24, %c0_38], %36 {strides = array<i32>} : memref<36x256xf32, #tpu.memory_space<vmem>>, vector<4x256xf32>,
    %c0_39 = arith.constant 0 : index
    %c33 = arith.constant 33 : index
    %38 = vector.load %arg19[%c0_39, %c33] : memref<4x290xf32, #tpu.memory_space<vmem>>, vector<4x256xf32>
    %c28 = arith.constant 28 : index
    %c0_40 = arith.constant 0 : index
    %39 = vector.load %arg22[%c28, %c0_40] : memref<36x256xf32, #tpu.memory_space<vmem>>, vector<4x256xf32>
    tpu.vector_store %arg22[%c28, %c0_40], %38 {strides = array<i32>} : memref<36x256xf32, #tpu.memory_space<vmem>>, vector<4x256xf32>,
    %c0_41 = arith.constant 0 : index
    %c34 = arith.constant 34 : index
    %40 = vector.load %arg19[%c0_41, %c34] : memref<4x290xf32, #tpu.memory_space<vmem>>, vector<4x256xf32>
    %c1_42 = arith.constant 1 : index
    %c0_43 = arith.constant 0 : index
    %41 = vector.load %arg2[%c1_42, %c0_43] : memref<2x256xf32, #tpu.memory_space<vmem>>, vector<1x256xf32>
    %42 = vector.broadcast %41 : vector<1x256xf32> to vector<4x256xf32>
    %43 = arith.mulf %40, %42 : vector<4x256xf32>
    %c32_44 = arith.constant 32 : index
    %c0_45 = arith.constant 0 : index
    %44 = vector.load %arg22[%c32_44, %c0_45] : memref<36x256xf32, #tpu.memory_space<vmem>>, vector<4x256xf32>
    tpu.vector_store %arg22[%c32_44, %c0_45], %43 {strides = array<i32>} : memref<36x256xf32, #tpu.memory_space<vmem>>, vector<4x256xf32>,
    %c0_46 = arith.constant 0 : index
    %c0_47 = arith.constant 0 : index
    %45 = vector.load %arg3[%c0_46, %c0_47] : memref<8x36xf32, #tpu.memory_space<vmem>>, vector<8x36xf32>
    %c0_48 = arith.constant 0 : index
    %c0_49 = arith.constant 0 : index
    %46 = vector.load %arg22[%c0_48, %c0_49] : memref<36x256xf32, #tpu.memory_space<vmem>>, vector<36x256xf32>
    %cst_50 = arith.constant dense<0.000000e+00> : vector<8x256xf32>
    %47 = tpu.matmul %45, %46, %cst_50 {dimension_numbers = #tpu.dot_dimension_numbers<[1], [0], [0], [1], [0, 0, 1, 1], [], []>} : vector<8x36xf32>, vector<36x256xf32>, vector<8x256xf32> -> vector<8x256xf32>
    %c0_51 = arith.constant 0 : index
    %c0_52 = arith.constant 0 : index
    %48 = vector.load %arg4[%c0_51, %c0_52] : memref<8x1xf32, #tpu.memory_space<vmem>>, vector<8x1xf32>
    %49 = vector.broadcast %48 : vector<8x1xf32> to vector<8x256xf32>
    %50 = arith.addf %47, %49 : vector<8x256xf32>
    %cst_53 = arith.constant 0.000000e+00 : f32
    %51 = vector.broadcast %cst_53 : f32 to vector<8x256xf32>
    %52 = arith.maximumf %50, %51 : vector<8x256xf32>
    %c0_54 = arith.constant 0 : index
    %c17_55 = arith.constant 17 : index
    %53 = vector.load %arg20[%c0_54, %c17_55] : memref<8x290xf32, #tpu.memory_space<vmem>>, vector<8x256xf32>
    tpu.vector_store %arg20[%c0_54, %c17_55], %52 {strides = array<i32>} : memref<8x290xf32, #tpu.memory_space<vmem>>, vector<8x256xf32>,
    %c0_56 = arith.constant 0 : index
    %c0_57 = arith.constant 0 : index
    %54 = vector.load %arg20[%c0_56, %c0_57] : memref<8x290xf32, #tpu.memory_space<vmem>>, vector<8x256xf32>
    %c0_58 = arith.constant 0 : index
    %c0_59 = arith.constant 0 : index
    %55 = vector.load %arg2[%c0_58, %c0_59] : memref<2x256xf32, #tpu.memory_space<vmem>>, vector<1x256xf32>
    %56 = vector.broadcast %55 : vector<1x256xf32> to vector<8x256xf32>
    %57 = arith.mulf %54, %56 : vector<8x256xf32>
    %c0_60 = arith.constant 0 : index
    %c0_61 = arith.constant 0 : index
    %58 = vector.load %arg23[%c0_60, %c0_61] : memref<72x256xf32, #tpu.memory_space<vmem>>, vector<8x256xf32>
    tpu.vector_store %arg23[%c0_60, %c0_61], %57 {strides = array<i32>} : memref<72x256xf32, #tpu.memory_space<vmem>>, vector<8x256xf32>,
    %c0_62 = arith.constant 0 : index
    %c1_63 = arith.constant 1 : index
    %59 = vector.load %arg20[%c0_62, %c1_63] : memref<8x290xf32, #tpu.memory_space<vmem>>, vector<8x256xf32>
    %c8_64 = arith.constant 8 : index
    %c0_65 = arith.constant 0 : index
    %60 = vector.load %arg23[%c8_64, %c0_65] : memref<72x256xf32, #tpu.memory_space<vmem>>, vector<8x256xf32>
    tpu.vector_store %arg23[%c8_64, %c0_65], %59 {strides = array<i32>} : memref<72x256xf32, #tpu.memory_space<vmem>>, vector<8x256xf32>,
    %c0_66 = arith.constant 0 : index
    %c2_67 = arith.constant 2 : index
    %61 = vector.load %arg20[%c0_66, %c2_67] : memref<8x290xf32, #tpu.memory_space<vmem>>, vector<8x256xf32>
    %c1_68 = arith.constant 1 : index
    %c0_69 = arith.constant 0 : index
    %62 = vector.load %arg2[%c1_68, %c0_69] : memref<2x256xf32, #tpu.memory_space<vmem>>, vector<1x256xf32>
    %63 = vector.broadcast %62 : vector<1x256xf32> to vector<8x256xf32>
    %64 = arith.mulf %61, %63 : vector<8x256xf32>
    %c16_70 = arith.constant 16 : index
    %c0_71 = arith.constant 0 : index
    %65 = vector.load %arg23[%c16_70, %c0_71] : memref<72x256xf32, #tpu.memory_space<vmem>>, vector<8x256xf32>
    tpu.vector_store %arg23[%c16_70, %c0_71], %64 {strides = array<i32>} : memref<72x256xf32, #tpu.memory_space<vmem>>, vector<8x256xf32>,
    %c0_72 = arith.constant 0 : index
    %c16_73 = arith.constant 16 : index
    %66 = vector.load %arg20[%c0_72, %c16_73] : memref<8x290xf32, #tpu.memory_space<vmem>>, vector<8x256xf32>
    %c0_74 = arith.constant 0 : index
    %c0_75 = arith.constant 0 : index
    %67 = vector.load %arg2[%c0_74, %c0_75] : memref<2x256xf32, #tpu.memory_space<vmem>>, vector<1x256xf32>
    %68 = vector.broadcast %67 : vector<1x256xf32> to vector<8x256xf32>
    %69 = arith.mulf %66, %68 : vector<8x256xf32>
    %c24_76 = arith.constant 24 : index
    %c0_77 = arith.constant 0 : index
    %70 = vector.load %arg23[%c24_76, %c0_77] : memref<72x256xf32, #tpu.memory_space<vmem>>, vector<8x256xf32>
    tpu.vector_store %arg23[%c24_76, %c0_77], %69 {strides = array<i32>} : memref<72x256xf32, #tpu.memory_space<vmem>>, vector<8x256xf32>,
    %c0_78 = arith.constant 0 : index
    %c17_79 = arith.constant 17 : index
    %71 = vector.load %arg20[%c0_78, %c17_79] : memref<8x290xf32, #tpu.memory_space<vmem>>, vector<8x256xf32>
    %c32_80 = arith.constant 32 : index
    %c0_81 = arith.constant 0 : index
    %72 = vector.load %arg23[%c32_80, %c0_81] : memref<72x256xf32, #tpu.memory_space<vmem>>, vector<8x256xf32>
    tpu.vector_store %arg23[%c32_80, %c0_81], %71 {strides = array<i32>} : memref<72x256xf32, #tpu.memory_space<vmem>>, vector<8x256xf32>,
    %c0_82 = arith.constant 0 : index
    %c18_83 = arith.constant 18 : index
    %73 = vector.load %arg20[%c0_82, %c18_83] : memref<8x290xf32, #tpu.memory_space<vmem>>, vector<8x256xf32>
    %c1_84 = arith.constant 1 : index
    %c0_85 = arith.constant 0 : index
    %74 = vector.load %arg2[%c1_84, %c0_85] : memref<2x256xf32, #tpu.memory_space<vmem>>, vector<1x256xf32>
    %75 = vector.broadcast %74 : vector<1x256xf32> to vector<8x256xf32>
    %76 = arith.mulf %73, %75 : vector<8x256xf32>
    %c40 = arith.constant 40 : index
    %c0_86 = arith.constant 0 : index
    %77 = vector.load %arg23[%c40, %c0_86] : memref<72x256xf32, #tpu.memory_space<vmem>>, vector<8x256xf32>
    tpu.vector_store %arg23[%c40, %c0_86], %76 {strides = array<i32>} : memref<72x256xf32, #tpu.memory_space<vmem>>, vector<8x256xf32>,
    %c0_87 = arith.constant 0 : index
    %c32_88 = arith.constant 32 : index
    %78 = vector.load %arg20[%c0_87, %c32_88] : memref<8x290xf32, #tpu.memory_space<vmem>>, vector<8x256xf32>
    %c0_89 = arith.constant 0 : index
    %c0_90 = arith.constant 0 : index
    %79 = vector.load %arg2[%c0_89, %c0_90] : memref<2x256xf32, #tpu.memory_space<vmem>>, vector<1x256xf32>
    %80 = vector.broadcast %79 : vector<1x256xf32> to vector<8x256xf32>
    %81 = arith.mulf %78, %80 : vector<8x256xf32>
    %c48 = arith.constant 48 : index
    %c0_91 = arith.constant 0 : index
    %82 = vector.load %arg23[%c48, %c0_91] : memref<72x256xf32, #tpu.memory_space<vmem>>, vector<8x256xf32>
    tpu.vector_store %arg23[%c48, %c0_91], %81 {strides = array<i32>} : memref<72x256xf32, #tpu.memory_space<vmem>>, vector<8x256xf32>,
    %c0_92 = arith.constant 0 : index
    %c33_93 = arith.constant 33 : index
    %83 = vector.load %arg20[%c0_92, %c33_93] : memref<8x290xf32, #tpu.memory_space<vmem>>, vector<8x256xf32>
    %c56 = arith.constant 56 : index
    %c0_94 = arith.constant 0 : index
    %84 = vector.load %arg23[%c56, %c0_94] : memref<72x256xf32, #tpu.memory_space<vmem>>, vector<8x256xf32>
    tpu.vector_store %arg23[%c56, %c0_94], %83 {strides = array<i32>} : memref<72x256xf32, #tpu.memory_space<vmem>>, vector<8x256xf32>,
    %c0_95 = arith.constant 0 : index
    %c34_96 = arith.constant 34 : index
    %85 = vector.load %arg20[%c0_95, %c34_96] : memref<8x290xf32, #tpu.memory_space<vmem>>, vector<8x256xf32>
    %c1_97 = arith.constant 1 : index
    %c0_98 = arith.constant 0 : index
    %86 = vector.load %arg2[%c1_97, %c0_98] : memref<2x256xf32, #tpu.memory_space<vmem>>, vector<1x256xf32>
    %87 = vector.broadcast %86 : vector<1x256xf32> to vector<8x256xf32>
    %88 = arith.mulf %85, %87 : vector<8x256xf32>
    %c64 = arith.constant 64 : index
    %c0_99 = arith.constant 0 : index
    %89 = vector.load %arg23[%c64, %c0_99] : memref<72x256xf32, #tpu.memory_space<vmem>>, vector<8x256xf32>
    tpu.vector_store %arg23[%c64, %c0_99], %88 {strides = array<i32>} : memref<72x256xf32, #tpu.memory_space<vmem>>, vector<8x256xf32>,
    %c0_100 = arith.constant 0 : index
    %c0_101 = arith.constant 0 : index
    %90 = vector.load %arg5[%c0_100, %c0_101] : memref<17x72xf32, #tpu.memory_space<vmem>>, vector<17x72xf32>
    %c0_102 = arith.constant 0 : index
    %c0_103 = arith.constant 0 : index
    %91 = vector.load %arg23[%c0_102, %c0_103] : memref<72x256xf32, #tpu.memory_space<vmem>>, vector<72x256xf32>
    %cst_104 = arith.constant dense<0.000000e+00> : vector<17x256xf32>
    %92 = tpu.matmul %90, %91, %cst_104 {dimension_numbers = #tpu.dot_dimension_numbers<[1], [0], [0], [1], [0, 0, 1, 1], [], []>} : vector<17x72xf32>, vector<72x256xf32>, vector<17x256xf32> -> vector<17x256xf32>
    %c0_105 = arith.constant 0 : index
    %c0_106 = arith.constant 0 : index
    %93 = vector.load %arg6[%c0_105, %c0_106] : memref<17x1xf32, #tpu.memory_space<vmem>>, vector<17x1xf32>
    %94 = vector.broadcast %93 : vector<17x1xf32> to vector<17x256xf32>
    %95 = arith.addf %92, %94 : vector<17x256xf32>
    %cst_107 = arith.constant 0.000000e+00 : f32
    %96 = vector.broadcast %cst_107 : f32 to vector<17x256xf32>
    %97 = arith.maximumf %95, %96 : vector<17x256xf32>
    %c0_108 = arith.constant 0 : index
    %c17_109 = arith.constant 17 : index
    %98 = vector.load %arg21[%c0_108, %c17_109] : memref<17x290xf32, #tpu.memory_space<vmem>>, vector<17x256xf32>
    tpu.vector_store %arg21[%c0_108, %c17_109], %97 {strides = array<i32>} : memref<17x290xf32, #tpu.memory_space<vmem>>, vector<17x256xf32>,
    %c0_110 = arith.constant 0 : index
    %c0_111 = arith.constant 0 : index
    %99 = vector.load %arg21[%c0_110, %c0_111] : memref<17x290xf32, #tpu.memory_space<vmem>>, vector<17x256xf32>
    %c0_112 = arith.constant 0 : index
    %c0_113 = arith.constant 0 : index
    %100 = vector.load %arg2[%c0_112, %c0_113] : memref<2x256xf32, #tpu.memory_space<vmem>>, vector<1x256xf32>
    %101 = vector.broadcast %100 : vector<1x256xf32> to vector<17x256xf32>
    %102 = arith.mulf %99, %101 : vector<17x256xf32>
    %c0_114 = arith.constant 0 : index
    %c0_115 = arith.constant 0 : index
    %103 = vector.load %arg24[%c0_114, %c0_115] : memref<153x256xf32, #tpu.memory_space<vmem>>, vector<17x256xf32>
    tpu.vector_store %arg24[%c0_114, %c0_115], %102 {strides = array<i32>} : memref<153x256xf32, #tpu.memory_space<vmem>>, vector<17x256xf32>,
    %c0_116 = arith.constant 0 : index
    %c1_117 = arith.constant 1 : index
    %104 = vector.load %arg21[%c0_116, %c1_117] : memref<17x290xf32, #tpu.memory_space<vmem>>, vector<17x256xf32>
    %c17_118 = arith.constant 17 : index
    %c0_119 = arith.constant 0 : index
    %105 = vector.load %arg24[%c17_118, %c0_119] : memref<153x256xf32, #tpu.memory_space<vmem>>, vector<17x256xf32>
    tpu.vector_store %arg24[%c17_118, %c0_119], %104 {strides = array<i32>} : memref<153x256xf32, #tpu.memory_space<vmem>>, vector<17x256xf32>,
    %c0_120 = arith.constant 0 : index
    %c2_121 = arith.constant 2 : index
    %106 = vector.load %arg21[%c0_120, %c2_121] : memref<17x290xf32, #tpu.memory_space<vmem>>, vector<17x256xf32>
    %c1_122 = arith.constant 1 : index
    %c0_123 = arith.constant 0 : index
    %107 = vector.load %arg2[%c1_122, %c0_123] : memref<2x256xf32, #tpu.memory_space<vmem>>, vector<1x256xf32>
    %108 = vector.broadcast %107 : vector<1x256xf32> to vector<17x256xf32>
    %109 = arith.mulf %106, %108 : vector<17x256xf32>
    %c34_124 = arith.constant 34 : index
    %c0_125 = arith.constant 0 : index
    %110 = vector.load %arg24[%c34_124, %c0_125] : memref<153x256xf32, #tpu.memory_space<vmem>>, vector<17x256xf32>
    tpu.vector_store %arg24[%c34_124, %c0_125], %109 {strides = array<i32>} : memref<153x256xf32, #tpu.memory_space<vmem>>, vector<17x256xf32>,
    %c0_126 = arith.constant 0 : index
    %c16_127 = arith.constant 16 : index
    %111 = vector.load %arg21[%c0_126, %c16_127] : memref<17x290xf32, #tpu.memory_space<vmem>>, vector<17x256xf32>
    %c0_128 = arith.constant 0 : index
    %c0_129 = arith.constant 0 : index
    %112 = vector.load %arg2[%c0_128, %c0_129] : memref<2x256xf32, #tpu.memory_space<vmem>>, vector<1x256xf32>
    %113 = vector.broadcast %112 : vector<1x256xf32> to vector<17x256xf32>
    %114 = arith.mulf %111, %113 : vector<17x256xf32>
    %c51 = arith.constant 51 : index
    %c0_130 = arith.constant 0 : index
    %115 = vector.load %arg24[%c51, %c0_130] : memref<153x256xf32, #tpu.memory_space<vmem>>, vector<17x256xf32>
    tpu.vector_store %arg24[%c51, %c0_130], %114 {strides = array<i32>} : memref<153x256xf32, #tpu.memory_space<vmem>>, vector<17x256xf32>,
    %c0_131 = arith.constant 0 : index
    %c17_132 = arith.constant 17 : index
    %116 = vector.load %arg21[%c0_131, %c17_132] : memref<17x290xf32, #tpu.memory_space<vmem>>, vector<17x256xf32>
    %c68 = arith.constant 68 : index
    %c0_133 = arith.constant 0 : index
    %117 = vector.load %arg24[%c68, %c0_133] : memref<153x256xf32, #tpu.memory_space<vmem>>, vector<17x256xf32>
    tpu.vector_store %arg24[%c68, %c0_133], %116 {strides = array<i32>} : memref<153x256xf32, #tpu.memory_space<vmem>>, vector<17x256xf32>,
    %c0_134 = arith.constant 0 : index
    %c18_135 = arith.constant 18 : index
    %118 = vector.load %arg21[%c0_134, %c18_135] : memref<17x290xf32, #tpu.memory_space<vmem>>, vector<17x256xf32>
    %c1_136 = arith.constant 1 : index
    %c0_137 = arith.constant 0 : index
    %119 = vector.load %arg2[%c1_136, %c0_137] : memref<2x256xf32, #tpu.memory_space<vmem>>, vector<1x256xf32>
    %120 = vector.broadcast %119 : vector<1x256xf32> to vector<17x256xf32>
    %121 = arith.mulf %118, %120 : vector<17x256xf32>
    %c85 = arith.constant 85 : index
    %c0_138 = arith.constant 0 : index
    %122 = vector.load %arg24[%c85, %c0_138] : memref<153x256xf32, #tpu.memory_space<vmem>>, vector<17x256xf32>
    tpu.vector_store %arg24[%c85, %c0_138], %121 {strides = array<i32>} : memref<153x256xf32, #tpu.memory_space<vmem>>, vector<17x256xf32>,
    %c0_139 = arith.constant 0 : index
    %c32_140 = arith.constant 32 : index
    %123 = vector.load %arg21[%c0_139, %c32_140] : memref<17x290xf32, #tpu.memory_space<vmem>>, vector<17x256xf32>
    %c0_141 = arith.constant 0 : index
    %c0_142 = arith.constant 0 : index
    %124 = vector.load %arg2[%c0_141, %c0_142] : memref<2x256xf32, #tpu.memory_space<vmem>>, vector<1x256xf32>
    %125 = vector.broadcast %124 : vector<1x256xf32> to vector<17x256xf32>
    %126 = arith.mulf %123, %125 : vector<17x256xf32>
    %c102 = arith.constant 102 : index
    %c0_143 = arith.constant 0 : index
    %127 = vector.load %arg24[%c102, %c0_143] : memref<153x256xf32, #tpu.memory_space<vmem>>, vector<17x256xf32>
    tpu.vector_store %arg24[%c102, %c0_143], %126 {strides = array<i32>} : memref<153x256xf32, #tpu.memory_space<vmem>>, vector<17x256xf32>,
    %c0_144 = arith.constant 0 : index
    %c33_145 = arith.constant 33 : index
    %128 = vector.load %arg21[%c0_144, %c33_145] : memref<17x290xf32, #tpu.memory_space<vmem>>, vector<17x256xf32>
    %c119 = arith.constant 119 : index
    %c0_146 = arith.constant 0 : index
    %129 = vector.load %arg24[%c119, %c0_146] : memref<153x256xf32, #tpu.memory_space<vmem>>, vector<17x256xf32>
    tpu.vector_store %arg24[%c119, %c0_146], %128 {strides = array<i32>} : memref<153x256xf32, #tpu.memory_space<vmem>>, vector<17x256xf32>,
    %c0_147 = arith.constant 0 : index
    %c34_148 = arith.constant 34 : index
    %130 = vector.load %arg21[%c0_147, %c34_148] : memref<17x290xf32, #tpu.memory_space<vmem>>, vector<17x256xf32>
    %c1_149 = arith.constant 1 : index
    %c0_150 = arith.constant 0 : index
    %131 = vector.load %arg2[%c1_149, %c0_150] : memref<2x256xf32, #tpu.memory_space<vmem>>, vector<1x256xf32>
    %132 = vector.broadcast %131 : vector<1x256xf32> to vector<17x256xf32>
    %133 = arith.mulf %130, %132 : vector<17x256xf32>
    %c136 = arith.constant 136 : index
    %c0_151 = arith.constant 0 : index
    %134 = vector.load %arg24[%c136, %c0_151] : memref<153x256xf32, #tpu.memory_space<vmem>>, vector<17x256xf32>
    tpu.vector_store %arg24[%c136, %c0_151], %133 {strides = array<i32>} : memref<153x256xf32, #tpu.memory_space<vmem>>, vector<17x256xf32>,
    %c0_152 = arith.constant 0 : index
    %c0_153 = arith.constant 0 : index
    %135 = vector.load %arg7[%c0_152, %c0_153] : memref<26x153xf32, #tpu.memory_space<vmem>>, vector<26x153xf32>
    %c0_154 = arith.constant 0 : index
    %c0_155 = arith.constant 0 : index
    %136 = vector.load %arg24[%c0_154, %c0_155] : memref<153x256xf32, #tpu.memory_space<vmem>>, vector<153x256xf32>
    %cst_156 = arith.constant dense<0.000000e+00> : vector<26x256xf32>
    %137 = tpu.matmul %135, %136, %cst_156 {dimension_numbers = #tpu.dot_dimension_numbers<[1], [0], [0], [1], [0, 0, 1, 1], [], []>} : vector<26x153xf32>, vector<153x256xf32>, vector<26x256xf32> -> vector<26x256xf32>
    %c0_157 = arith.constant 0 : index
    %c0_158 = arith.constant 0 : index
    %138 = vector.load %arg8[%c0_157, %c0_158] : memref<26x1xf32, #tpu.memory_space<vmem>>, vector<26x1xf32>
    %139 = vector.broadcast %138 : vector<26x1xf32> to vector<26x256xf32>
    %140 = arith.addf %137, %139 : vector<26x256xf32>
    %cst_159 = arith.constant 0.000000e+00 : f32
    %141 = vector.broadcast %cst_159 : f32 to vector<26x256xf32>
    %142 = arith.maximumf %140, %141 : vector<26x256xf32>
    %c0_160 = arith.constant 0 : index
    %c0_161 = arith.constant 0 : index
    %143 = vector.load %arg9[%c0_160, %c0_161] : memref<8x4xf32, #tpu.memory_space<vmem>>, vector<8x4xf32>
    %cst_162 = arith.constant dense<0.000000e+00> : vector<8x256xf32>
    %144 = tpu.matmul %143, %7, %cst_162 {dimension_numbers = #tpu.dot_dimension_numbers<[1], [0], [0], [1], [0, 0, 1, 1], [], []>} : vector<8x4xf32>, vector<4x256xf32>, vector<8x256xf32> -> vector<8x256xf32>
    %c0_163 = arith.constant 0 : index
    %c0_164 = arith.constant 0 : index
    %145 = vector.load %arg10[%c0_163, %c0_164] : memref<17x4xf32, #tpu.memory_space<vmem>>, vector<17x4xf32>
    %cst_165 = arith.constant dense<0.000000e+00> : vector<17x256xf32>
    %146 = tpu.matmul %145, %7, %cst_165 {dimension_numbers = #tpu.dot_dimension_numbers<[1], [0], [0], [1], [0, 0, 1, 1], [], []>} : vector<17x4xf32>, vector<4x256xf32>, vector<17x256xf32> -> vector<17x256xf32>
    %c0_166 = arith.constant 0 : index
    %c0_167 = arith.constant 0 : index
    %147 = vector.load %arg11[%c0_166, %c0_167] : memref<26x4xf32, #tpu.memory_space<vmem>>, vector<26x4xf32>
    %cst_168 = arith.constant dense<0.000000e+00> : vector<26x256xf32>
    %148 = tpu.matmul %147, %7, %cst_168 {dimension_numbers = #tpu.dot_dimension_numbers<[1], [0], [0], [1], [0, 0, 1, 1], [], []>} : vector<26x4xf32>, vector<4x256xf32>, vector<26x256xf32> -> vector<26x256xf32>
    %c0_169 = arith.constant 0 : index
    %c0_170 = arith.constant 0 : index
    %149 = vector.load %arg12[%c0_169, %c0_170] : memref<8x1xf32, #tpu.memory_space<vmem>>, vector<8x1xf32>
    %150 = vector.broadcast %149 : vector<8x1xf32> to vector<8x256xf32>
    %151 = arith.mulf %150, %52 : vector<8x256xf32>
    %152 = arith.addf %151, %144 : vector<8x256xf32>
    %c0_171 = arith.constant 0 : index
    %c0_172 = arith.constant 0 : index
    %153 = vector.load %arg13[%c0_171, %c0_172] : memref<8x1xf32, #tpu.memory_space<vmem>>, vector<8x1xf32>
    %154 = vector.broadcast %153 : vector<8x1xf32> to vector<8x256xf32>
    %155 = arith.addf %152, %154 : vector<8x256xf32>
    %cst_173 = arith.constant 0.000000e+00 : f32
    %156 = vector.broadcast %cst_173 : f32 to vector<8x256xf32>
    %157 = arith.maximumf %155, %156 : vector<8x256xf32>
    %c0_174 = arith.constant 0 : index
    %c0_175 = arith.constant 0 : index
    %c0_176 = arith.constant 0 : index
    %158 = vector.load %arg18[%c0_174, %c0_175, %c0_176] : memref<1x51x256xf32, #tpu.memory_space<vmem>>, vector<1x8x256xf32>
    %159 = vector.shape_cast %158 : vector<1x8x256xf32> to vector<8x256xf32>
    %160 = vector.shape_cast %157 : vector<8x256xf32> to vector<1x8x256xf32>
    tpu.vector_store %arg18[%c0_174, %c0_175, %c0_176], %160 {strides = array<i32>} : memref<1x51x256xf32, #tpu.memory_space<vmem>>, vector<1x8x256xf32>,
    %c0_177 = arith.constant 0 : index
    %c0_178 = arith.constant 0 : index
    %161 = vector.load %arg14[%c0_177, %c0_178] : memref<17x1xf32, #tpu.memory_space<vmem>>, vector<17x1xf32>
    %162 = vector.broadcast %161 : vector<17x1xf32> to vector<17x256xf32>
    %163 = arith.mulf %162, %97 : vector<17x256xf32>
    %164 = arith.addf %163, %146 : vector<17x256xf32>
    %c0_179 = arith.constant 0 : index
    %c0_180 = arith.constant 0 : index
    %165 = vector.load %arg15[%c0_179, %c0_180] : memref<17x1xf32, #tpu.memory_space<vmem>>, vector<17x1xf32>
    %166 = vector.broadcast %165 : vector<17x1xf32> to vector<17x256xf32>
    %167 = arith.addf %164, %166 : vector<17x256xf32>
    %cst_181 = arith.constant 0.000000e+00 : f32
    %168 = vector.broadcast %cst_181 : f32 to vector<17x256xf32>
    %169 = arith.maximumf %167, %168 : vector<17x256xf32>
    %c0_182 = arith.constant 0 : index
    %c8_183 = arith.constant 8 : index
    %c0_184 = arith.constant 0 : index
    %170 = vector.load %arg18[%c0_182, %c8_183, %c0_184] : memref<1x51x256xf32, #tpu.memory_space<vmem>>, vector<1x17x256xf32>
    %171 = vector.shape_cast %170 : vector<1x17x256xf32> to vector<17x256xf32>
    %172 = vector.shape_cast %169 : vector<17x256xf32> to vector<1x17x256xf32>
    tpu.vector_store %arg18[%c0_182, %c8_183, %c0_184], %172 {strides = array<i32>} : memref<1x51x256xf32, #tpu.memory_space<vmem>>, vector<1x17x256xf32>,
    %c0_185 = arith.constant 0 : index
    %c0_186 = arith.constant 0 : index
    %173 = vector.load %arg16[%c0_185, %c0_186] : memref<26x1xf32, #tpu.memory_space<vmem>>, vector<26x1xf32>
    %174 = vector.broadcast %173 : vector<26x1xf32> to vector<26x256xf32>
    %175 = arith.mulf %174, %142 : vector<26x256xf32>
    %176 = arith.addf %175, %148 : vector<26x256xf32>
    %c0_187 = arith.constant 0 : index
    %c0_188 = arith.constant 0 : index
    %177 = vector.load %arg17[%c0_187, %c0_188] : memref<26x1xf32, #tpu.memory_space<vmem>>, vector<26x1xf32>
    %178 = vector.broadcast %177 : vector<26x1xf32> to vector<26x256xf32>
    %179 = arith.addf %176, %178 : vector<26x256xf32>
    %cst_189 = arith.constant 0.000000e+00 : f32
    %180 = vector.broadcast %cst_189 : f32 to vector<26x256xf32>
    %181 = arith.maximumf %179, %180 : vector<26x256xf32>
    %c0_190 = arith.constant 0 : index
    %c25 = arith.constant 25 : index
    %c0_191 = arith.constant 0 : index
    %182 = vector.load %arg18[%c0_190, %c25, %c0_191] : memref<1x51x256xf32, #tpu.memory_space<vmem>>, vector<1x26x256xf32>
    %183 = vector.shape_cast %182 : vector<1x26x256xf32> to vector<26x256xf32>
    %184 = vector.shape_cast %181 : vector<26x256xf32> to vector<1x26x256xf32>
    tpu.vector_store %arg18[%c0_190, %c25, %c0_191], %184 {strides = array<i32>} : memref<1x51x256xf32, #tpu.memory_space<vmem>>, vector<1x26x256xf32>,
    return
  }
  func.func @transform_0(%arg0: i32) -> (i32, i32, i32) {
    %c0_i32 = arith.constant 0 : i32
    %c0_i32_0 = arith.constant 0 : i32
    %c0_i32_1 = arith.constant 0 : i32
    return %arg0, %c0_i32, %c0_i32_0 : i32, i32, i32
  }
  func.func @transform_1(%arg0: i32) -> (i32, i32) {
    %c0_i32 = arith.constant 0 : i32
    %c0_i32_0 = arith.constant 0 : i32
    %c0_i32_1 = arith.constant 0 : i32
    return %c0_i32, %c0_i32_0 : i32, i32
  }
  func.func @transform_2(%arg0: i32) -> (i32, i32) {
    %c0_i32 = arith.constant 0 : i32
    %c0_i32_0 = arith.constant 0 : i32
    %c0_i32_1 = arith.constant 0 : i32
    return %c0_i32, %c0_i32_0 : i32, i32
  }
  func.func @transform_3(%arg0: i32) -> (i32, i32) {
    %c0_i32 = arith.constant 0 : i32
    %c0_i32_0 = arith.constant 0 : i32
    %c0_i32_1 = arith.constant 0 : i32
    return %c0_i32, %c0_i32_0 : i32, i32
  }
  func.func @transform_4(%arg0: i32) -> (i32, i32) {
    %c0_i32 = arith.constant 0 : i32
    %c0_i32_0 = arith.constant 0 : i32
    %c0_i32_1 = arith.constant 0 : i32
    return %c0_i32, %c0_i32_0 : i32, i32
  }
  func.func @transform_5(%arg0: i32) -> (i32, i32) {
    %c0_i32 = arith.constant 0 : i32
    %c0_i32_0 = arith.constant 0 : i32
    %c0_i32_1 = arith.constant 0 : i32
    return %c0_i32, %c0_i32_0 : i32, i32
  }
  func.func @transform_6(%arg0: i32) -> (i32, i32) {
    %c0_i32 = arith.constant 0 : i32
    %c0_i32_0 = arith.constant 0 : i32
    %c0_i32_1 = arith.constant 0 : i32
    return %c0_i32, %c0_i32_0 : i32, i32
  }
  func.func @transform_7(%arg0: i32) -> (i32, i32) {
    %c0_i32 = arith.constant 0 : i32
    %c0_i32_0 = arith.constant 0 : i32
    %c0_i32_1 = arith.constant 0 : i32
    return %c0_i32, %c0_i32_0 : i32, i32
  }
  func.func @transform_8(%arg0: i32) -> (i32, i32) {
    %c0_i32 = arith.constant 0 : i32
    %c0_i32_0 = arith.constant 0 : i32
    %c0_i32_1 = arith.constant 0 : i32
    return %c0_i32, %c0_i32_0 : i32, i32
  }
  func.func @transform_9(%arg0: i32) -> (i32, i32) {
    %c0_i32 = arith.constant 0 : i32
    %c0_i32_0 = arith.constant 0 : i32
    %c0_i32_1 = arith.constant 0 : i32
    return %c0_i32, %c0_i32_0 : i32, i32
  }
  func.func @transform_10(%arg0: i32) -> (i32, i32) {
    %c0_i32 = arith.constant 0 : i32
    %c0_i32_0 = arith.constant 0 : i32
    %c0_i32_1 = arith.constant 0 : i32
    return %c0_i32, %c0_i32_0 : i32, i32
  }
  func.func @transform_11(%arg0: i32) -> (i32, i32) {
    %c0_i32 = arith.constant 0 : i32
    %c0_i32_0 = arith.constant 0 : i32
    %c0_i32_1 = arith.constant 0 : i32
    return %c0_i32, %c0_i32_0 : i32, i32
  }
  func.func @transform_12(%arg0: i32) -> (i32, i32) {
    %c0_i32 = arith.constant 0 : i32
    %c0_i32_0 = arith.constant 0 : i32
    %c0_i32_1 = arith.constant 0 : i32
    return %c0_i32, %c0_i32_0 : i32, i32
  }
  func.func @transform_13(%arg0: i32) -> (i32, i32) {
    %c0_i32 = arith.constant 0 : i32
    %c0_i32_0 = arith.constant 0 : i32
    %c0_i32_1 = arith.constant 0 : i32
    return %c0_i32, %c0_i32_0 : i32, i32
  }
  func.func @transform_14(%arg0: i32) -> (i32, i32) {
    %c0_i32 = arith.constant 0 : i32
    %c0_i32_0 = arith.constant 0 : i32
    %c0_i32_1 = arith.constant 0 : i32
    return %c0_i32, %c0_i32_0 : i32, i32
  }
  func.func @transform_15(%arg0: i32) -> (i32, i32) {
    %c0_i32 = arith.constant 0 : i32
    %c0_i32_0 = arith.constant 0 : i32
    %c0_i32_1 = arith.constant 0 : i32
    return %c0_i32, %c0_i32_0 : i32, i32
  }
  func.func @transform_16(%arg0: i32) -> (i32, i32) {
    %c0_i32 = arith.constant 0 : i32
    %c0_i32_0 = arith.constant 0 : i32
    %c0_i32_1 = arith.constant 0 : i32
    return %c0_i32, %c0_i32_0 : i32, i32
  }
  func.func @transform_17(%arg0: i32) -> (i32, i32, i32) {
    %c0_i32 = arith.constant 0 : i32
    %c0_i32_0 = arith.constant 0 : i32
    %c0_i32_1 = arith.constant 0 : i32
    return %arg0, %c0_i32, %c0_i32_0 : i32, i32, i32
  }
}

</mosaic_0001>

<llo_original>
// kernel: mul.53
$region0: #{mul.53}
  #allocation0 [shape = 's32[1]{0}', space=sflag, size = 0x4, scoped, tag = 'scoped memory for mul.53']
  %s0 = inlined_call_operand.vmem [shape: f32[51], index: 0, kind: input, shape index: {}]
  %s1 = inlined_call_operand.vmem [shape: f32[51,4,1,1], index: 1, kind: output, shape index: {}]
  // Predicated region
  $region2: #{mul.53} parent=0 // pred_check
    _
  $region3: #{mul.53} parent=0 // pred_check_branch
    %3 = sbr.rel (0) target = $region5
  $region4: #{mul.53} parent=0 // pred_region
    _
  $region5: #{mul.53} parent=0 // pred_fallthru
    _
  %v4 = vld [vmem:[%s0] ss:$0 sm:$0xff]
  %5 = vst [vmem:[%s1] sm:$0xf] %v4

// kernel: mul.54
$region0: #{mul.54}
  #allocation0 [shape = 's32[1]{0}', space=sflag, size = 0x4, scoped, tag = 'scoped memory for mul.54']
  %s0 = inlined_call_operand.vmem [shape: f32[51,4,1,1], index: 0, kind: input, shape index: {}]
  %s1 = inlined_call_operand.vmem [shape: f32[51,4,1,1], index: 1, kind: input, shape index: {}]
  %s2 = inlined_call_operand.vmem [shape: f32[51,4,1,1], index: 2, kind: output, shape index: {}]
  %v3 = vld [vmem:[%s0] sm:$0x1]
  %v4 = vld [vmem:[%s1] sm:$0x1]
  %5 = xla_tuple %v3, %v4
  %6 = xla_tuple %5
  %v7 = vmul.f32 %v3, %v4
  %8 = xla_tuple %v7
  %9 = vst [vmem:[%s2] sm:$0x1] %v7
  %s10 = scalar_lea.vmem %s0, 1
  %v11 = vld [vmem:[%s10] sm:$0x1]
  %s12 = scalar_lea.vmem %s1, 1
  %v13 = vld [vmem:[%s12] sm:$0x1]
  %14 = xla_tuple %v11, %v13
  %15 = xla_tuple %14
  %v16 = vmul.f32 %v11, %v13
  %17 = xla_tuple %v16
  %s18 = scalar_lea.vmem %s2, 1
  %19 = vst [vmem:[%s18] sm:$0x1] %v16
  %s20 = scalar_lea.vmem %s0, 2
  %v21 = vld [vmem:[%s20] sm:$0x1]
  %s22 = scalar_lea.vmem %s1, 2
  %v23 = vld [vmem:[%s22] sm:$0x1]
  %24 = xla_tuple %v21, %v23
  %25 = xla_tuple %24
  %v26 = vmul.f32 %v21, %v23
  %27 = xla_tuple %v26
  %s28 = scalar_lea.vmem %s2, 2
  %29 = vst [vmem:[%s28] sm:$0x1] %v26
  %s30 = scalar_lea.vmem %s0, 3
  %v31 = vld [vmem:[%s30] sm:$0x1]
  %s32 = scalar_lea.vmem %s1, 3
  %v33 = vld [vmem:[%s32] sm:$0x1]
  %34 = xla_tuple %v31, %v33
  %35 = xla_tuple %34
  %v36 = vmul.f32 %v31, %v33
  %37 = xla_tuple %v36
  %s38 = scalar_lea.vmem %s2, 3
  %39 = vst [vmem:[%s38] sm:$0x1] %v36

// kernel: multiresblock_forward.1
$region0: #{multiresblock_forward.1}
  #allocation0 [shape = 'u32[]', space=smem, size = 0x4, offset = 0x4, fixed_abs, tag = 'smem constant byte address 0x4 - core index']
  #allocation1 [shape = 'u32[144,128]{1,0:T(1,128)}', space=vmem, size = 0x12000, scoped, tag = 'internal scratch']
  #allocation2 [shape = 'f32[4,290]{1,0:T(4,128)}', space=vmem, size = 0x1800, scoped, tag = 'scratch operand']
  #allocation3 [shape = 'f32[8,290]{1,0:T(8,128)}', space=vmem, size = 0x3000, scoped, tag = 'scratch operand']
  #allocation4 [shape = 'f32[17,290]{1,0:T(8,128)}', space=vmem, size = 0x9000, scoped, tag = 'scratch operand']
  #allocation5 [shape = 'f32[36,256]{1,0:T(8,128)}', space=vmem, size = 0xa000, scoped, tag = 'scratch operand']
  #allocation6 [shape = 'f32[72,256]{1,0:T(8,128)}', space=vmem, size = 0x12000, scoped, tag = 'scratch operand']
  #allocation7 [shape = 'f32[153,256]{1,0:T(8,128)}', space=vmem, size = 0x28000, scoped, tag = 'scratch operand']
  %s0 = inlined_call_operand.vmem [shape: f32[2,4,256], index: 0, kind: input, shape index: {}]
  %s1 = inlined_call_operand.vmem [shape: f32[2,256], index: 1, kind: input, shape index: {}]
  %s2 = inlined_call_operand.vmem [shape: f32[8,36], index: 2, kind: input, shape index: {}]
  %s3 = inlined_call_operand.vmem [shape: f32[8,1], index: 3, kind: input, shape index: {}]
  %s4 = inlined_call_operand.vmem [shape: f32[17,72], index: 4, kind: input, shape index: {}]
  %s5 = inlined_call_operand.vmem [shape: f32[17,1], index: 5, kind: input, shape index: {}]
  %s6 = inlined_call_operand.vmem [shape: f32[26,153], index: 6, kind: input, shape index: {}]
  %s7 = inlined_call_operand.vmem [shape: f32[26,1], index: 7, kind: input, shape index: {}]
  %s8 = inlined_call_operand.vmem [shape: f32[8,4], index: 8, kind: input, shape index: {}]
  %s9 = inlined_call_operand.vmem [shape: f32[17,4], index: 9, kind: input, shape index: {}]
  %s10 = inlined_call_operand.vmem [shape: f32[26,4], index: 10, kind: input, shape index: {}]
  %s11 = inlined_call_operand.vmem [shape: f32[8,1], index: 11, kind: input, shape index: {}]
  %s12 = inlined_call_operand.vmem [shape: f32[8,1], index: 12, kind: input, shape index: {}]
  %s13 = inlined_call_operand.vmem [shape: f32[17,1], index: 13, kind: input, shape index: {}]
  %s14 = inlined_call_operand.vmem [shape: f32[17,1], index: 14, kind: input, shape index: {}]
  %s15 = inlined_call_operand.vmem [shape: f32[26,1], index: 15, kind: input, shape index: {}]
  %s16 = inlined_call_operand.vmem [shape: f32[26,1], index: 16, kind: input, shape index: {}]
  %s17 = inlined_call_operand.vmem [shape: f32[2,51,256], index: 17, kind: output, shape index: {}]
  %s18 = sld [smem:[#allocation0]]
  $region101: #{multiresblock_forward.1} parent=0
    _
  %s20 = ssub.s32 1, %s18
  %s21 = scalar_select 0, %s20, %s18
  loop: start=0, step=1, limit=4
  $region2: #{multiresblock_forward.1} parent=0 // loop_pre_header
    _
  $region3: #{multiresblock_forward.1} parent=0 // loop_header
    %s23 = sphi 0, %s27
    %p24 = scmp.ge.s32.totalorder %s23, 4
    %s33 = sphi 0, %s35
    %s36 = sphi 0, %s33
    %s37 = sphi 0, %s36
    %s53 = sphi 0, %s37
    %s57 = sphi 0, %s57
    %s59 = sphi 0, %s57
    %s60 = sphi 0, %s59
    %s74 = sphi 0, %s60
    %s78 = sphi 0, %s78
    %s80 = sphi 0, %s78
    %s81 = sphi 0, %s80
    %s95 = sphi 0, %s81
    %s99 = sphi 0, %s99
    %s101 = sphi 0, %s99
    %s102 = sphi 0, %s101
    %s116 = sphi 0, %s102
    %s120 = sphi 0, %s120
    %s122 = sphi 0, %s120
    %s123 = sphi 0, %s122
    %s137 = sphi 0, %s123
    %s141 = sphi 0, %s141
    %s143 = sphi 0, %s141
    %s144 = sphi 0, %s143
    %s158 = sphi 0, %s144
    %s162 = sphi 0, %s162
    %s164 = sphi 0, %s162
    %s165 = sphi 0, %s164
    %s179 = sphi 0, %s165
    %s183 = sphi 0, %s183
    %s185 = sphi 0, %s183
    %s186 = sphi 0, %s185
    %s200 = sphi 0, %s186
    %s204 = sphi 0, %s204
    %s206 = sphi 0, %s204
    %s207 = sphi 0, %s206
    %s221 = sphi 0, %s207
    %s225 = sphi 0, %s225
    %s227 = sphi 0, %s225
    %s228 = sphi 0, %s227
    %s242 = sphi 0, %s228
    %s246 = sphi 0, %s246
    %s248 = sphi 0, %s246
    %s249 = sphi 0, %s248
    %s263 = sphi 0, %s249
    %s267 = sphi 0, %s267
    %s269 = sphi 0, %s267
    %s270 = sphi 0, %s269
    %s284 = sphi 0, %s270
    %s288 = sphi 0, %s288
    %s290 = sphi 0, %s288
    %s291 = sphi 0, %s290
    %s305 = sphi 0, %s291
    %s309 = sphi 0, %s309
    %s311 = sphi 0, %s309
    %s312 = sphi 0, %s311
    %s326 = sphi 0, %s312
    %s330 = sphi 0, %s330
    %s332 = sphi 0, %s330
    %s333 = sphi 0, %s332
    %s347 = sphi 0, %s333
    %s351 = sphi 0, %s351
    %s353 = sphi 0, %s351
    %s354 = sphi 0, %s353
    %s368 = sphi 0, %s354
    %s372 = sphi 0, %s372
    %s374 = sphi 0, %s372
    %s375 = sphi 0, %s374
    %s389 = sphi 0, %s375
    %s395 = sphi 0, %s397
    %s398 = sphi 0, %s395
    %s399 = sphi 0, %s398
    %s415 = sphi 0, %s399
  $region4: #{multiresblock_forward.1} parent=0 // loop_header_branch
    %26 = sbr.rel (%p24) target = $region8
  $region5: #{multiresblock_forward.1} parent=0 // loop_body
    %s28 = ssub.s32 %s23, 1
    %s29 = ssub.s32 %s23, 2
    %s30 = sadd.s32 %s23, 1
    %s31 = ssub.s32 %s23, %s30
    %p32 = scmp.eq.s32.totalorder %s31, 0
    %s34 = sadd.s32 %s33, 1
    %s35 = scalar_select %p32, %s33, %s34
    %p38 = pneg %p32
    %p39 = scmp.eq.s32.totalorder %s23, 1
    %p40 = por %p38, %p39
    %p41 = scmp.ne.s32.totalorder %s33, %s36
    %p42 = scmp.eq.s32.totalorder %s23, 0
    %p43 = por %p41, %p42
    %p44 = scmp.ne.s32.totalorder %s33, %s36
    %p45 = scmp.eq.s32.totalorder %s28, 1
    %p46 = por %p44, %p45
    %p47 = scmp.ne.s32.totalorder %s36, %s37
    %p48 = scmp.eq.s32.totalorder %s28, 0
    %p49 = por %p47, %p48
    %p50 = scmp.ne.s32.totalorder %s36, %s37
    %p51 = scmp.eq.s32.totalorder %s29, 1
    %p52 = por %p50, %p51
    %p54 = scmp.ne.s32.totalorder %s37, %s53
    %p55 = scmp.eq.s32.totalorder %s29, 0
    %p56 = por %p54, %p55
    %s58 = sadd.s32 %s57, 1
    %p61 = scmp.eq.s32.totalorder %s23, 1
    %p62 = scmp.ne.s32.totalorder %s57, %s59
    %p63 = scmp.eq.s32.totalorder %s23, 0
    %p64 = por %p62, %p63
    %p65 = scmp.ne.s32.totalorder %s57, %s59
    %p66 = scmp.eq.s32.totalorder %s28, 1
    %p67 = por %p65, %p66
    %p68 = scmp.ne.s32.totalorder %s59, %s60
    %p69 = scmp.eq.s32.totalorder %s28, 0
    %p70 = por %p68, %p69
    %p71 = scmp.ne.s32.totalorder %s59, %s60
    %p72 = scmp.eq.s32.totalorder %s29, 1
    %p73 = por %p71, %p72
    %p75 = scmp.ne.s32.totalorder %s60, %s74
    %p76 = scmp.eq.s32.totalorder %s29, 0
    %p77 = por %p75, %p76
    %s79 = sadd.s32 %s78, 1
    %p82 = scmp.eq.s32.totalorder %s23, 1
    %p83 = scmp.ne.s32.totalorder %s78, %s80
    %p84 = scmp.eq.s32.totalorder %s23, 0
    %p85 = por %p83, %p84
    %p86 = scmp.ne.s32.totalorder %s78, %s80
    %p87 = scmp.eq.s32.totalorder %s28, 1
    %p88 = por %p86, %p87
    %p89 = scmp.ne.s32.totalorder %s80, %s81
    %p90 = scmp.eq.s32.totalorder %s28, 0
    %p91 = por %p89, %p90
    %p92 = scmp.ne.s32.totalorder %s80, %s81
    %p93 = scmp.eq.s32.totalorder %s29, 1
    %p94 = por %p92, %p93
    %p96 = scmp.ne.s32.totalorder %s81, %s95
    %p97 = scmp.eq.s32.totalorder %s29, 0
    %p98 = por %p96, %p97
    %s100 = sadd.s32 %s99, 1
    %p103 = scmp.eq.s32.totalorder %s23, 1
    %p104 = scmp.ne.s32.totalorder %s99, %s101
    %p105 = scmp.eq.s32.totalorder %s23, 0
    %p106 = por %p104, %p105
    %p107 = scmp.ne.s32.totalorder %s99, %s101
    %p108 = scmp.eq.s32.totalorder %s28, 1
    %p109 = por %p107, %p108
    %p110 = scmp.ne.s32.totalorder %s101, %s102
    %p111 = scmp.eq.s32.totalorder %s28, 0
    %p112 = por %p110, %p111
    %p113 = scmp.ne.s32.totalorder %s101, %s102
    %p114 = scmp.eq.s32.totalorder %s29, 1
    %p115 = por %p113, %p114
    %p117 = scmp.ne.s32.totalorder %s102, %s116
    %p118 = scmp.eq.s32.totalorder %s29, 0
    %p119 = por %p117, %p118
    %s121 = sadd.s32 %s120, 1
    %p124 = scmp.eq.s32.totalorder %s23, 1
    %p125 = scmp.ne.s32.totalorder %s120, %s122
    %p126 = scmp.eq.s32.totalorder %s23, 0
    %p127 = por %p125, %p126
    %p128 = scmp.ne.s32.totalorder %s120, %s122
    %p129 = scmp.eq.s32.totalorder %s28, 1
    %p130 = por %p128, %p129
    %p131 = scmp.ne.s32.totalorder %s122, %s123
    %p132 = scmp.eq.s32.totalorder %s28, 0
    %p133 = por %p131, %p132
    %p134 = scmp.ne.s32.totalorder %s122, %s123
    %p135 = scmp.eq.s32.totalorder %s29, 1
    %p136 = por %p134, %p135
    %p138 = scmp.ne.s32.totalorder %s123, %s137
    %p139 = scmp.eq.s32.totalorder %s29, 0
    %p140 = por %p138, %p139
    %s142 = sadd.s32 %s141, 1
    %p145 = scmp.eq.s32.totalorder %s23, 1
    %p146 = scmp.ne.s32.totalorder %s141, %s143
    %p147 = scmp.eq.s32.totalorder %s23, 0
    %p148 = por %p146, %p147
    %p149 = scmp.ne.s32.totalorder %s141, %s143
    %p150 = scmp.eq.s32.totalorder %s28, 1
    %p151 = por %p149, %p150
    %p152 = scmp.ne.s32.totalorder %s143, %s144
    %p153 = scmp.eq.s32.totalorder %s28, 0
    %p154 = por %p152, %p153
    %p155 = scmp.ne.s32.totalorder %s143, %s144
    %p156 = scmp.eq.s32.totalorder %s29, 1
    %p157 = por %p155, %p156
    %p159 = scmp.ne.s32.totalorder %s144, %s158
    %p160 = scmp.eq.s32.totalorder %s29, 0
    %p161 = por %p159, %p160
    %s163 = sadd.s32 %s162, 1
    %p166 = scmp.eq.s32.totalorder %s23, 1
    %p167 = scmp.ne.s32.totalorder %s162, %s164
    %p168 = scmp.eq.s32.totalorder %s23, 0
    %p169 = por %p167, %p168
    %p170 = scmp.ne.s32.totalorder %s162, %s164
    %p171 = scmp.eq.s32.totalorder %s28, 1
    %p172 = por %p170, %p171
    %p173 = scmp.ne.s32.totalorder %s164, %s165
    %p174 = scmp.eq.s32.totalorder %s28, 0
    %p175 = por %p173, %p174
    %p176 = scmp.ne.s32.totalorder %s164, %s165
    %p177 = scmp.eq.s32.totalorder %s29, 1
    %p178 = por %p176, %p177
    %p180 = scmp.ne.s32.totalorder %s165, %s179
    %p181 = scmp.eq.s32.totalorder %s29, 0
    %p182 = por %p180, %p181
    %s184 = sadd.s32 %s183, 1
    %p187 = scmp.eq.s32.totalorder %s23, 1
    %p188 = scmp.ne.s32.totalorder %s183, %s185
    %p189 = scmp.eq.s32.totalorder %s23, 0
    %p190 = por %p188, %p189
    %p191 = scmp.ne.s32.totalorder %s183, %s185
    %p192 = scmp.eq.s32.totalorder %s28, 1
    %p193 = por %p191, %p192
    %p194 = scmp.ne.s32.totalorder %s185, %s186
    %p195 = scmp.eq.s32.totalorder %s28, 0
    %p196 = por %p194, %p195
    %p197 = scmp.ne.s32.totalorder %s185, %s186
    %p198 = scmp.eq.s32.totalorder %s29, 1
    %p199 = por %p197, %p198
    %p201 = scmp.ne.s32.totalorder %s186, %s200
    %p202 = scmp.eq.s32.totalorder %s29, 0
    %p203 = por %p201, %p202
    %s205 = sadd.s32 %s204, 1
    %p208 = scmp.eq.s32.totalorder %s23, 1
    %p209 = scmp.ne.s32.totalorder %s204, %s206
    %p210 = scmp.eq.s32.totalorder %s23, 0
    %p211 = por %p209, %p210
    %p212 = scmp.ne.s32.totalorder %s204, %s206
    %p213 = scmp.eq.s32.totalorder %s28, 1
    %p214 = por %p212, %p213
    %p215 = scmp.ne.s32.totalorder %s206, %s207
    %p216 = scmp.eq.s32.totalorder %s28, 0
    %p217 = por %p215, %p216
    %p218 = scmp.ne.s32.totalorder %s206, %s207
    %p219 = scmp.eq.s32.totalorder %s29, 1
    %p220 = por %p218, %p219
    %p222 = scmp.ne.s32.totalorder %s207, %s221
    %p223 = scmp.eq.s32.totalorder %s29, 0
    %p224 = por %p222, %p223
    %s226 = sadd.s32 %s225, 1
    %p229 = scmp.eq.s32.totalorder %s23, 1
    %p230 = scmp.ne.s32.totalorder %s225, %s227
    %p231 = scmp.eq.s32.totalorder %s23, 0
    %p232 = por %p230, %p231
    %p233 = scmp.ne.s32.totalorder %s225, %s227
    %p234 = scmp.eq.s32.totalorder %s28, 1
    %p235 = por %p233, %p234
    %p236 = scmp.ne.s32.totalorder %s227, %s228
    %p237 = scmp.eq.s32.totalorder %s28, 0
    %p238 = por %p236, %p237
    %p239 = scmp.ne.s32.totalorder %s227, %s228
    %p240 = scmp.eq.s32.totalorder %s29, 1
    %p241 = por %p239, %p240
    %p243 = scmp.ne.s32.totalorder %s228, %s242
    %p244 = scmp.eq.s32.totalorder %s29, 0
    %p245 = por %p243, %p244
    %s247 = sadd.s32 %s246, 1
    %p250 = scmp.eq.s32.totalorder %s23, 1
    %p251 = scmp.ne.s32.totalorder %s246, %s248
    %p252 = scmp.eq.s32.totalorder %s23, 0
    %p253 = por %p251, %p252
    %p254 = scmp.ne.s32.totalorder %s246, %s248
    %p255 = scmp.eq.s32.totalorder %s28, 1
    %p256 = por %p254, %p255
    %p257 = scmp.ne.s32.totalorder %s248, %s249
    %p258 = scmp.eq.s32.totalorder %s28, 0
    %p259 = por %p257, %p258
    %p260 = scmp.ne.s32.totalorder %s248, %s249
    %p261 = scmp.eq.s32.totalorder %s29, 1
    %p262 = por %p260, %p261
    %p264 = scmp.ne.s32.totalorder %s249, %s263
    %p265 = scmp.eq.s32.totalorder %s29, 0
    %p266 = por %p264, %p265
    %s268 = sadd.s32 %s267, 1
    %p271 = scmp.eq.s32.totalorder %s23, 1
    %p272 = scmp.ne.s32.totalorder %s267, %s269
    %p273 = scmp.eq.s32.totalorder %s23, 0
    %p274 = por %p272, %p273
    %p275 = scmp.ne.s32.totalorder %s267, %s269
    %p276 = scmp.eq.s32.totalorder %s28, 1
    %p277 = por %p275, %p276
    %p278 = scmp.ne.s32.totalorder %s269, %s270
    %p279 = scmp.eq.s32.totalorder %s28, 0
    %p280 = por %p278, %p279
    %p281 = scmp.ne.s32.totalorder %s269, %s270
    %p282 = scmp.eq.s32.totalorder %s29, 1
    %p283 = por %p281, %p282
    %p285 = scmp.ne.s32.totalorder %s270, %s284
    %p286 = scmp.eq.s32.totalorder %s29, 0
    %p287 = por %p285, %p286
    %s289 = sadd.s32 %s288, 1
    %p292 = scmp.eq.s32.totalorder %s23, 1
    %p293 = scmp.ne.s32.totalorder %s288, %s290
    %p294 = scmp.eq.s32.totalorder %s23, 0
    %p295 = por %p293, %p294
    %p296 = scmp.ne.s32.totalorder %s288, %s290
    %p297 = scmp.eq.s32.totalorder %s28, 1
    %p298 = por %p296, %p297
    %p299 = scmp.ne.s32.totalorder %s290, %s291
    %p300 = scmp.eq.s32.totalorder %s28, 0
    %p301 = por %p299, %p300
    %p302 = scmp.ne.s32.totalorder %s290, %s291
    %p303 = scmp.eq.s32.totalorder %s29, 1
    %p304 = por %p302, %p303
    %p306 = scmp.ne.s32.totalorder %s291, %s305
    %p307 = scmp.eq.s32.totalorder %s29, 0
    %p308 = por %p306, %p307
    %s310 = sadd.s32 %s309, 1
    %p313 = scmp.eq.s32.totalorder %s23, 1
    %p314 = scmp.ne.s32.totalorder %s309, %s311
    %p315 = scmp.eq.s32.totalorder %s23, 0
    %p316 = por %p314, %p315
    %p317 = scmp.ne.s32.totalorder %s309, %s311
    %p318 = scmp.eq.s32.totalorder %s28, 1
    %p319 = por %p317, %p318
    %p320 = scmp.ne.s32.totalorder %s311, %s312
    %p321 = scmp.eq.s32.totalorder %s28, 0
    %p322 = por %p320, %p321
    %p323 = scmp.ne.s32.totalorder %s311, %s312
    %p324 = scmp.eq.s32.totalorder %s29, 1
    %p325 = por %p323, %p324
    %p327 = scmp.ne.s32.totalorder %s312, %s326
    %p328 = scmp.eq.s32.totalorder %s29, 0
    %p329 = por %p327, %p328
    %s331 = sadd.s32 %s330, 1
    %p334 = scmp.eq.s32.totalorder %s23, 1
    %p335 = scmp.ne.s32.totalorder %s330, %s332
    %p336 = scmp.eq.s32.totalorder %s23, 0
    %p337 = por %p335, %p336
    %p338 = scmp.ne.s32.totalorder %s330, %s332
    %p339 = scmp.eq.s32.totalorder %s28, 1
    %p340 = por %p338, %p339
    %p341 = scmp.ne.s32.totalorder %s332, %s333
    %p342 = scmp.eq.s32.totalorder %s28, 0
    %p343 = por %p341, %p342
    %p344 = scmp.ne.s32.totalorder %s332, %s333
    %p345 = scmp.eq.s32.totalorder %s29, 1
    %p346 = por %p344, %p345
    %p348 = scmp.ne.s32.totalorder %s333, %s347
    %p349 = scmp.eq.s32.totalorder %s29, 0
    %p350 = por %p348, %p349
    %s352 = sadd.s32 %s351, 1
    %p355 = scmp.eq.s32.totalorder %s23, 1
    %p356 = scmp.ne.s32.totalorder %s351, %s353
    %p357 = scmp.eq.s32.totalorder %s23, 0
    %p358 = por %p356, %p357
    %p359 = scmp.ne.s32.totalorder %s351, %s353
    %p360 = scmp.eq.s32.totalorder %s28, 1
    %p361 = por %p359, %p360
    %p362 = scmp.ne.s32.totalorder %s353, %s354
    %p363 = scmp.eq.s32.totalorder %s28, 0
    %p364 = por %p362, %p363
    %p365 = scmp.ne.s32.totalorder %s353, %s354
    %p366 = scmp.eq.s32.totalorder %s29, 1
    %p367 = por %p365, %p366
    %p369 = scmp.ne.s32.totalorder %s354, %s368
    %p370 = scmp.eq.s32.totalorder %s29, 0
    %p371 = por %p369, %p370
    %s373 = sadd.s32 %s372, 1
    %p376 = scmp.eq.s32.totalorder %s23, 1
    %p377 = scmp.ne.s32.totalorder %s372, %s374
    %p378 = scmp.eq.s32.totalorder %s23, 0
    %p379 = por %p377, %p378
    %p380 = scmp.ne.s32.totalorder %s372, %s374
    %p381 = scmp.eq.s32.totalorder %s28, 1
    %p382 = por %p380, %p381
    %p383 = scmp.ne.s32.totalorder %s374, %s375
    %p384 = scmp.eq.s32.totalorder %s28, 0
    %p385 = por %p383, %p384
    %p386 = scmp.ne.s32.totalorder %s374, %s375
    %p387 = scmp.eq.s32.totalorder %s29, 1
    %p388 = por %p386, %p387
    %p390 = scmp.ne.s32.totalorder %s375, %s389
    %p391 = scmp.eq.s32.totalorder %s29, 0
    %p392 = por %p390, %p391
    %s393 = ssub.s32 %s23, %s30
    %p394 = scmp.eq.s32.totalorder %s393, 0
    %s396 = sadd.s32 %s395, 1
    %s397 = scalar_select %p394, %s395, %s396
    %p400 = pneg %p394
    %p401 = scmp.eq.s32.totalorder %s23, 1
    %p402 = por %p400, %p401
    %p403 = scmp.ne.s32.totalorder %s395, %s398
    %p404 = scmp.eq.s32.totalorder %s23, 0
    %p405 = por %p403, %p404
    %p406 = scmp.ne.s32.totalorder %s395, %s398
    %p407 = scmp.eq.s32.totalorder %s28, 1
    %p408 = por %p406, %p407
    %p409 = scmp.ne.s32.totalorder %s398, %s399
    %p410 = scmp.eq.s32.totalorder %s28, 0
    %p411 = por %p409, %p410
    %p412 = scmp.ne.s32.totalorder %s398, %s399
    %p413 = scmp.eq.s32.totalorder %s29, 1
    %p414 = por %p412, %p413
    %p416 = scmp.ne.s32.totalorder %s399, %s415
    %p417 = scmp.eq.s32.totalorder %s29, 0
    %p418 = por %p416, %p417
    %p419 = scmp.le.s32.totalorder 1, %s23
    %p420 = scmp.lt.s32.totalorder %s23, 3
    %p421 = pnand %p419, %p420
    %p422 = pneg %p421
    // Predicated region
    $region9: #{multiresblock_forward.1} parent=5 // pred_check
      _
    $region10: #{multiresblock_forward.1} parent=5 // pred_check_branch
      %424 = sbr.rel (%p421) target = $region12
    $region11: #{multiresblock_forward.1} parent=5 // pred_region
      %s425 = ssub.s32 %s23, 1
      // Predicated region
      $region13: #{multiresblock_forward.1} parent=11 // pred_check
        %p426 = pneg %p70
      $region14: #{multiresblock_forward.1} parent=11 // pred_check_branch
        %428 = sbr.rel (%p426) target = $region16
      $region15: #{multiresblock_forward.1} parent=11 // pred_region
        _
      $region16: #{multiresblock_forward.1} parent=11 // pred_fallthru
        _
      // Predicated region
      $region17: #{multiresblock_forward.1} parent=11 // pred_check
        %p429 = pneg %p91
      $region18: #{multiresblock_forward.1} parent=11 // pred_check_branch
        %431 = sbr.rel (%p429) target = $region20
      $region19: #{multiresblock_forward.1} parent=11 // pred_region
        _
      $region20: #{multiresblock_forward.1} parent=11 // pred_fallthru
        _
      // Predicated region
      $region21: #{multiresblock_forward.1} parent=11 // pred_check
        %p432 = pneg %p112
      $region22: #{multiresblock_forward.1} parent=11 // pred_check_branch
        %434 = sbr.rel (%p432) target = $region24
      $region23: #{multiresblock_forward.1} parent=11 // pred_region
        _
      $region24: #{multiresblock_forward.1} parent=11 // pred_fallthru
        _
      // Predicated region
      $region25: #{multiresblock_forward.1} parent=11 // pred_check
        %p435 = pneg %p133
      $region26: #{multiresblock_forward.1} parent=11 // pred_check_branch
        %437 = sbr.rel (%p435) target = $region28
      $region27: #{multiresblock_forward.1} parent=11 // pred_region
        _
      $region28: #{multiresblock_forward.1} parent=11 // pred_fallthru
        _
      // Predicated region
      $region29: #{multiresblock_forward.1} parent=11 // pred_check
        %p438 = pneg %p154
      $region30: #{multiresblock_forward.1} parent=11 // pred_check_branch
        %440 = sbr.rel (%p438) target = $region32
      $region31: #{multiresblock_forward.1} parent=11 // pred_region
        _
      $region32: #{multiresblock_forward.1} parent=11 // pred_fallthru
        _
      // Predicated region
      $region33: #{multiresblock_forward.1} parent=11 // pred_check
        %p441 = pneg %p175
      $region34: #{multiresblock_forward.1} parent=11 // pred_check_branch
        %443 = sbr.rel (%p441) target = $region36
      $region35: #{multiresblock_forward.1} parent=11 // pred_region
        _
      $region36: #{multiresblock_forward.1} parent=11 // pred_fallthru
        _
      // Predicated region
      $region37: #{multiresblock_forward.1} parent=11 // pred_check
        %p444 = pneg %p196
      $region38: #{multiresblock_forward.1} parent=11 // pred_check_branch
        %446 = sbr.rel (%p444) target = $region40
      $region39: #{multiresblock_forward.1} parent=11 // pred_region
        _
      $region40: #{multiresblock_forward.1} parent=11 // pred_fallthru
        _
      // Predicated region
      $region41: #{multiresblock_forward.1} parent=11 // pred_check
        %p447 = pneg %p217
      $region42: #{multiresblock_forward.1} parent=11 // pred_check_branch
        %449 = sbr.rel (%p447) target = $region44
      $region43: #{multiresblock_forward.1} parent=11 // pred_region
        _
      $region44: #{multiresblock_forward.1} parent=11 // pred_fallthru
        _
      // Predicated region
      $region45: #{multiresblock_forward.1} parent=11 // pred_check
        %p450 = pneg %p238
      $region46: #{multiresblock_forward.1} parent=11 // pred_check_branch
        %452 = sbr.rel (%p450) target = $region48
      $region47: #{multiresblock_forward.1} parent=11 // pred_region
        _
      $region48: #{multiresblock_forward.1} parent=11 // pred_fallthru
        _
      // Predicated region
      $region49: #{multiresblock_forward.1} parent=11 // pred_check
        %p453 = pneg %p259
      $region50: #{multiresblock_forward.1} parent=11 // pred_check_branch
        %455 = sbr.rel (%p453) target = $region52
      $region51: #{multiresblock_forward.1} parent=11 // pred_region
        _
      $region52: #{multiresblock_forward.1} parent=11 // pred_fallthru
        _
      // Predicated region
      $region53: #{multiresblock_forward.1} parent=11 // pred_check
        %p456 = pneg %p280
      $region54: #{multiresblock_forward.1} parent=11 // pred_check_branch
        %458 = sbr.rel (%p456) target = $region56
      $region55: #{multiresblock_forward.1} parent=11 // pred_region
        _
      $region56: #{multiresblock_forward.1} parent=11 // pred_fallthru
        _
      // Predicated region
      $region57: #{multiresblock_forward.1} parent=11 // pred_check
        %p459 = pneg %p301
      $region58: #{multiresblock_forward.1} parent=11 // pred_check_branch
        %461 = sbr.rel (%p459) target = $region60
      $region59: #{multiresblock_forward.1} parent=11 // pred_region
        _
      $region60: #{multiresblock_forward.1} parent=11 // pred_fallthru
        _
      // Predicated region
      $region61: #{multiresblock_forward.1} parent=11 // pred_check
        %p462 = pneg %p322
      $region62: #{multiresblock_forward.1} parent=11 // pred_check_branch
        %464 = sbr.rel (%p462) target = $region64
      $region63: #{multiresblock_forward.1} parent=11 // pred_region
        _
      $region64: #{multiresblock_forward.1} parent=11 // pred_fallthru
        _
      // Predicated region
      $region65: #{multiresblock_forward.1} parent=11 // pred_check
        %p465 = pneg %p343
      $region66: #{multiresblock_forward.1} parent=11 // pred_check_branch
        %467 = sbr.rel (%p465) target = $region68
      $region67: #{multiresblock_forward.1} parent=11 // pred_region
        _
      $region68: #{multiresblock_forward.1} parent=11 // pred_fallthru
        _
      // Predicated region
      $region69: #{multiresblock_forward.1} parent=11 // pred_check
        %p468 = pneg %p364
      $region70: #{multiresblock_forward.1} parent=11 // pred_check_branch
        %470 = sbr.rel (%p468) target = $region72
      $region71: #{multiresblock_forward.1} parent=11 // pred_region
        _
      $region72: #{multiresblock_forward.1} parent=11 // pred_fallthru
        _
      // Predicated region
      $region73: #{multiresblock_forward.1} parent=11 // pred_check
        %p471 = pneg %p385
      $region74: #{multiresblock_forward.1} parent=11 // pred_check_branch
        %473 = sbr.rel (%p471) target = $region76
      $region75: #{multiresblock_forward.1} parent=11 // pred_region
        _
      $region76: #{multiresblock_forward.1} parent=11 // pred_fallthru
        _
    $region12: #{multiresblock_forward.1} parent=5 // pred_fallthru
      _
    %p474 = scmp.lt.s32.totalorder %s23, 2
    // Predicated region
    $region77: #{multiresblock_forward.1} parent=5 // pred_check
      %p475 = pneg %p474
    $region78: #{multiresblock_forward.1} parent=5 // pred_check_branch
      %477 = sbr.rel (%p475) target = $region80
    $region79: #{multiresblock_forward.1} parent=5 // pred_region
      // Predicated region
      $region81: #{multiresblock_forward.1} parent=79 // pred_check
        %p478 = pneg %p43
      $region82: #{multiresblock_forward.1} parent=79 // pred_check_branch
        %480 = sbr.rel (%p478) target = $region84
      $region83: #{multiresblock_forward.1} parent=79 // pred_region
        %p481 = scmp.lt.s32.totalorder %s23, 1
        %s482 = scalar_select %p481, %s23, 1
        %s483 = smul.addr %s482, 2
        %s484 = smul.addr %s483, 4
        %s485 = scalar_lea.vmem %s0, %s484
      $region84: #{multiresblock_forward.1} parent=79 // pred_fallthru
        _
    $region80: #{multiresblock_forward.1} parent=5 // pred_fallthru
      _
    %p486 = scmp.le.s32.totalorder 1, %s23
    %p487 = scmp.lt.s32.totalorder %s23, 3
    %p488 = pnand %p486, %p487
    %p489 = pneg %p488
    // Predicated region
    $region85: #{multiresblock_forward.1} parent=5 // pred_check
      _
    $region86: #{multiresblock_forward.1} parent=5 // pred_check_branch
      %491 = sbr.rel (%p488) target = $region88
    $region87: #{multiresblock_forward.1} parent=5 // pred_region
      %s492 = ssub.s32 %s23, 1
      %p493 = scmp.lt.s32.totalorder %s28, 1
      %s494 = scalar_select %p493, %s28, 1
      %s495 = smul.addr %s494, 2
      %s496 = smul.addr %s495, 4
      %s497 = scalar_lea.vmem %s0, %s496
      %p498 = pneg %p49
      %p499 = pneg %p46
      %p500 = pneg %p70
      %p501 = pneg %p67
      %p502 = pneg %p91
      %p503 = pneg %p88
      %p504 = pneg %p112
      %p505 = pneg %p109
      %p506 = pneg %p133
      %p507 = pneg %p130
      %p508 = pneg %p154
      %p509 = pneg %p151
      %p510 = pneg %p175
      %p511 = pneg %p172
      %p512 = pneg %p196
      %p513 = pneg %p193
      %p514 = pneg %p217
      %p515 = pneg %p214
      %p516 = pneg %p238
      %p517 = pneg %p235
      %p518 = pneg %p259
      %p519 = pneg %p256
      %p520 = pneg %p280
      %p521 = pneg %p277
      %p522 = pneg %p301
      %p523 = pneg %p298
      %p524 = pneg %p322
      %p525 = pneg %p319
      %p526 = pneg %p343
      %p527 = pneg %p340
      %p528 = pneg %p364
      %p529 = pneg %p361
      %p530 = pneg %p385
      %p531 = pneg %p382
      %p532 = pneg %p411
      %p533 = pneg %p408
      %p534 = scmp.lt.s32.totalorder %s28, 1
      %s535 = scalar_select %p534, %s28, 1
      %s536 = smul.addr %s535, 14
      %s537 = smul.addr %s536, 8
      %s538 = scalar_lea.vmem %s17, %s537
      %p539 = scmp.lt.s32.totalorder %s28, 1
      %s540 = scalar_select %p539, %s28, 1
      %s541 = smul.addr %s540, 2
      %s542 = smul.addr %s541, 4
      %s543 = scalar_lea.vmem %s0, %s542
      %p544 = scmp.lt.s32.totalorder %s28, 1
      %s545 = scalar_select %p544, %s28, 1
      %s546 = smul.addr %s545, 14
      %s547 = smul.addr %s546, 8
      %s548 = scalar_lea.vmem %s17, %s547
      %549 = vst [vmem:[#allocation2] sm:$0xff] 0.0
      %vm550 = vcmask 273408
      %551 = vst.msk [vmem:[#allocation2 + $0x8] sm:$0xf] %vm550, 0.0
      %552 = vst [vmem:[#allocation3] sm:$0xff] 0.0
      %553 = vst [vmem:[#allocation3 + $0x8] sm:$0xff] 0.0
      %vm554 = vcmask 277504
      %555 = vst.msk [vmem:[#allocation3 + $0x10] sm:$0xff] %vm554, 0.0
      %556 = vst [vmem:[#allocation4] sm:$0xff] 0.0
      %557 = vst [vmem:[#allocation4 + $0x8] sm:$0xff] 0.0
      %558 = vst.msk [vmem:[#allocation4 + $0x10] sm:$0xff] %vm554, 0.0
      %559 = vst [vmem:[#allocation4 + $0x18] sm:$0xff] 0.0
      %560 = vst [vmem:[#allocation4 + $0x20] sm:$0xff] 0.0
      %561 = vst.msk [vmem:[#allocation4 + $0x28] sm:$0xff] %vm554, 0.0
      %562 = vst [vmem:[#allocation4 + $0x30] sm:$0x1] 0.0
      %563 = vst [vmem:[#allocation4 + $0x38] sm:$0x1] 0.0
      %vm564 = vcmask 270336
      %565 = vst.msk [vmem:[#allocation4 + $0x40] sm:$0x1] %vm564, 0.0
      %v566 = vld [vmem:[%s543] sm:$0xff]
      %568 = vrot.lane.b32.xlu0 %v566, 17
      %v569 = vpop.permute.xlu0 %568
      %v570 = vrot.slane %v569, 4
      %vm571 = vcmask 138240
      %v572 = vsel %vm571, %v570, %v569
      %vm575 = vcmask 1043592
      %vm576 = vcmask 1047556
      %vm577 = vmor %vm576, %vm575
      %578 = vst.msk [vmem:[#allocation2] sm:$0xff] %vm577, %v572
      %vm579 = vcmask 134144
      %580 = vst.msk [vmem:[#allocation2 + $0x8] sm:$0xf] %vm579, %v570
      %v581 = vld [vmem:[#allocation2] sm:$0xff]
      %v582 = vld [vmem:[%s1] ss:$2 sm:$0x3]
      %v584 = vlaneseq
      %v585 = vshrl.u32 %v584, 7
      %v586 = vsub.s32 0, %v585
      %v587 = vrot.slane %v582, %v586
      %v588 = vlaneseq
      %v589 = vshrl.u32 %v588, 7
      %v590 = vsub.s32 1, %v589
      %v591 = vrot.slane %v582, %v590
      %v592 = vcombine.low %v587, %v591
      %v594 = vmul.f32 %v581, %v592
      %v596 = vcombine.high %v594, %v594
      %598 = vst [vmem:[#allocation5] sm:$0xf] %v594
      %599 = vst [vmem:[#allocation5 + $0x8] sm:$0xf] %v596
      %v600 = vld [vmem:[#allocation2] sm:$0xff]
      %v601 = vld [vmem:[#allocation2 + $0x8] sm:$0xf]
      %v604 = vcombine.low %v600, %v600
      %v605 = vcombine.low %v601, %v601
      %606 = vrot.lane.b32.xlu0 %v604, 127
      %v607 = vpop.permute.xlu0 %606
      %608 = vrot.lane.b32.xlu0 %v600, 127
      %v609 = vpop.permute.xlu0 %608
      %610 = vrot.lane.b32.xlu0 %v605, 127
      %v611 = vpop.permute.xlu0 %610
      %vm612 = vcmask 1039360
      %v613 = vsel %vm612, %v607, %v609
      %v614 = vsel %vm612, %v609, %v611
      %617 = vst [vmem:[#allocation5] sm:$0xf0] %v613
      %618 = vst [vmem:[#allocation5 + $0x8] sm:$0xf0] %v614
      %v619 = vld [vmem:[#allocation2] sm:$0xff]
      %v620 = vld [vmem:[#allocation2 + $0x8] sm:$0xf]
      %s621 = scalar_lea.vmem %s1, 1
      %v622 = vld [vmem:[%s621] ss:$2 sm:$0x3]
      %v624 = vlaneseq
      %v625 = vshrl.u32 %v624, 7
      %v626 = vsub.s32 0, %v625
      %v627 = vrot.slane %v622, %v626
      %v628 = vlaneseq
      %v629 = vshrl.u32 %v628, 7
      %v630 = vsub.s32 1, %v629
      %v631 = vrot.slane %v622, %v630
      %v632 = vcombine.low %v627, %v631
      %633 = vrot.lane.b32.xlu0 %v632, 2
      %v634 = vpop.permute.xlu0 %633
      %v635 = vrot.slane %v634, 4
      %vm636 = vcmask 15360
      %v637 = vsel %vm636, %v635, %v634
      %v640 = vmul.f32 %v619, %v637
      %v641 = vmul.f32 %v620, %v635
      %v644 = vcombine.high %v640, %v640
      %645 = vrot.lane.b32.xlu0 %v640, 126
      %v646 = vpop.permute.xlu0 %645
      %647 = vrot.lane.b32.xlu0 %v644, 126
      %v648 = vpop.permute.xlu0 %647
      %649 = vrot.lane.b32.xlu0 %v641, 126
      %v650 = vpop.permute.xlu0 %649
      %vm651 = vcmask 1031168
      %v652 = vsel %vm651, %v646, %v648
      %v653 = vsel %vm651, %v648, %v650
      %656 = vst [vmem:[#allocation5 + $0x10] sm:$0xf] %v652
      %657 = vst [vmem:[#allocation5 + $0x18] sm:$0xf] %v653
      %v658 = vld [vmem:[#allocation2] sm:$0xff]
      %v659 = vld [vmem:[#allocation2 + $0x8] sm:$0xf]
      %v660 = vld [vmem:[%s1] ss:$2 sm:$0x3]
      %v662 = vlaneseq
      %v663 = vshrl.u32 %v662, 7
      %v664 = vsub.s32 0, %v663
      %v665 = vrot.slane %v660, %v664
      %v666 = vlaneseq
      %v667 = vshrl.u32 %v666, 7
      %v668 = vsub.s32 1, %v667
      %v669 = vrot.slane %v660, %v668
      %v670 = vcombine.low %v665, %v669
      %671 = vrot.lane.b32.xlu0 %v670, 16
      %v672 = vpop.permute.xlu0 %671
      %v673 = vrot.slane %v672, 4
      %vm674 = vcmask 130048
      %v675 = vsel %vm674, %v673, %v672
      %v678 = vmul.f32 %v658, %v675
      %v679 = vmul.f32 %v659, %v673
      %v682 = vcombine.low %v678, %v678
      %v683 = vcombine.low %v679, %v679
      %684 = vrot.lane.b32.xlu0 %v682, 112
      %v685 = vpop.permute.xlu0 %684
      %686 = vrot.lane.b32.xlu0 %v678, 112
      %v687 = vpop.permute.xlu0 %686
      %688 = vrot.lane.b32.xlu0 %v683, 112
      %v689 = vpop.permute.xlu0 %688
      %vm690 = vcmask 916480
      %v691 = vsel %vm690, %v685, %v687
      %v692 = vsel %vm690, %v687, %v689
      %695 = vst [vmem:[#allocation5 + $0x10] sm:$0xf0] %v691
      %696 = vst [vmem:[#allocation5 + $0x18] sm:$0xf0] %v692
      %v697 = vld [vmem:[#allocation2] sm:$0xff]
      %v698 = vld [vmem:[#allocation2 + $0x8] sm:$0xf]
      %v701 = vcombine.high %v697, %v697
      %702 = vrot.lane.b32.xlu0 %v697, 111
      %v703 = vpop.permute.xlu0 %702
      %704 = vrot.lane.b32.xlu0 %v701, 111
      %v705 = vpop.permute.xlu0 %704
      %706 = vrot.lane.b32.xlu0 %v698, 111
      %v707 = vpop.permute.xlu0 %706
      %vm708 = vcmask 908288
      %v709 = vsel %vm708, %v703, %v705
      %v710 = vsel %vm708, %v705, %v707
      %713 = vst [vmem:[#allocation5 + $0x20] sm:$0xf] %v709
      %714 = vst [vmem:[#allocation5 + $0x28] sm:$0xf] %v710
      %v715 = vld [vmem:[#allocation2] sm:$0xff]
      %v716 = vld [vmem:[#allocation2 + $0x8] sm:$0xf]
      %v717 = vld [vmem:[%s621] ss:$2 sm:$0x3]
      %v719 = vlaneseq
      %v720 = vshrl.u32 %v719, 7
      %v721 = vsub.s32 0, %v720
      %v722 = vrot.slane %v717, %v721
      %v723 = vlaneseq
      %v724 = vshrl.u32 %v723, 7
      %v725 = vsub.s32 1, %v724
      %v726 = vrot.slane %v717, %v725
      %v727 = vcombine.low %v722, %v726
      %728 = vrot.lane.b32.xlu0 %v727, 18
      %v729 = vpop.permute.xlu0 %728
      %v730 = vrot.slane %v729, 4
      %vm731 = vcmask 146432
      %v732 = vsel %vm731, %v730, %v729
      %v735 = vmul.f32 %v715, %v732
      %v736 = vmul.f32 %v716, %v730
      %v739 = vcombine.low %v735, %v735
      %v740 = vcombine.low %v736, %v736
      %741 = vrot.lane.b32.xlu0 %v739, 110
      %v742 = vpop.permute.xlu0 %741
      %743 = vrot.lane.b32.xlu0 %v735, 110
      %v744 = vpop.permute.xlu0 %743
      %745 = vrot.lane.b32.xlu0 %v740, 110
      %v746 = vpop.permute.xlu0 %745
      %vm747 = vcmask 900096
      %v748 = vsel %vm747, %v742, %v744
      %v749 = vsel %vm747, %v744, %v746
      %752 = vst [vmem:[#allocation5 + $0x20] sm:$0xf0] %v748
      %753 = vst [vmem:[#allocation5 + $0x28] sm:$0xf0] %v749
      %v754 = vld [vmem:[#allocation2] sm:$0xff]
      %v755 = vld [vmem:[#allocation2 + $0x8] sm:$0xf]
      %v756 = vld [vmem:[%s1] ss:$2 sm:$0x3]
      %v758 = vlaneseq
      %v759 = vshrl.u32 %v758, 7
      %v760 = vsub.s32 0, %v759
      %v761 = vrot.slane %v756, %v760
      %v762 = vlaneseq
      %v763 = vshrl.u32 %v762, 7
      %v764 = vsub.s32 1, %v763
      %v765 = vrot.slane %v756, %v764
      %v766 = vcombine.low %v761, %v765
      %767 = vrot.lane.b32.xlu0 %v766, 32
      %v768 = vpop.permute.xlu0 %767
      %v769 = vrot.slane %v768, 4
      %vm770 = vcmask 261120
      %v771 = vsel %vm770, %v769, %v768
      %v774 = vmul.f32 %v754, %v771
      %v775 = vmul.f32 %v755, %v769
      %v778 = vcombine.high %v774, %v774
      %779 = vrot.lane.b32.xlu0 %v774, 96
      %v780 = vpop.permute.xlu0 %779
      %781 = vrot.lane.b32.xlu0 %v778, 96
      %v782 = vpop.permute.xlu0 %781
      %783 = vrot.lane.b32.xlu0 %v775, 96
      %v784 = vpop.permute.xlu0 %783
      %vm785 = vcmask 785408
      %v786 = vsel %vm785, %v780, %v782
      %v787 = vsel %vm785, %v782, %v784
      %790 = vst [vmem:[#allocation5 + $0x30] sm:$0xf] %v786
      %791 = vst [vmem:[#allocation5 + $0x38] sm:$0xf] %v787
      %v792 = vld [vmem:[#allocation2] sm:$0xff]
      %v793 = vld [vmem:[#allocation2 + $0x8] sm:$0xf]
      %v796 = vcombine.low %v792, %v792
      %v797 = vcombine.low %v793, %v793
      %798 = vrot.lane.b32.xlu0 %v796, 95
      %v799 = vpop.permute.xlu0 %798
      %800 = vrot.lane.b32.xlu0 %v792, 95
      %v801 = vpop.permute.xlu0 %800
      %802 = vrot.lane.b32.xlu0 %v797, 95
      %v803 = vpop.permute.xlu0 %802
      %vm804 = vcmask 777216
      %v805 = vsel %vm804, %v799, %v801
      %v806 = vsel %vm804, %v801, %v803
      %809 = vst [vmem:[#allocation5 + $0x30] sm:$0xf0] %v805
      %810 = vst [vmem:[#allocation5 + $0x38] sm:$0xf0] %v806
      %v811 = vld [vmem:[#allocation2] sm:$0xff]
      %v812 = vld [vmem:[#allocation2 + $0x8] sm:$0xf]
      %v813 = vld [vmem:[%s621] ss:$2 sm:$0x3]
      %v815 = vlaneseq
      %v816 = vshrl.u32 %v815, 7
      %v817 = vsub.s32 0, %v816
      %v818 = vrot.slane %v813, %v817
      %v819 = vlaneseq
      %v820 = vshrl.u32 %v819, 7
      %v821 = vsub.s32 1, %v820
      %v822 = vrot.slane %v813, %v821
      %v823 = vcombine.low %v818, %v822
      %824 = vrot.lane.b32.xlu0 %v823, 34
      %v825 = vpop.permute.xlu0 %824
      %v826 = vrot.slane %v825, 4
      %v827 = vsel %vm554, %v826, %v825
      %v830 = vmul.f32 %v811, %v827
      %v831 = vmul.f32 %v812, %v826
      %v834 = vcombine.high %v830, %v830
      %835 = vrot.lane.b32.xlu0 %v830, 94
      %v836 = vpop.permute.xlu0 %835
      %837 = vrot.lane.b32.xlu0 %v834, 94
      %v838 = vpop.permute.xlu0 %837
      %839 = vrot.lane.b32.xlu0 %v831, 94
      %v840 = vpop.permute.xlu0 %839
      %vm841 = vcmask 769024
      %v842 = vsel %vm841, %v836, %v838
      %v843 = vsel %vm841, %v838, %v840
      %846 = vst [vmem:[#allocation5 + $0x40] sm:$0xf] %v842
      %847 = vst [vmem:[#allocation5 + $0x48] sm:$0xf] %v843
      %v848 = vld [vmem:[%s2] sm:$0xff]
      %v849 = vld [vmem:[#allocation5] sm:$0xff]
      %v850 = vld [vmem:[#allocation5 + $0x8] sm:$0xff]
      %v851 = vld [vmem:[#allocation5 + $0x10] sm:$0xff]
      %v852 = vld [vmem:[#allocation5 + $0x18] sm:$0xff]
      %v853 = vld [vmem:[#allocation5 + $0x20] sm:$0xff]
      %v854 = vld [vmem:[#allocation5 + $0x28] sm:$0xff]
      %v855 = vld [vmem:[#allocation5 + $0x30] sm:$0xff]
      %v856 = vld [vmem:[#allocation5 + $0x38] sm:$0xff]
      %v857 = vld [vmem:[#allocation5 + $0x40] sm:$0xf]
      %v858 = vld [vmem:[#allocation5 + $0x48] sm:$0xf]
      %v859 = vld [vmem:[%s3] sm:$0xff]
      %861 = vset.pattern.permute.xlu0 0
      %862 = vperm.xlu0 %861, %v859
      %v863 = vpop.permute.xlu0 %862
      %vm865 = vcmask 293888
      %v867 = vsel %vm865, %v848, 0
      %vm869 = vcmask 1043456
      %v871 = vsel %vm869, %v857, 0
      %v874 = vsel %vm869, %v858, 0
      %876 = vmatprep.subr.mxu0 %v850
      %877 = vmatpush1.msra.mxu0 %v849
      %878 = vmatprep.subr.mxu0 %v852
      %879 = vmatpush1.msra.mxu0 %v851
      %880 = vmatprep.subr.mxu0 %v854
      %881 = vmatpush1.msra.mxu0 %v853
      %882 = vmatprep.subr.mxu0 %v856
      %883 = vmatpush1.msra.mxu0 %v855
      %884 = vmatprep.subr.mxu0 %v874
      %885 = vmatpush1.msra.mxu0 %v871
      %886 = vmatprep.subr.mxu0 0.0
      %887 = vmatpush1.msra.mxu0 0.0
      %888 = vmatprep.subr.mxu0 0.0
      %889 = vmatpush1.msra.mxu0 0.0
      %890 = vmatprep.subr.mxu0 0.0
      %891 = vmatpush1.msra.mxu0 0.0
      %892 = vmatprep.subr.mxu0 0.0
      %893 = vmatpush1.msra.mxu0 0.0
      %894 = vmatprep.subr.mxu0 0.0
      %895 = vmatpush1.msra.mxu0 0.0
      %896 = vmatprep.subr.mxu0 0.0
      %897 = vmatpush1.msra.mxu0 0.0
      %898 = vmatprep.subr.mxu0 0.0
      %899 = vmatpush1.msra.mxu0 0.0
      %900 = vmatprep.subr.mxu0 0.0
      %901 = vmatpush1.msra.mxu0 0.0
      %902 = vmatprep.subr.mxu0 0.0
      %903 = vmatpush1.msra.mxu0 0.0
      %904 = vmatprep.subr.mxu0 0.0
      %905 = vmatpush1.msra.mxu0 0.0
      %906 = vmatprep.subr.mxu0 0.0
      %907 = vmatpush1.msra.mxu0 0.0
      %908 = vmatprep.subr.mxu0 0.0
      %909 = vmatpush1.msra.mxu0 0.0
      %910 = vmatprep.subr.mxu0 0.0
      %911 = vmatpush1.msra.mxu0 0.0
      %912 = vmatprep.subr.mxu0 0.0
      %913 = vmatpush1.msra.mxu0 0.0
      %914 = vmatprep.subr.mxu0 0.0
      %915 = vmatpush1.msra.mxu0 0.0
      %916 = vmatprep.subr.mxu0 0.0
      %917 = vmatpush1.msra.mxu0 0.0
      %918 = vmatprep.subr.mxu0 0.0
      %919 = vmatpush1.msra.mxu0 0.0
      %920 = vmatprep.subr.mxu0 0.0
      %921 = vmatpush1.msra.mxu0 0.0
      %922 = vmatprep.subr.mxu0 0.0
      %923 = vmatpush1.msra.mxu0 0.0
      %924 = vmatprep.subr.mxu0 0.0
      %925 = vmatpush1.msra.mxu0 0.0
      %926 = vmatprep.subr.mxu0 0.0
      %927 = vmatpush1.msra.mxu0 0.0
      %928 = vmatprep.subr.mxu0 0.0
      %929 = vmatpush1.msra.mxu0 0.0
      %930 = vmatprep.subr.mxu0 0.0
      %931 = vmatpush1.msra.mxu0 0.0
      %932 = vmatprep.subr.mxu0 0.0
      %933 = vmatpush1.msra.mxu0 0.0
      %934 = vmatprep.subr.mxu0 0.0
      %935 = vmatpush1.msra.mxu0 0.0
      %936 = vmatprep.subr.mxu0 0.0
      %937 = vmatpush1.msra.mxu0 0.0
      %938 = vmatprep.subr.mxu0 0.0
      %939 = vmatpush1.msra.mxu0 0.0
      %940 = vmatprep.mubr.f32.mxu0 0.0
      %941 = vmatmul.mubr.f32.gmra.mrb[0].mxu0 %v867
      %v942 = vpop.f32.mrb[0].mxu0
      %v943 = vadd.f32 %v863, %v942
      %v944 = vpop.f32.mrb[0].mxu0
      %v945 = vadd.f32 %v863, %v944
      %946 = vdwg.mxu0
      %v947 = vmax.f32 %v943, 0.0
      %v948 = vmax.f32 %v945, 0.0
      %951 = vrot.lane.b32.xlu0 %v947, 17
      %v952 = vpop.permute.xlu0 %951
      %953 = vrot.lane.b32.xlu0 %v948, 17
      %v954 = vpop.permute.xlu0 %953
      %v955 = vsel %vm571, %v952, %v954
      %vm959 = vcmask 1047688
      %960 = vst.msk [vmem:[#allocation3] sm:$0xff] %vm959, %v952
      %961 = vst [vmem:[#allocation3 + $0x8] sm:$0xff] %v955
      %962 = vst.msk [vmem:[#allocation3 + $0x10] sm:$0xff] %vm571, %v954
      %v963 = vld [vmem:[#allocation3] sm:$0xff]
      %v964 = vld [vmem:[#allocation3 + $0x8] sm:$0xff]
      %v965 = vld [vmem:[%s1] ss:$2 sm:$0x3]
      %v967 = vlaneseq
      %v968 = vshrl.u32 %v967, 7
      %v969 = vsub.s32 0, %v968
      %v970 = vrot.slane %v965, %v969
      %v971 = vlaneseq
      %v972 = vshrl.u32 %v971, 7
      %v973 = vsub.s32 1, %v972
      %v974 = vrot.slane %v965, %v973
      %v977 = vmul.f32 %v963, %v970
      %v978 = vmul.f32 %v964, %v974
      %979 = vst [vmem:[#allocation6] sm:$0xff] %v977
      %980 = vst [vmem:[#allocation6 + $0x8] sm:$0xff] %v978
      %v981 = vld [vmem:[#allocation3] sm:$0xff]
      %v982 = vld [vmem:[#allocation3 + $0x8] sm:$0xff]
      %v983 = vld [vmem:[#allocation3 + $0x10] sm:$0xff]
      %987 = vrot.lane.b32.xlu0 %v981, 127
      %v988 = vpop.permute.xlu0 %987
      %989 = vrot.lane.b32.xlu0 %v982, 127
      %v990 = vpop.permute.xlu0 %989
      %991 = vrot.lane.b32.xlu0 %v983, 127
      %v992 = vpop.permute.xlu0 %991
      %v993 = vsel %vm612, %v988, %v990
      %v994 = vsel %vm612, %v990, %v992
      %997 = vst [vmem:[#allocation6 + $0x10] sm:$0xff] %v993
      %998 = vst [vmem:[#allocation6 + $0x18] sm:$0xff] %v994
      %v999 = vld [vmem:[#allocation3] sm:$0xff]
      %v1000 = vld [vmem:[#allocation3 + $0x8] sm:$0xff]
      %v1001 = vld [vmem:[#allocation3 + $0x10] sm:$0xff]
      %v1002 = vld [vmem:[%s621] ss:$2 sm:$0x3]
      %v1004 = vlaneseq
      %v1005 = vshrl.u32 %v1004, 7
      %v1006 = vsub.s32 0, %v1005
      %v1007 = vrot.slane %v1002, %v1006
      %v1008 = vlaneseq
      %v1009 = vshrl.u32 %v1008, 7
      %v1010 = vsub.s32 1, %v1009
      %v1011 = vrot.slane %v1002, %v1010
      %1012 = vrot.lane.b32.xlu0 %v1007, 2
      %v1013 = vpop.permute.xlu0 %1012
      %1014 = vrot.lane.b32.xlu0 %v1011, 2
      %v1015 = vpop.permute.xlu0 %1014
      %v1016 = vsel %vm636, %v1013, %v1015
      %v1020 = vmul.f32 %v999, %v1013
      %v1021 = vmul.f32 %v1000, %v1016
      %v1022 = vmul.f32 %v1001, %v1015
      %1026 = vrot.lane.b32.xlu0 %v1020, 126
      %v1027 = vpop.permute.xlu0 %1026
      %1028 = vrot.lane.b32.xlu0 %v1021, 126
      %v1029 = vpop.permute.xlu0 %1028
      %1030 = vrot.lane.b32.xlu0 %v1022, 126
      %v1031 = vpop.permute.xlu0 %1030
      %v1032 = vsel %vm651, %v1027, %v1029
      %v1033 = vsel %vm651, %v1029, %v1031
      %1036 = vst [vmem:[#allocation6 + $0x20] sm:$0xff] %v1032
      %1037 = vst [vmem:[#allocation6 + $0x28] sm:$0xff] %v1033
      %v1038 = vld [vmem:[#allocation3] sm:$0xff]
      %v1039 = vld [vmem:[#allocation3 + $0x8] sm:$0xff]
      %v1040 = vld [vmem:[#allocation3 + $0x10] sm:$0xff]
      %v1041 = vld [vmem:[%s1] ss:$2 sm:$0x3]
      %v1043 = vlaneseq
      %v1044 = vshrl.u32 %v1043, 7
      %v1045 = vsub.s32 0, %v1044
      %v1046 = vrot.slane %v1041, %v1045
      %v1047 = vlaneseq
      %v1048 = vshrl.u32 %v1047, 7
      %v1049 = vsub.s32 1, %v1048
      %v1050 = vrot.slane %v1041, %v1049
      %1051 = vrot.lane.b32.xlu0 %v1046, 16
      %v1052 = vpop.permute.xlu0 %1051
      %1053 = vrot.lane.b32.xlu0 %v1050, 16
      %v1054 = vpop.permute.xlu0 %1053
      %v1055 = vsel %vm674, %v1052, %v1054
      %v1059 = vmul.f32 %v1038, %v1052
      %v1060 = vmul.f32 %v1039, %v1055
      %v1061 = vmul.f32 %v1040, %v1054
      %1065 = vrot.lane.b32.xlu0 %v1059, 112
      %v1066 = vpop.permute.xlu0 %1065
      %1067 = vrot.lane.b32.xlu0 %v1060, 112
      %v1068 = vpop.permute.xlu0 %1067
      %1069 = vrot.lane.b32.xlu0 %v1061, 112
      %v1070 = vpop.permute.xlu0 %1069
      %v1071 = vsel %vm690, %v1066, %v1068
      %v1072 = vsel %vm690, %v1068, %v1070
      %1075 = vst [vmem:[#allocation6 + $0x30] sm:$0xff] %v1071
      %1076 = vst [vmem:[#allocation6 + $0x38] sm:$0xff] %v1072
      %v1077 = vld [vmem:[#allocation3] sm:$0xff]
      %v1078 = vld [vmem:[#allocation3 + $0x8] sm:$0xff]
      %v1079 = vld [vmem:[#allocation3 + $0x10] sm:$0xff]
      %1083 = vrot.lane.b32.xlu0 %v1077, 111
      %v1084 = vpop.permute.xlu0 %1083
      %1085 = vrot.lane.b32.xlu0 %v1078, 111
      %v1086 = vpop.permute.xlu0 %1085
      %1087 = vrot.lane.b32.xlu0 %v1079, 111
      %v1088 = vpop.permute.xlu0 %1087
      %v1089 = vsel %vm708, %v1084, %v1086
      %v1090 = vsel %vm708, %v1086, %v1088
      %1093 = vst [vmem:[#allocation6 + $0x40] sm:$0xff] %v1089
      %1094 = vst [vmem:[#allocation6 + $0x48] sm:$0xff] %v1090
      %v1095 = vld [vmem:[#allocation3] sm:$0xff]
      %v1096 = vld [vmem:[#allocation3 + $0x8] sm:$0xff]
      %v1097 = vld [vmem:[#allocation3 + $0x10] sm:$0xff]
      %v1098 = vld [vmem:[%s621] ss:$2 sm:$0x3]
      %v1100 = vlaneseq
      %v1101 = vshrl.u32 %v1100, 7
      %v1102 = vsub.s32 0, %v1101
      %v1103 = vrot.slane %v1098, %v1102
      %v1104 = vlaneseq
      %v1105 = vshrl.u32 %v1104, 7
      %v1106 = vsub.s32 1, %v1105
      %v1107 = vrot.slane %v1098, %v1106
      %1108 = vrot.lane.b32.xlu0 %v1103, 18
      %v1109 = vpop.permute.xlu0 %1108
      %1110 = vrot.lane.b32.xlu0 %v1107, 18
      %v1111 = vpop.permute.xlu0 %1110
      %v1112 = vsel %vm731, %v1109, %v1111
      %v1116 = vmul.f32 %v1095, %v1109
      %v1117 = vmul.f32 %v1096, %v1112
      %v1118 = vmul.f32 %v1097, %v1111
      %1122 = vrot.lane.b32.xlu0 %v1116, 110
      %v1123 = vpop.permute.xlu0 %1122
      %1124 = vrot.lane.b32.xlu0 %v1117, 110
      %v1125 = vpop.permute.xlu0 %1124
      %1126 = vrot.lane.b32.xlu0 %v1118, 110
      %v1127 = vpop.permute.xlu0 %1126
      %v1128 = vsel %vm747, %v1123, %v1125
      %v1129 = vsel %vm747, %v1125, %v1127
      %1132 = vst [vmem:[#allocation6 + $0x50] sm:$0xff] %v1128
      %1133 = vst [vmem:[#allocation6 + $0x58] sm:$0xff] %v1129
      %v1134 = vld [vmem:[#allocation3] sm:$0xff]
      %v1135 = vld [vmem:[#allocation3 + $0x8] sm:$0xff]
      %v1136 = vld [vmem:[#allocation3 + $0x10] sm:$0xff]
      %v1137 = vld [vmem:[%s1] ss:$2 sm:$0x3]
      %v1139 = vlaneseq
      %v1140 = vshrl.u32 %v1139, 7
      %v1141 = vsub.s32 0, %v1140
      %v1142 = vrot.slane %v1137, %v1141
      %v1143 = vlaneseq
      %v1144 = vshrl.u32 %v1143, 7
      %v1145 = vsub.s32 1, %v1144
      %v1146 = vrot.slane %v1137, %v1145
      %1147 = vrot.lane.b32.xlu0 %v1142, 32
      %v1148 = vpop.permute.xlu0 %1147
      %1149 = vrot.lane.b32.xlu0 %v1146, 32
      %v1150 = vpop.permute.xlu0 %1149
      %v1151 = vsel %vm770, %v1148, %v1150
      %v1155 = vmul.f32 %v1134, %v1148
      %v1156 = vmul.f32 %v1135, %v1151
      %v1157 = vmul.f32 %v1136, %v1150
      %1161 = vrot.lane.b32.xlu0 %v1155, 96
      %v1162 = vpop.permute.xlu0 %1161
      %1163 = vrot.lane.b32.xlu0 %v1156, 96
      %v1164 = vpop.permute.xlu0 %1163
      %1165 = vrot.lane.b32.xlu0 %v1157, 96
      %v1166 = vpop.permute.xlu0 %1165
      %v1167 = vsel %vm785, %v1162, %v1164
      %v1168 = vsel %vm785, %v1164, %v1166
      %1171 = vst [vmem:[#allocation6 + $0x60] sm:$0xff] %v1167
      %1172 = vst [vmem:[#allocation6 + $0x68] sm:$0xff] %v1168
      %v1173 = vld [vmem:[#allocation3] sm:$0xff]
      %v1174 = vld [vmem:[#allocation3 + $0x8] sm:$0xff]
      %v1175 = vld [vmem:[#allocation3 + $0x10] sm:$0xff]
      %1179 = vrot.lane.b32.xlu0 %v1173, 95
      %v1180 = vpop.permute.xlu0 %1179
      %1181 = vrot.lane.b32.xlu0 %v1174, 95
      %v1182 = vpop.permute.xlu0 %1181
      %1183 = vrot.lane.b32.xlu0 %v1175, 95
      %v1184 = vpop.permute.xlu0 %1183
      %v1185 = vsel %vm804, %v1180, %v1182
      %v1186 = vsel %vm804, %v1182, %v1184
      %1189 = vst [vmem:[#allocation6 + $0x70] sm:$0xff] %v1185
      %1190 = vst [vmem:[#allocation6 + $0x78] sm:$0xff] %v1186
      %v1191 = vld [vmem:[#allocation3] sm:$0xff]
      %v1192 = vld [vmem:[#allocation3 + $0x8] sm:$0xff]
      %v1193 = vld [vmem:[#allocation3 + $0x10] sm:$0xff]
      %v1194 = vld [vmem:[%s621] ss:$2 sm:$0x3]
      %v1196 = vlaneseq
      %v1197 = vshrl.u32 %v1196, 7
      %v1198 = vsub.s32 0, %v1197
      %v1199 = vrot.slane %v1194, %v1198
      %v1200 = vlaneseq
      %v1201 = vshrl.u32 %v1200, 7
      %v1202 = vsub.s32 1, %v1201
      %v1203 = vrot.slane %v1194, %v1202
      %1204 = vrot.lane.b32.xlu0 %v1199, 34
      %v1205 = vpop.permute.xlu0 %1204
      %1206 = vrot.lane.b32.xlu0 %v1203, 34
      %v1207 = vpop.permute.xlu0 %1206
      %v1208 = vsel %vm554, %v1205, %v1207
      %v1212 = vmul.f32 %v1191, %v1205
      %v1213 = vmul.f32 %v1192, %v1208
      %v1214 = vmul.f32 %v1193, %v1207
      %1218 = vrot.lane.b32.xlu0 %v1212, 94
      %v1219 = vpop.permute.xlu0 %1218
      %1220 = vrot.lane.b32.xlu0 %v1213, 94
      %v1221 = vpop.permute.xlu0 %1220
      %1222 = vrot.lane.b32.xlu0 %v1214, 94
      %v1223 = vpop.permute.xlu0 %1222
      %v1224 = vsel %vm841, %v1219, %v1221
      %v1225 = vsel %vm841, %v1221, %v1223
      %1228 = vst [vmem:[#allocation6 + $0x80] sm:$0xff] %v1224
      %1229 = vst [vmem:[#allocation6 + $0x88] sm:$0xff] %v1225
      %v1230 = vld [vmem:[%s4] sm:$0xff]
      %v1231 = vld [vmem:[%s4 + $0x8] sm:$0xff]
      %v1232 = vld [vmem:[%s4 + $0x10] sm:$0x1]
      %v1233 = vld [vmem:[#allocation6] sm:$0xff]
      %v1234 = vld [vmem:[#allocation6 + $0x8] sm:$0xff]
      %v1235 = vld [vmem:[#allocation6 + $0x10] sm:$0xff]
      %v1236 = vld [vmem:[#allocation6 + $0x18] sm:$0xff]
      %v1237 = vld [vmem:[#allocation6 + $0x20] sm:$0xff]
      %v1238 = vld [vmem:[#allocation6 + $0x28] sm:$0xff]
      %v1239 = vld [vmem:[#allocation6 + $0x30] sm:$0xff]
      %v1240 = vld [vmem:[#allocation6 + $0x38] sm:$0xff]
      %v1241 = vld [vmem:[#allocation6 + $0x40] sm:$0xff]
      %v1242 = vld [vmem:[#allocation6 + $0x48] sm:$0xff]
      %v1243 = vld [vmem:[#allocation6 + $0x50] sm:$0xff]
      %v1244 = vld [vmem:[#allocation6 + $0x58] sm:$0xff]
      %v1245 = vld [vmem:[#allocation6 + $0x60] sm:$0xff]
      %v1246 = vld [vmem:[#allocation6 + $0x68] sm:$0xff]
      %v1247 = vld [vmem:[#allocation6 + $0x70] sm:$0xff]
      %v1248 = vld [vmem:[#allocation6 + $0x78] sm:$0xff]
      %v1249 = vld [vmem:[#allocation6 + $0x80] sm:$0xff]
      %v1250 = vld [vmem:[#allocation6 + $0x88] sm:$0xff]
      %v1251 = vld [vmem:[%s5] sm:$0xff]
      %v1252 = vld [vmem:[%s5 + $0x8] sm:$0xff]
      %v1253 = vld [vmem:[%s5 + $0x10] sm:$0x1]
      %1255 = vset.pattern.permute.xlu0 0
      %1256 = vperm.xlu0 %1255, %v1251
      %v1257 = vpop.permute.xlu0 %1256
      %1260 = vset.pattern.permute.xlu0 0
      %1261 = vperm.xlu0 %1260, %v1252
      %v1262 = vpop.permute.xlu0 %1261
      %1265 = vset.pattern.permute.xlu0 0
      %1266 = vperm.xlu0 %1265, %v1253
      %v1267 = vpop.permute.xlu0 %1266
      %vm1269 = vcmask 588800
      %v1271 = vsel %vm1269, %v1230, 0
      %v1274 = vsel %vm1269, %v1231, 0
      %v1277 = vsel %vm1269, %v1232, 0
      %1279 = vmatprep.subr.mxu0 %v1234
      %1280 = vmatpush1.msra.mxu0 %v1233
      %1281 = vmatprep.subr.mxu0 %v1236
      %1282 = vmatpush1.msra.mxu0 %v1235
      %1283 = vmatprep.subr.mxu0 %v1238
      %1284 = vmatpush1.msra.mxu0 %v1237
      %1285 = vmatprep.subr.mxu0 %v1240
      %1286 = vmatpush1.msra.mxu0 %v1239
      %1287 = vmatprep.subr.mxu0 %v1242
      %1288 = vmatpush1.msra.mxu0 %v1241
      %1289 = vmatprep.subr.mxu0 %v1244
      %1290 = vmatpush1.msra.mxu0 %v1243
      %1291 = vmatprep.subr.mxu0 %v1246
      %1292 = vmatpush1.msra.mxu0 %v1245
      %1293 = vmatprep.subr.mxu0 %v1248
      %1294 = vmatpush1.msra.mxu0 %v1247
      %1295 = vmatprep.subr.mxu0 %v1250
      %1296 = vmatpush1.msra.mxu0 %v1249
      %1297 = vmatprep.subr.mxu0 0.0
      %1298 = vmatpush1.msra.mxu0 0.0
      %1299 = vmatprep.subr.mxu0 0.0
      %1300 = vmatpush1.msra.mxu0 0.0
      %1301 = vmatprep.subr.mxu0 0.0
      %1302 = vmatpush1.msra.mxu0 0.0
      %1303 = vmatprep.subr.mxu0 0.0
      %1304 = vmatpush1.msra.mxu0 0.0
      %1305 = vmatprep.subr.mxu0 0.0
      %1306 = vmatpush1.msra.mxu0 0.0
      %1307 = vmatprep.subr.mxu0 0.0
      %1308 = vmatpush1.msra.mxu0 0.0
      %1309 = vmatprep.subr.mxu0 0.0
      %1310 = vmatpush1.msra.mxu0 0.0
      %1311 = vmatprep.subr.mxu0 0.0
      %1312 = vmatpush1.msra.mxu0 0.0
      %1313 = vmatprep.subr.mxu0 0.0
      %1314 = vmatpush1.msra.mxu0 0.0
      %1315 = vmatprep.subr.mxu0 0.0
      %1316 = vmatpush1.msra.mxu0 0.0
      %1317 = vmatprep.subr.mxu0 0.0
      %1318 = vmatpush1.msra.mxu0 0.0
      %1319 = vmatprep.subr.mxu0 0.0
      %1320 = vmatpush1.msra.mxu0 0.0
      %1321 = vmatprep.subr.mxu0 0.0
      %1322 = vmatpush1.msra.mxu0 0.0
      %1323 = vmatprep.subr.mxu0 0.0
      %1324 = vmatpush1.msra.mxu0 0.0
      %1325 = vmatprep.subr.mxu0 0.0
      %1326 = vmatpush1.msra.mxu0 0.0
      %1327 = vmatprep.subr.mxu0 0.0
      %1328 = vmatpush1.msra.mxu0 0.0
      %1329 = vmatprep.subr.mxu0 0.0
      %1330 = vmatpush1.msra.mxu0 0.0
      %1331 = vmatprep.subr.mxu0 0.0
      %1332 = vmatpush1.msra.mxu0 0.0
      %1333 = vmatprep.subr.mxu0 0.0
      %1334 = vmatpush1.msra.mxu0 0.0
      %1335 = vmatprep.subr.mxu0 0.0
      %1336 = vmatpush1.msra.mxu0 0.0
      %1337 = vmatprep.subr.mxu0 0.0
      %1338 = vmatpush1.msra.mxu0 0.0
      %1339 = vmatprep.subr.mxu0 0.0
      %1340 = vmatpush1.msra.mxu0 0.0
      %1341 = vmatprep.subr.mxu0 0.0
      %1342 = vmatpush1.msra.mxu0 0.0
      %1343 = vmatprep.mubr.f32.mxu0 0.0
      %1344 = vmatmul.mubr.f32.gmra.mrb[0].mxu0 %v1271
      %v1345 = vpop.f32.mrb[0].mxu0
      %v1346 = vadd.f32 %v1257, %v1345
      %v1347 = vpop.f32.mrb[0].mxu0
      %v1348 = vadd.f32 %v1257, %v1347
      %1349 = vmatprep.mubr.f32.mxu0 0.0
      %1350 = vmatmul.mubr.f32.gmra.mrb[0].mxu0 %v1274
      %v1351 = vpop.f32.mrb[0].mxu0
      %v1352 = vadd.f32 %v1262, %v1351
      %v1353 = vpop.f32.mrb[0].mxu0
      %v1354 = vadd.f32 %v1262, %v1353
      %1355 = vmatprep.mubr.f32.mxu0 0.0
      %1356 = vmatmul.mubr.f32.gmra.mrb[0].mxu0 %v1277
      %v1357 = vpop.f32.mrb[0].mxu0
      %v1358 = vadd.f32 %v1267, %v1357
      %v1359 = vpop.f32.mrb[0].mxu0
      %v1360 = vadd.f32 %v1267, %v1359
      %1361 = vdwg.mxu0
      %v1362 = vmax.f32 %v1346, 0.0
      %v1363 = vmax.f32 %v1348, 0.0
      %v1364 = vmax.f32 %v1352, 0.0
      %v1365 = vmax.f32 %v1354, 0.0
      %v1366 = vmax.f32 %v1358, 0.0
      %v1367 = vmax.f32 %v1360, 0.0
      %1374 = vrot.lane.b32.xlu0 %v1362, 17
      %v1375 = vpop.permute.xlu0 %1374
      %1376 = vrot.lane.b32.xlu0 %v1363, 17
      %v1377 = vpop.permute.xlu0 %1376
      %1378 = vrot.lane.b32.xlu0 %v1364, 17
      %v1379 = vpop.permute.xlu0 %1378
      %1380 = vrot.lane.b32.xlu0 %v1365, 17
      %v1381 = vpop.permute.xlu0 %1380
      %1382 = vrot.lane.b32.xlu0 %v1366, 17
      %v1383 = vpop.permute.xlu0 %1382
      %1384 = vrot.lane.b32.xlu0 %v1367, 17
      %v1385 = vpop.permute.xlu0 %1384
      %v1386 = vsel %vm571, %v1375, %v1377
      %v1387 = vsel %vm571, %v1379, %v1381
      %v1388 = vsel %vm571, %v1383, %v1385
      %1398 = vst.msk [vmem:[#allocation4] sm:$0xff] %vm959, %v1375
      %1399 = vst [vmem:[#allocation4 + $0x8] sm:$0xff] %v1386
      %1400 = vst.msk [vmem:[#allocation4 + $0x10] sm:$0xff] %vm571, %v1377
      %1401 = vst.msk [vmem:[#allocation4 + $0x18] sm:$0xff] %vm959, %v1379
      %1402 = vst [vmem:[#allocation4 + $0x20] sm:$0xff] %v1387
      %1403 = vst.msk [vmem:[#allocation4 + $0x28] sm:$0xff] %vm571, %v1381
      %vm1404 = vcmask 1040520
      %1405 = vst.msk [vmem:[#allocation4 + $0x30] sm:$0x1] %vm1404, %v1383
      %1406 = vst [vmem:[#allocation4 + $0x38] sm:$0x1] %v1388
      %vm1407 = vcmask 131072
      %1408 = vst.msk [vmem:[#allocation4 + $0x40] sm:$0x1] %vm1407, %v1385
      %v1409 = vld [vmem:[#allocation4] sm:$0xff]
      %v1410 = vld [vmem:[#allocation4 + $0x8] sm:$0xff]
      %v1411 = vld [vmem:[#allocation4 + $0x18] sm:$0xff]
      %v1412 = vld [vmem:[#allocation4 + $0x20] sm:$0xff]
      %v1413 = vld [vmem:[#allocation4 + $0x30] sm:$0x1]
      %v1414 = vld [vmem:[#allocation4 + $0x38] sm:$0x1]
      %v1415 = vld [vmem:[%s1] ss:$2 sm:$0x3]
      %v1417 = vlaneseq
      %v1418 = vshrl.u32 %v1417, 7
      %v1419 = vsub.s32 0, %v1418
      %v1420 = vrot.slane %v1415, %v1419
      %v1421 = vlaneseq
      %v1422 = vshrl.u32 %v1421, 7
      %v1423 = vsub.s32 1, %v1422
      %v1424 = vrot.slane %v1415, %v1423
      %v1427 = vmul.f32 %v1409, %v1420
      %v1428 = vmul.f32 %v1410, %v1424
      %v1429 = vmul.f32 %v1411, %v1420
      %v1430 = vmul.f32 %v1412, %v1424
      %v1431 = vmul.f32 %v1413, %v1420
      %v1432 = vmul.f32 %v1414, %v1424
      %1433 = vst [vmem:[#allocation7] sm:$0xff] %v1427
      %1434 = vst [vmem:[#allocation7 + $0x8] sm:$0xff] %v1428
      %1435 = vst [vmem:[#allocation7 + $0x10] sm:$0xff] %v1429
      %1436 = vst [vmem:[#allocation7 + $0x18] sm:$0xff] %v1430
      %1437 = vst [vmem:[#allocation7 + $0x20] sm:$0x1] %v1431
      %1438 = vst [vmem:[#allocation7 + $0x28] sm:$0x1] %v1432
      %v1439 = vld [vmem:[#allocation4] sm:$0xff]
      %v1440 = vld [vmem:[#allocation4 + $0x8] sm:$0xff]
      %v1441 = vld [vmem:[#allocation4 + $0x10] sm:$0xff]
      %v1442 = vld [vmem:[#allocation4 + $0x18] sm:$0xff]
      %v1443 = vld [vmem:[#allocation4 + $0x20] sm:$0xff]
      %v1444 = vld [vmem:[#allocation4 + $0x28] sm:$0xff]
      %v1445 = vld [vmem:[#allocation4 + $0x30] sm:$0x1]
      %v1446 = vld [vmem:[#allocation4 + $0x38] sm:$0x1]
      %v1447 = vld [vmem:[#allocation4 + $0x40] sm:$0x1]
      %vm1457 = vcmask 1040384
      %v1458 = vrot.slane %v1439, 7
      %v1459 = vrot.slane %v1440, 7
      %v1460 = vrot.slane %v1441, 7
      %v1461 = vrot.slane %v1442, 7
      %v1462 = vsel %vm1457, %v1458, %v1461
      %v1463 = vrot.slane %v1443, 7
      %v1464 = vsel %vm1457, %v1459, %v1463
      %v1465 = vrot.slane %v1444, 7
      %v1466 = vsel %vm1457, %v1460, %v1465
      %v1467 = vrot.slane %v1445, 7
      %v1468 = vsel %vm1457, %v1461, %v1467
      %v1469 = vrot.slane %v1446, 7
      %v1470 = vsel %vm1457, %v1463, %v1469
      %v1471 = vrot.slane %v1447, 7
      %v1472 = vsel %vm1457, %v1465, %v1471
      %1473 = vrot.lane.b32.xlu0 %v1458, 127
      %v1474 = vpop.permute.xlu0 %1473
      %1475 = vrot.lane.b32.xlu0 %v1459, 127
      %v1476 = vpop.permute.xlu0 %1475
      %1477 = vrot.lane.b32.xlu0 %v1460, 127
      %v1478 = vpop.permute.xlu0 %1477
      %1479 = vrot.lane.b32.xlu0 %v1462, 127
      %v1480 = vpop.permute.xlu0 %1479
      %1481 = vrot.lane.b32.xlu0 %v1464, 127
      %v1482 = vpop.permute.xlu0 %1481
      %1483 = vrot.lane.b32.xlu0 %v1466, 127
      %v1484 = vpop.permute.xlu0 %1483
      %1485 = vrot.lane.b32.xlu0 %v1468, 127
      %v1486 = vpop.permute.xlu0 %1485
      %1487 = vrot.lane.b32.xlu0 %v1470, 127
      %v1488 = vpop.permute.xlu0 %1487
      %1489 = vrot.lane.b32.xlu0 %v1472, 127
      %v1490 = vpop.permute.xlu0 %1489
      %v1491 = vsel %vm612, %v1474, %v1476
      %v1492 = vsel %vm612, %v1476, %v1478
      %v1493 = vsel %vm612, %v1480, %v1482
      %v1494 = vsel %vm612, %v1482, %v1484
      %v1495 = vsel %vm612, %v1486, %v1488
      %v1496 = vsel %vm612, %v1488, %v1490
      %1503 = vst [vmem:[#allocation7 + $0x20] sm:$0xfe] %v1491
      %1504 = vst [vmem:[#allocation7 + $0x28] sm:$0xfe] %v1492
      %1505 = vst [vmem:[#allocation7 + $0x30] sm:$0xff] %v1493
      %1506 = vst [vmem:[#allocation7 + $0x38] sm:$0xff] %v1494
      %1507 = vst [vmem:[#allocation7 + $0x40] sm:$0x3] %v1495
      %1508 = vst [vmem:[#allocation7 + $0x48] sm:$0x3] %v1496
      %v1509 = vld [vmem:[#allocation4] sm:$0xff]
      %v1510 = vld [vmem:[#allocation4 + $0x8] sm:$0xff]
      %v1511 = vld [vmem:[#allocation4 + $0x10] sm:$0xff]
      %v1512 = vld [vmem:[#allocation4 + $0x18] sm:$0xff]
      %v1513 = vld [vmem:[#allocation4 + $0x20] sm:$0xff]
      %v1514 = vld [vmem:[#allocation4 + $0x28] sm:$0xff]
      %v1515 = vld [vmem:[#allocation4 + $0x30] sm:$0x1]
      %v1516 = vld [vmem:[#allocation4 + $0x38] sm:$0x1]
      %v1517 = vld [vmem:[#allocation4 + $0x40] sm:$0x1]
      %v1518 = vld [vmem:[%s621] ss:$2 sm:$0x3]
      %v1520 = vlaneseq
      %v1521 = vshrl.u32 %v1520, 7
      %v1522 = vsub.s32 0, %v1521
      %v1523 = vrot.slane %v1518, %v1522
      %v1524 = vlaneseq
      %v1525 = vshrl.u32 %v1524, 7
      %v1526 = vsub.s32 1, %v1525
      %v1527 = vrot.slane %v1518, %v1526
      %1528 = vrot.lane.b32.xlu0 %v1523, 2
      %v1529 = vpop.permute.xlu0 %1528
      %1530 = vrot.lane.b32.xlu0 %v1527, 2
      %v1531 = vpop.permute.xlu0 %1530
      %v1532 = vsel %vm636, %v1529, %v1531
      %v1536 = vmul.f32 %v1509, %v1529
      %v1537 = vmul.f32 %v1510, %v1532
      %v1538 = vmul.f32 %v1511, %v1531
      %v1539 = vmul.f32 %v1512, %v1529
      %v1540 = vmul.f32 %v1513, %v1532
      %v1541 = vmul.f32 %v1514, %v1531
      %v1542 = vmul.f32 %v1515, %v1529
      %v1543 = vmul.f32 %v1516, %v1532
      %v1544 = vmul.f32 %v1517, %v1531
      %vm1554 = vcmask 1041408
      %v1555 = vrot.slane %v1536, 6
      %v1556 = vrot.slane %v1537, 6
      %v1557 = vrot.slane %v1538, 6
      %v1558 = vrot.slane %v1539, 6
      %v1559 = vsel %vm1554, %v1555, %v1558
      %v1560 = vrot.slane %v1540, 6
      %v1561 = vsel %vm1554, %v1556, %v1560
      %v1562 = vrot.slane %v1541, 6
      %v1563 = vsel %vm1554, %v1557, %v1562
      %v1564 = vrot.slane %v1542, 6
      %v1565 = vsel %vm1554, %v1558, %v1564
      %v1566 = vrot.slane %v1543, 6
      %v1567 = vsel %vm1554, %v1560, %v1566
      %v1568 = vrot.slane %v1544, 6
      %v1569 = vsel %vm1554, %v1562, %v1568
      %1570 = vrot.lane.b32.xlu0 %v1555, 126
      %v1571 = vpop.permute.xlu0 %1570
      %1572 = vrot.lane.b32.xlu0 %v1556, 126
      %v1573 = vpop.permute.xlu0 %1572
      %1574 = vrot.lane.b32.xlu0 %v1557, 126
      %v1575 = vpop.permute.xlu0 %1574
      %1576 = vrot.lane.b32.xlu0 %v1559, 126
      %v1577 = vpop.permute.xlu0 %1576
      %1578 = vrot.lane.b32.xlu0 %v1561, 126
      %v1579 = vpop.permute.xlu0 %1578
      %1580 = vrot.lane.b32.xlu0 %v1563, 126
      %v1581 = vpop.permute.xlu0 %1580
      %1582 = vrot.lane.b32.xlu0 %v1565, 126
      %v1583 = vpop.permute.xlu0 %1582
      %1584 = vrot.lane.b32.xlu0 %v1567, 126
      %v1585 = vpop.permute.xlu0 %1584
      %1586 = vrot.lane.b32.xlu0 %v1569, 126
      %v1587 = vpop.permute.xlu0 %1586
      %v1588 = vsel %vm651, %v1571, %v1573
      %v1589 = vsel %vm651, %v1573, %v1575
      %v1590 = vsel %vm651, %v1577, %v1579
      %v1591 = vsel %vm651, %v1579, %v1581
      %v1592 = vsel %vm651, %v1583, %v1585
      %v1593 = vsel %vm651, %v1585, %v1587
      %1600 = vst [vmem:[#allocation7 + $0x40] sm:$0xfc] %v1588
      %1601 = vst [vmem:[#allocation7 + $0x48] sm:$0xfc] %v1589
      %1602 = vst [vmem:[#allocation7 + $0x50] sm:$0xff] %v1590
      %1603 = vst [vmem:[#allocation7 + $0x58] sm:$0xff] %v1591
      %1604 = vst [vmem:[#allocation7 + $0x60] sm:$0x7] %v1592
      %1605 = vst [vmem:[#allocation7 + $0x68] sm:$0x7] %v1593
      %v1606 = vld [vmem:[#allocation4] sm:$0xff]
      %v1607 = vld [vmem:[#allocation4 + $0x8] sm:$0xff]
      %v1608 = vld [vmem:[#allocation4 + $0x10] sm:$0xff]
      %v1609 = vld [vmem:[#allocation4 + $0x18] sm:$0xff]
      %v1610 = vld [vmem:[#allocation4 + $0x20] sm:$0xff]
      %v1611 = vld [vmem:[#allocation4 + $0x28] sm:$0xff]
      %v1612 = vld [vmem:[#allocation4 + $0x30] sm:$0x1]
      %v1613 = vld [vmem:[#allocation4 + $0x38] sm:$0x1]
      %v1614 = vld [vmem:[#allocation4 + $0x40] sm:$0x1]
      %v1615 = vld [vmem:[%s1] ss:$2 sm:$0x3]
      %v1617 = vlaneseq
      %v1618 = vshrl.u32 %v1617, 7
      %v1619 = vsub.s32 0, %v1618
      %v1620 = vrot.slane %v1615, %v1619
      %v1621 = vlaneseq
      %v1622 = vshrl.u32 %v1621, 7
      %v1623 = vsub.s32 1, %v1622
      %v1624 = vrot.slane %v1615, %v1623
      %1625 = vrot.lane.b32.xlu0 %v1620, 16
      %v1626 = vpop.permute.xlu0 %1625
      %1627 = vrot.lane.b32.xlu0 %v1624, 16
      %v1628 = vpop.permute.xlu0 %1627
      %v1629 = vsel %vm674, %v1626, %v1628
      %v1633 = vmul.f32 %v1606, %v1626
      %v1634 = vmul.f32 %v1607, %v1629
      %v1635 = vmul.f32 %v1608, %v1628
      %v1636 = vmul.f32 %v1609, %v1626
      %v1637 = vmul.f32 %v1610, %v1629
      %v1638 = vmul.f32 %v1611, %v1628
      %v1639 = vmul.f32 %v1612, %v1626
      %v1640 = vmul.f32 %v1613, %v1629
      %v1641 = vmul.f32 %v1614, %v1628
      %vm1651 = vcmask 1042432
      %v1652 = vrot.slane %v1633, 5
      %v1653 = vrot.slane %v1634, 5
      %v1654 = vrot.slane %v1635, 5
      %v1655 = vrot.slane %v1636, 5
      %v1656 = vsel %vm1651, %v1652, %v1655
      %v1657 = vrot.slane %v1637, 5
      %v1658 = vsel %vm1651, %v1653, %v1657
      %v1659 = vrot.slane %v1638, 5
      %v1660 = vsel %vm1651, %v1654, %v1659
      %v1661 = vrot.slane %v1639, 5
      %v1662 = vsel %vm1651, %v1655, %v1661
      %v1663 = vrot.slane %v1640, 5
      %v1664 = vsel %vm1651, %v1657, %v1663
      %v1665 = vrot.slane %v1641, 5
      %v1666 = vsel %vm1651, %v1659, %v1665
      %1667 = vrot.lane.b32.xlu0 %v1652, 112
      %v1668 = vpop.permute.xlu0 %1667
      %1669 = vrot.lane.b32.xlu0 %v1653, 112
      %v1670 = vpop.permute.xlu0 %1669
      %1671 = vrot.lane.b32.xlu0 %v1654, 112
      %v1672 = vpop.permute.xlu0 %1671
      %1673 = vrot.lane.b32.xlu0 %v1656, 112
      %v1674 = vpop.permute.xlu0 %1673
      %1675 = vrot.lane.b32.xlu0 %v1658, 112
      %v1676 = vpop.permute.xlu0 %1675
      %1677 = vrot.lane.b32.xlu0 %v1660, 112
      %v1678 = vpop.permute.xlu0 %1677
      %1679 = vrot.lane.b32.xlu0 %v1662, 112
      %v1680 = vpop.permute.xlu0 %1679
      %1681 = vrot.lane.b32.xlu0 %v1664, 112
      %v1682 = vpop.permute.xlu0 %1681
      %1683 = vrot.lane.b32.xlu0 %v1666, 112
      %v1684 = vpop.permute.xlu0 %1683
      %v1685 = vsel %vm690, %v1668, %v1670
      %v1686 = vsel %vm690, %v1670, %v1672
      %v1687 = vsel %vm690, %v1674, %v1676
      %v1688 = vsel %vm690, %v1676, %v1678
      %v1689 = vsel %vm690, %v1680, %v1682
      %v1690 = vsel %vm690, %v1682, %v1684
      %1697 = vst [vmem:[#allocation7 + $0x60] sm:$0xf8] %v1685
      %1698 = vst [vmem:[#allocation7 + $0x68] sm:$0xf8] %v1686
      %1699 = vst [vmem:[#allocation7 + $0x70] sm:$0xff] %v1687
      %1700 = vst [vmem:[#allocation7 + $0x78] sm:$0xff] %v1688
      %1701 = vst [vmem:[#allocation7 + $0x80] sm:$0xf] %v1689
      %1702 = vst [vmem:[#allocation7 + $0x88] sm:$0xf] %v1690
      %v1703 = vld [vmem:[#allocation4] sm:$0xff]
      %v1704 = vld [vmem:[#allocation4 + $0x8] sm:$0xff]
      %v1705 = vld [vmem:[#allocation4 + $0x10] sm:$0xff]
      %v1706 = vld [vmem:[#allocation4 + $0x18] sm:$0xff]
      %v1707 = vld [vmem:[#allocation4 + $0x20] sm:$0xff]
      %v1708 = vld [vmem:[#allocation4 + $0x28] sm:$0xff]
      %v1709 = vld [vmem:[#allocation4 + $0x30] sm:$0x1]
      %v1710 = vld [vmem:[#allocation4 + $0x38] sm:$0x1]
      %v1711 = vld [vmem:[#allocation4 + $0x40] sm:$0x1]
      %v1721 = vrot.slane %v1703, 4
      %v1722 = vrot.slane %v1704, 4
      %v1723 = vrot.slane %v1705, 4
      %v1724 = vrot.slane %v1706, 4
      %v1725 = vsel %vm869, %v1721, %v1724
      %v1726 = vrot.slane %v1707, 4
      %v1727 = vsel %vm869, %v1722, %v1726
      %v1728 = vrot.slane %v1708, 4
      %v1729 = vsel %vm869, %v1723, %v1728
      %v1730 = vrot.slane %v1709, 4
      %v1731 = vsel %vm869, %v1724, %v1730
      %v1732 = vrot.slane %v1710, 4
      %v1733 = vsel %vm869, %v1726, %v1732
      %v1734 = vrot.slane %v1711, 4
      %v1735 = vsel %vm869, %v1728, %v1734
      %1736 = vrot.lane.b32.xlu0 %v1721, 111
      %v1737 = vpop.permute.xlu0 %1736
      %1738 = vrot.lane.b32.xlu0 %v1722, 111
      %v1739 = vpop.permute.xlu0 %1738
      %1740 = vrot.lane.b32.xlu0 %v1723, 111
      %v1741 = vpop.permute.xlu0 %1740
      %1742 = vrot.lane.b32.xlu0 %v1725, 111
      %v1743 = vpop.permute.xlu0 %1742
      %1744 = vrot.lane.b32.xlu0 %v1727, 111
      %v1745 = vpop.permute.xlu0 %1744
      %1746 = vrot.lane.b32.xlu0 %v1729, 111
      %v1747 = vpop.permute.xlu0 %1746
      %1748 = vrot.lane.b32.xlu0 %v1731, 111
      %v1749 = vpop.permute.xlu0 %1748
      %1750 = vrot.lane.b32.xlu0 %v1733, 111
      %v1751 = vpop.permute.xlu0 %1750
      %1752 = vrot.lane.b32.xlu0 %v1735, 111
      %v1753 = vpop.permute.xlu0 %1752
      %v1754 = vsel %vm708, %v1737, %v1739
      %v1755 = vsel %vm708, %v1739, %v1741
      %v1756 = vsel %vm708, %v1743, %v1745
      %v1757 = vsel %vm708, %v1745, %v1747
      %v1758 = vsel %vm708, %v1749, %v1751
      %v1759 = vsel %vm708, %v1751, %v1753
      %1766 = vst [vmem:[#allocation7 + $0x80] sm:$0xf0] %v1754
      %1767 = vst [vmem:[#allocation7 + $0x88] sm:$0xf0] %v1755
      %1768 = vst [vmem:[#allocation7 + $0x90] sm:$0xff] %v1756
      %1769 = vst [vmem:[#allocation7 + $0x98] sm:$0xff] %v1757
      %1770 = vst [vmem:[#allocation7 + $0xa0] sm:$0x1f] %v1758
      %1771 = vst [vmem:[#allocation7 + $0xa8] sm:$0x1f] %v1759
      %v1772 = vld [vmem:[#allocation4] sm:$0xff]
      %v1773 = vld [vmem:[#allocation4 + $0x8] sm:$0xff]
      %v1774 = vld [vmem:[#allocation4 + $0x10] sm:$0xff]
      %v1775 = vld [vmem:[#allocation4 + $0x18] sm:$0xff]
      %v1776 = vld [vmem:[#allocation4 + $0x20] sm:$0xff]
      %v1777 = vld [vmem:[#allocation4 + $0x28] sm:$0xff]
      %v1778 = vld [vmem:[#allocation4 + $0x30] sm:$0x1]
      %v1779 = vld [vmem:[#allocation4 + $0x38] sm:$0x1]
      %v1780 = vld [vmem:[#allocation4 + $0x40] sm:$0x1]
      %v1781 = vld [vmem:[%s621] ss:$2 sm:$0x3]
      %v1783 = vlaneseq
      %v1784 = vshrl.u32 %v1783, 7
      %v1785 = vsub.s32 0, %v1784
      %v1786 = vrot.slane %v1781, %v1785
      %v1787 = vlaneseq
      %v1788 = vshrl.u32 %v1787, 7
      %v1789 = vsub.s32 1, %v1788
      %v1790 = vrot.slane %v1781, %v1789
      %1791 = vrot.lane.b32.xlu0 %v1786, 18
      %v1792 = vpop.permute.xlu0 %1791
      %1793 = vrot.lane.b32.xlu0 %v1790, 18
      %v1794 = vpop.permute.xlu0 %1793
      %v1795 = vsel %vm731, %v1792, %v1794
      %v1799 = vmul.f32 %v1772, %v1792
      %v1800 = vmul.f32 %v1773, %v1795
      %v1801 = vmul.f32 %v1774, %v1794
      %v1802 = vmul.f32 %v1775, %v1792
      %v1803 = vmul.f32 %v1776, %v1795
      %v1804 = vmul.f32 %v1777, %v1794
      %v1805 = vmul.f32 %v1778, %v1792
      %v1806 = vmul.f32 %v1779, %v1795
      %v1807 = vmul.f32 %v1780, %v1794
      %vm1817 = vcmask 1044480
      %v1818 = vrot.slane %v1799, 3
      %v1819 = vrot.slane %v1800, 3
      %v1820 = vrot.slane %v1801, 3
      %v1821 = vrot.slane %v1802, 3
      %v1822 = vsel %vm1817, %v1818, %v1821
      %v1823 = vrot.slane %v1803, 3
      %v1824 = vsel %vm1817, %v1819, %v1823
      %v1825 = vrot.slane %v1804, 3
      %v1826 = vsel %vm1817, %v1820, %v1825
      %v1827 = vrot.slane %v1805, 3
      %v1828 = vsel %vm1817, %v1821, %v1827
      %v1829 = vrot.slane %v1806, 3
      %v1830 = vsel %vm1817, %v1823, %v1829
      %v1831 = vrot.slane %v1807, 3
      %v1832 = vsel %vm1817, %v1825, %v1831
      %1833 = vrot.lane.b32.xlu0 %v1818, 110
      %v1834 = vpop.permute.xlu0 %1833
      %1835 = vrot.lane.b32.xlu0 %v1819, 110
      %v1836 = vpop.permute.xlu0 %1835
      %1837 = vrot.lane.b32.xlu0 %v1820, 110
      %v1838 = vpop.permute.xlu0 %1837
      %1839 = vrot.lane.b32.xlu0 %v1822, 110
      %v1840 = vpop.permute.xlu0 %1839
      %1841 = vrot.lane.b32.xlu0 %v1824, 110
      %v1842 = vpop.permute.xlu0 %1841
      %1843 = vrot.lane.b32.xlu0 %v1826, 110
      %v1844 = vpop.permute.xlu0 %1843
      %1845 = vrot.lane.b32.xlu0 %v1828, 110
      %v1846 = vpop.permute.xlu0 %1845
      %1847 = vrot.lane.b32.xlu0 %v1830, 110
      %v1848 = vpop.permute.xlu0 %1847
      %1849 = vrot.lane.b32.xlu0 %v1832, 110
      %v1850 = vpop.permute.xlu0 %1849
      %v1851 = vsel %vm747, %v1834, %v1836
      %v1852 = vsel %vm747, %v1836, %v1838
      %v1853 = vsel %vm747, %v1840, %v1842
      %v1854 = vsel %vm747, %v1842, %v1844
      %v1855 = vsel %vm747, %v1846, %v1848
      %v1856 = vsel %vm747, %v1848, %v1850
      %1863 = vst [vmem:[#allocation7 + $0xa0] sm:$0xe0] %v1851
      %1864 = vst [vmem:[#allocation7 + $0xa8] sm:$0xe0] %v1852
      %1865 = vst [vmem:[#allocation7 + $0xb0] sm:$0xff] %v1853
      %1866 = vst [vmem:[#allocation7 + $0xb8] sm:$0xff] %v1854
      %1867 = vst [vmem:[#allocation7 + $0xc0] sm:$0x3f] %v1855
      %1868 = vst [vmem:[#allocation7 + $0xc8] sm:$0x3f] %v1856
      %v1869 = vld [vmem:[#allocation4] sm:$0xff]
      %v1870 = vld [vmem:[#allocation4 + $0x8] sm:$0xff]
      %v1871 = vld [vmem:[#allocation4 + $0x10] sm:$0xff]
      %v1872 = vld [vmem:[#allocation4 + $0x18] sm:$0xff]
      %v1873 = vld [vmem:[#allocation4 + $0x20] sm:$0xff]
      %v1874 = vld [vmem:[#allocation4 + $0x28] sm:$0xff]
      %v1875 = vld [vmem:[#allocation4 + $0x30] sm:$0x1]
      %v1876 = vld [vmem:[#allocation4 + $0x38] sm:$0x1]
      %v1877 = vld [vmem:[#allocation4 + $0x40] sm:$0x1]
      %v1878 = vld [vmem:[%s1] ss:$2 sm:$0x3]
      %v1880 = vlaneseq
      %v1881 = vshrl.u32 %v1880, 7
      %v1882 = vsub.s32 0, %v1881
      %v1883 = vrot.slane %v1878, %v1882
      %v1884 = vlaneseq
      %v1885 = vshrl.u32 %v1884, 7
      %v1886 = vsub.s32 1, %v1885
      %v1887 = vrot.slane %v1878, %v1886
      %1888 = vrot.lane.b32.xlu0 %v1883, 32
      %v1889 = vpop.permute.xlu0 %1888
      %1890 = vrot.lane.b32.xlu0 %v1887, 32
      %v1891 = vpop.permute.xlu0 %1890
      %v1892 = vsel %vm770, %v1889, %v1891
      %v1896 = vmul.f32 %v1869, %v1889
      %v1897 = vmul.f32 %v1870, %v1892
      %v1898 = vmul.f32 %v1871, %v1891
      %v1899 = vmul.f32 %v1872, %v1889
      %v1900 = vmul.f32 %v1873, %v1892
      %v1901 = vmul.f32 %v1874, %v1891
      %v1902 = vmul.f32 %v1875, %v1889
      %v1903 = vmul.f32 %v1876, %v1892
      %v1904 = vmul.f32 %v1877, %v1891
      %vm1914 = vcmask 1045504
      %v1915 = vrot.slane %v1896, 2
      %v1916 = vrot.slane %v1897, 2
      %v1917 = vrot.slane %v1898, 2
      %v1918 = vrot.slane %v1899, 2
      %v1919 = vsel %vm1914, %v1915, %v1918
      %v1920 = vrot.slane %v1900, 2
      %v1921 = vsel %vm1914, %v1916, %v1920
      %v1922 = vrot.slane %v1901, 2
      %v1923 = vsel %vm1914, %v1917, %v1922
      %v1924 = vrot.slane %v1902, 2
      %v1925 = vsel %vm1914, %v1918, %v1924
      %v1926 = vrot.slane %v1903, 2
      %v1927 = vsel %vm1914, %v1920, %v1926
      %v1928 = vrot.slane %v1904, 2
      %v1929 = vsel %vm1914, %v1922, %v1928
      %1930 = vrot.lane.b32.xlu0 %v1915, 96
      %v1931 = vpop.permute.xlu0 %1930
      %1932 = vrot.lane.b32.xlu0 %v1916, 96
      %v1933 = vpop.permute.xlu0 %1932
      %1934 = vrot.lane.b32.xlu0 %v1917, 96
      %v1935 = vpop.permute.xlu0 %1934
      %1936 = vrot.lane.b32.xlu0 %v1919, 96
      %v1937 = vpop.permute.xlu0 %1936
      %1938 = vrot.lane.b32.xlu0 %v1921, 96
      %v1939 = vpop.permute.xlu0 %1938
      %1940 = vrot.lane.b32.xlu0 %v1923, 96
      %v1941 = vpop.permute.xlu0 %1940
      %1942 = vrot.lane.b32.xlu0 %v1925, 96
      %v1943 = vpop.permute.xlu0 %1942
      %1944 = vrot.lane.b32.xlu0 %v1927, 96
      %v1945 = vpop.permute.xlu0 %1944
      %1946 = vrot.lane.b32.xlu0 %v1929, 96
      %v1947 = vpop.permute.xlu0 %1946
      %v1948 = vsel %vm785, %v1931, %v1933
      %v1949 = vsel %vm785, %v1933, %v1935
      %v1950 = vsel %vm785, %v1937, %v1939
      %v1951 = vsel %vm785, %v1939, %v1941
      %v1952 = vsel %vm785, %v1943, %v1945
      %v1953 = vsel %vm785, %v1945, %v1947
      %1960 = vst [vmem:[#allocation7 + $0xc0] sm:$0xc0] %v1948
      %1961 = vst [vmem:[#allocation7 + $0xc8] sm:$0xc0] %v1949
      %1962 = vst [vmem:[#allocation7 + $0xd0] sm:$0xff] %v1950
      %1963 = vst [vmem:[#allocation7 + $0xd8] sm:$0xff] %v1951
      %1964 = vst [vmem:[#allocation7 + $0xe0] sm:$0x7f] %v1952
      %1965 = vst [vmem:[#allocation7 + $0xe8] sm:$0x7f] %v1953
      %v1966 = vld [vmem:[#allocation4] sm:$0xff]
      %v1967 = vld [vmem:[#allocation4 + $0x8] sm:$0xff]
      %v1968 = vld [vmem:[#allocation4 + $0x10] sm:$0xff]
      %v1969 = vld [vmem:[#allocation4 + $0x18] sm:$0xff]
      %v1970 = vld [vmem:[#allocation4 + $0x20] sm:$0xff]
      %v1971 = vld [vmem:[#allocation4 + $0x28] sm:$0xff]
      %v1972 = vld [vmem:[#allocation4 + $0x30] sm:$0x1]
      %v1973 = vld [vmem:[#allocation4 + $0x38] sm:$0x1]
      %v1974 = vld [vmem:[#allocation4 + $0x40] sm:$0x1]
      %vm1984 = vcmask 1046528
      %v1985 = vrot.slane %v1966, 1
      %v1986 = vrot.slane %v1967, 1
      %v1987 = vrot.slane %v1968, 1
      %v1988 = vrot.slane %v1969, 1
      %v1989 = vsel %vm1984, %v1985, %v1988
      %v1990 = vrot.slane %v1970, 1
      %v1991 = vsel %vm1984, %v1986, %v1990
      %v1992 = vrot.slane %v1971, 1
      %v1993 = vsel %vm1984, %v1987, %v1992
      %v1994 = vrot.slane %v1972, 1
      %v1995 = vsel %vm1984, %v1988, %v1994
      %v1996 = vrot.slane %v1973, 1
      %v1997 = vsel %vm1984, %v1990, %v1996
      %v1998 = vrot.slane %v1974, 1
      %v1999 = vsel %vm1984, %v1992, %v1998
      %2000 = vrot.lane.b32.xlu0 %v1985, 95
      %v2001 = vpop.permute.xlu0 %2000
      %2002 = vrot.lane.b32.xlu0 %v1986, 95
      %v2003 = vpop.permute.xlu0 %2002
      %2004 = vrot.lane.b32.xlu0 %v1987, 95
      %v2005 = vpop.permute.xlu0 %2004
      %2006 = vrot.lane.b32.xlu0 %v1989, 95
      %v2007 = vpop.permute.xlu0 %2006
      %2008 = vrot.lane.b32.xlu0 %v1991, 95
      %v2009 = vpop.permute.xlu0 %2008
      %2010 = vrot.lane.b32.xlu0 %v1993, 95
      %v2011 = vpop.permute.xlu0 %2010
      %2012 = vrot.lane.b32.xlu0 %v1995, 95
      %v2013 = vpop.permute.xlu0 %2012
      %2014 = vrot.lane.b32.xlu0 %v1997, 95
      %v2015 = vpop.permute.xlu0 %2014
      %2016 = vrot.lane.b32.xlu0 %v1999, 95
      %v2017 = vpop.permute.xlu0 %2016
      %v2018 = vsel %vm804, %v2001, %v2003
      %v2019 = vsel %vm804, %v2003, %v2005
      %v2020 = vsel %vm804, %v2007, %v2009
      %v2021 = vsel %vm804, %v2009, %v2011
      %v2022 = vsel %vm804, %v2013, %v2015
      %v2023 = vsel %vm804, %v2015, %v2017
      %2030 = vst [vmem:[#allocation7 + $0xe0] sm:$0x80] %v2018
      %2031 = vst [vmem:[#allocation7 + $0xe8] sm:$0x80] %v2019
      %2032 = vst [vmem:[#allocation7 + $0xf0] sm:$0xff] %v2020
      %2033 = vst [vmem:[#allocation7 + $0xf8] sm:$0xff] %v2021
      %2034 = vst [vmem:[#allocation7 + $0x100] sm:$0xff] %v2022
      %2035 = vst [vmem:[#allocation7 + $0x108] sm:$0xff] %v2023
      %v2036 = vld [vmem:[#allocation4] sm:$0xff]
      %v2037 = vld [vmem:[#allocation4 + $0x8] sm:$0xff]
      %v2038 = vld [vmem:[#allocation4 + $0x10] sm:$0xff]
      %v2039 = vld [vmem:[#allocation4 + $0x18] sm:$0xff]
      %v2040 = vld [vmem:[#allocation4 + $0x20] sm:$0xff]
      %v2041 = vld [vmem:[#allocation4 + $0x28] sm:$0xff]
      %v2042 = vld [vmem:[#allocation4 + $0x30] sm:$0x1]
      %v2043 = vld [vmem:[#allocation4 + $0x38] sm:$0x1]
      %v2044 = vld [vmem:[#allocation4 + $0x40] sm:$0x1]
      %v2045 = vld [vmem:[%s621] ss:$2 sm:$0x3]
      %v2047 = vlaneseq
      %v2048 = vshrl.u32 %v2047, 7
      %v2049 = vsub.s32 0, %v2048
      %v2050 = vrot.slane %v2045, %v2049
      %v2051 = vlaneseq
      %v2052 = vshrl.u32 %v2051, 7
      %v2053 = vsub.s32 1, %v2052
      %v2054 = vrot.slane %v2045, %v2053
      %2055 = vrot.lane.b32.xlu0 %v2050, 34
      %v2056 = vpop.permute.xlu0 %2055
      %2057 = vrot.lane.b32.xlu0 %v2054, 34
      %v2058 = vpop.permute.xlu0 %2057
      %v2059 = vsel %vm554, %v2056, %v2058
      %v2063 = vmul.f32 %v2036, %v2056
      %v2064 = vmul.f32 %v2037, %v2059
      %v2065 = vmul.f32 %v2038, %v2058
      %v2066 = vmul.f32 %v2039, %v2056
      %v2067 = vmul.f32 %v2040, %v2059
      %v2068 = vmul.f32 %v2041, %v2058
      %v2069 = vmul.f32 %v2042, %v2056
      %v2070 = vmul.f32 %v2043, %v2059
      %v2071 = vmul.f32 %v2044, %v2058
      %2081 = vrot.lane.b32.xlu0 %v2063, 94
      %v2082 = vpop.permute.xlu0 %2081
      %2083 = vrot.lane.b32.xlu0 %v2064, 94
      %v2084 = vpop.permute.xlu0 %2083
      %2085 = vrot.lane.b32.xlu0 %v2065, 94
      %v2086 = vpop.permute.xlu0 %2085
      %2087 = vrot.lane.b32.xlu0 %v2066, 94
      %v2088 = vpop.permute.xlu0 %2087
      %2089 = vrot.lane.b32.xlu0 %v2067, 94
      %v2090 = vpop.permute.xlu0 %2089
      %2091 = vrot.lane.b32.xlu0 %v2068, 94
      %v2092 = vpop.permute.xlu0 %2091
      %2093 = vrot.lane.b32.xlu0 %v2069, 94
      %v2094 = vpop.permute.xlu0 %2093
      %2095 = vrot.lane.b32.xlu0 %v2070, 94
      %v2096 = vpop.permute.xlu0 %2095
      %2097 = vrot.lane.b32.xlu0 %v2071, 94
      %v2098 = vpop.permute.xlu0 %2097
      %v2099 = vsel %vm841, %v2082, %v2084
      %v2100 = vsel %vm841, %v2084, %v2086
      %v2101 = vsel %vm841, %v2088, %v2090
      %v2102 = vsel %vm841, %v2090, %v2092
      %v2103 = vsel %vm841, %v2094, %v2096
      %v2104 = vsel %vm841, %v2096, %v2098
      %2111 = vst [vmem:[#allocation7 + $0x110] sm:$0xff] %v2099
      %2112 = vst [vmem:[#allocation7 + $0x118] sm:$0xff] %v2100
      %2113 = vst [vmem:[#allocation7 + $0x120] sm:$0xff] %v2101
      %2114 = vst [vmem:[#allocation7 + $0x128] sm:$0xff] %v2102
      %2115 = vst [vmem:[#allocation7 + $0x130] sm:$0x1] %v2103
      %2116 = vst [vmem:[#allocation7 + $0x138] sm:$0x1] %v2104
      %v2117 = vld [vmem:[%s6] sm:$0xff]
      %v2118 = vld [vmem:[%s6 + $0x8] sm:$0xff]
      %v2119 = vld [vmem:[%s6 + $0x10] sm:$0xff]
      %v2120 = vld [vmem:[%s6 + $0x18] sm:$0xff]
      %v2121 = vld [vmem:[%s6 + $0x20] sm:$0xff]
      %v2122 = vld [vmem:[%s6 + $0x28] sm:$0xff]
      %v2123 = vld [vmem:[%s6 + $0x30] sm:$0x3]
      %v2124 = vld [vmem:[%s6 + $0x38] sm:$0x3]
      %v2125 = vld [vmem:[#allocation7] sm:$0xff]
      %v2126 = vld [vmem:[#allocation7 + $0x8] sm:$0xff]
      %v2127 = vld [vmem:[#allocation7 + $0x10] sm:$0xff]
      %v2128 = vld [vmem:[#allocation7 + $0x18] sm:$0xff]
      %v2129 = vld [vmem:[#allocation7 + $0x20] sm:$0xff]
      %v2130 = vld [vmem:[#allocation7 + $0x28] sm:$0xff]
      %v2131 = vld [vmem:[#allocation7 + $0x30] sm:$0xff]
      %v2132 = vld [vmem:[#allocation7 + $0x38] sm:$0xff]
      %v2133 = vld [vmem:[#allocation7 + $0x40] sm:$0xff]
      %v2134 = vld [vmem:[#allocation7 + $0x48] sm:$0xff]
      %v2135 = vld [vmem:[#allocation7 + $0x50] sm:$0xff]
      %v2136 = vld [vmem:[#allocation7 + $0x58] sm:$0xff]
      %v2137 = vld [vmem:[#allocation7 + $0x60] sm:$0xff]
      %v2138 = vld [vmem:[#allocation7 + $0x68] sm:$0xff]
      %v2139 = vld [vmem:[#allocation7 + $0x70] sm:$0xff]
      %v2140 = vld [vmem:[#allocation7 + $0x78] sm:$0xff]
      %v2141 = vld [vmem:[#allocation7 + $0x80] sm:$0xff]
      %v2142 = vld [vmem:[#allocation7 + $0x88] sm:$0xff]
      %v2143 = vld [vmem:[#allocation7 + $0x90] sm:$0xff]
      %v2144 = vld [vmem:[#allocation7 + $0x98] sm:$0xff]
      %v2145 = vld [vmem:[#allocation7 + $0xa0] sm:$0xff]
      %v2146 = vld [vmem:[#allocation7 + $0xa8] sm:$0xff]
      %v2147 = vld [vmem:[#allocation7 + $0xb0] sm:$0xff]
      %v2148 = vld [vmem:[#allocation7 + $0xb8] sm:$0xff]
      %v2149 = vld [vmem:[#allocation7 + $0xc0] sm:$0xff]
      %v2150 = vld [vmem:[#allocation7 + $0xc8] sm:$0xff]
      %v2151 = vld [vmem:[#allocation7 + $0xd0] sm:$0xff]
      %v2152 = vld [vmem:[#allocation7 + $0xd8] sm:$0xff]
      %v2153 = vld [vmem:[#allocation7 + $0xe0] sm:$0xff]
      %v2154 = vld [vmem:[#allocation7 + $0xe8] sm:$0xff]
      %v2155 = vld [vmem:[#allocation7 + $0xf0] sm:$0xff]
      %v2156 = vld [vmem:[#allocation7 + $0xf8] sm:$0xff]
      %v2157 = vld [vmem:[#allocation7 + $0x100] sm:$0xff]
      %v2158 = vld [vmem:[#allocation7 + $0x108] sm:$0xff]
      %v2159 = vld [vmem:[#allocation7 + $0x110] sm:$0xff]
      %v2160 = vld [vmem:[#allocation7 + $0x118] sm:$0xff]
      %v2161 = vld [vmem:[#allocation7 + $0x120] sm:$0xff]
      %v2162 = vld [vmem:[#allocation7 + $0x128] sm:$0xff]
      %v2163 = vld [vmem:[#allocation7 + $0x130] sm:$0x1]
      %v2164 = vld [vmem:[#allocation7 + $0x138] sm:$0x1]
      %v2165 = vld [vmem:[%s7] sm:$0xff]
      %v2166 = vld [vmem:[%s7 + $0x8] sm:$0xff]
      %v2167 = vld [vmem:[%s7 + $0x10] sm:$0xff]
      %v2168 = vld [vmem:[%s7 + $0x18] sm:$0x3]
      %2170 = vset.pattern.permute.xlu0 0
      %2171 = vperm.xlu0 %2170, %v2165
      %v2172 = vpop.permute.xlu0 %2171
      %2175 = vset.pattern.permute.xlu0 0
      %2176 = vperm.xlu0 %2175, %v2166
      %v2177 = vpop.permute.xlu0 %2176
      %2180 = vset.pattern.permute.xlu0 0
      %2181 = vperm.xlu0 %2180, %v2167
      %v2182 = vpop.permute.xlu0 %2181
      %2185 = vset.pattern.permute.xlu0 0
      %2186 = vperm.xlu0 %2185, %v2168
      %v2187 = vpop.permute.xlu0 %2186
      %vm2189 = vcmask 203776
      %v2191 = vsel %vm2189, %v2118, 0
      %v2194 = vsel %vm2189, %v2120, 0
      %v2197 = vsel %vm2189, %v2122, 0
      %v2200 = vsel %vm2189, %v2124, 0
      %v2203 = vsel %vm1457, %v2163, 0
      %v2206 = vsel %vm1457, %v2164, 0
      %2208 = vmatprep.subr.mxu0 %v2126
      %2209 = vmatpush1.msra.mxu0 %v2125
      %2210 = vmatprep.subr.mxu0 %v2128
      %2211 = vmatpush1.msra.mxu0 %v2127
      %2212 = vmatprep.subr.mxu0 %v2130
      %2213 = vmatpush1.msra.mxu0 %v2129
      %2214 = vmatprep.subr.mxu0 %v2132
      %2215 = vmatpush1.msra.mxu0 %v2131
      %2216 = vmatprep.subr.mxu0 %v2134
      %2217 = vmatpush1.msra.mxu0 %v2133
      %2218 = vmatprep.subr.mxu0 %v2136
      %2219 = vmatpush1.msra.mxu0 %v2135
      %2220 = vmatprep.subr.mxu0 %v2138
      %2221 = vmatpush1.msra.mxu0 %v2137
      %2222 = vmatprep.subr.mxu0 %v2140
      %2223 = vmatpush1.msra.mxu0 %v2139
      %2224 = vmatprep.subr.mxu0 %v2142
      %2225 = vmatpush1.msra.mxu0 %v2141
      %2226 = vmatprep.subr.mxu0 %v2144
      %2227 = vmatpush1.msra.mxu0 %v2143
      %2228 = vmatprep.subr.mxu0 %v2146
      %2229 = vmatpush1.msra.mxu0 %v2145
      %2230 = vmatprep.subr.mxu0 %v2148
      %2231 = vmatpush1.msra.mxu0 %v2147
      %2232 = vmatprep.subr.mxu0 %v2150
      %2233 = vmatpush1.msra.mxu0 %v2149
      %2234 = vmatprep.subr.mxu0 %v2152
      %2235 = vmatpush1.msra.mxu0 %v2151
      %2236 = vmatprep.subr.mxu0 %v2154
      %2237 = vmatpush1.msra.mxu0 %v2153
      %2238 = vmatprep.subr.mxu0 %v2156
      %2239 = vmatpush1.msra.mxu0 %v2155
      %2240 = vmatprep.subr.mxu0 %v2158
      %2241 = vmatpush1.msra.mxu0 %v2157
      %2242 = vmatprep.subr.mxu0 %v2160
      %2243 = vmatpush1.msra.mxu0 %v2159
      %2244 = vmatprep.subr.mxu0 %v2162
      %2245 = vmatpush1.msra.mxu0 %v2161
      %2246 = vmatprep.subr.mxu0 %v2206
      %2247 = vmatpush1.msra.mxu0 %v2203
      %2248 = vmatprep.subr.mxu0 0.0
      %2249 = vmatpush1.msra.mxu0 0.0
      %2250 = vmatprep.subr.mxu0 0.0
      %2251 = vmatpush1.msra.mxu0 0.0
      %2252 = vmatprep.subr.mxu0 0.0
      %2253 = vmatpush1.msra.mxu0 0.0
      %2254 = vmatprep.subr.mxu0 0.0
      %2255 = vmatpush1.msra.mxu0 0.0
      %2256 = vmatprep.subr.mxu0 0.0
      %2257 = vmatpush1.msra.mxu0 0.0
      %2258 = vmatprep.subr.mxu0 0.0
      %2259 = vmatpush1.msra.mxu0 0.0
      %2260 = vmatprep.subr.mxu0 0.0
      %2261 = vmatpush1.msra.mxu0 0.0
      %2262 = vmatprep.subr.mxu0 0.0
      %2263 = vmatpush1.msra.mxu0 0.0
      %2264 = vmatprep.subr.mxu0 0.0
      %2265 = vmatpush1.msra.mxu0 0.0
      %2266 = vmatprep.subr.mxu0 0.0
      %2267 = vmatpush1.msra.mxu0 0.0
      %2268 = vmatprep.subr.mxu0 0.0
      %2269 = vmatpush1.msra.mxu0 0.0
      %2270 = vmatprep.subr.mxu0 0.0
      %2271 = vmatpush1.msra.mxu0 0.0
      %2272 = vmatprep.mubr.f32.mxu0 %v2191
      %2273 = vmatmul.mubr.f32.gmra.mrb[0].mxu0 %v2117
      %v2274 = vpop.f32.mrb[0].mxu0
      %v2275 = vadd.f32 %v2172, %v2274
      %v2276 = vpop.f32.mrb[0].mxu0
      %v2277 = vadd.f32 %v2172, %v2276
      %2278 = vmatprep.mubr.f32.mxu0 %v2194
      %2279 = vmatmul.mubr.f32.gmra.mrb[0].mxu0 %v2119
      %v2280 = vpop.f32.mrb[0].mxu0
      %v2281 = vadd.f32 %v2177, %v2280
      %v2282 = vpop.f32.mrb[0].mxu0
      %v2283 = vadd.f32 %v2177, %v2282
      %2284 = vmatprep.mubr.f32.mxu0 %v2197
      %2285 = vmatmul.mubr.f32.gmra.mrb[0].mxu0 %v2121
      %v2286 = vpop.f32.mrb[0].mxu0
      %v2287 = vadd.f32 %v2182, %v2286
      %v2288 = vpop.f32.mrb[0].mxu0
      %v2289 = vadd.f32 %v2182, %v2288
      %2290 = vmatprep.mubr.f32.mxu0 %v2200
      %2291 = vmatmul.mubr.f32.gmra.mrb[0].mxu0 %v2123
      %v2292 = vpop.f32.mrb[0].mxu0
      %v2293 = vadd.f32 %v2187, %v2292
      %v2294 = vpop.f32.mrb[0].mxu0
      %v2295 = vadd.f32 %v2187, %v2294
      %2296 = vdwg.mxu0
      %v2297 = vmax.f32 %v2275, 0.0
      %v2298 = vmax.f32 %v2277, 0.0
      %v2299 = vmax.f32 %v2281, 0.0
      %v2300 = vmax.f32 %v2283, 0.0
      %v2301 = vmax.f32 %v2287, 0.0
      %v2302 = vmax.f32 %v2289, 0.0
      %v2303 = vmax.f32 %v2293, 0.0
      %v2304 = vmax.f32 %v2295, 0.0
      %v2305 = vld [vmem:[%s8] sm:$0xff]
      %v2306 = vcombine.high %v566, %v566
      %vm2307 = vcmask 31744
      %v2309 = vsel %vm2307, %v2305, 0
      %v2311 = vsel %vm869, %v566, 0
      %v2313 = vsel %vm869, %v2306, 0
      %2315 = vmatprep.subr.mxu0 %v2313
      %2316 = vmatpush1.msra.mxu0 %v2311
      %2317 = vmatprep.subr.mxu0 0.0
      %2318 = vmatpush1.msra.mxu0 0.0
      %2319 = vmatprep.subr.mxu0 0.0
      %2320 = vmatpush1.msra.mxu0 0.0
      %2321 = vmatprep.subr.mxu0 0.0
      %2322 = vmatpush1.msra.mxu0 0.0
      %2323 = vmatprep.subr.mxu0 0.0
      %2324 = vmatpush1.msra.mxu0 0.0
      %2325 = vmatprep.subr.mxu0 0.0
      %2326 = vmatpush1.msra.mxu0 0.0
      %2327 = vmatprep.subr.mxu0 0.0
      %2328 = vmatpush1.msra.mxu0 0.0
      %2329 = vmatprep.subr.mxu0 0.0
      %2330 = vmatpush1.msra.mxu0 0.0
      %2331 = vmatprep.subr.mxu0 0.0
      %2332 = vmatpush1.msra.mxu0 0.0
      %2333 = vmatprep.subr.mxu0 0.0
      %2334 = vmatpush1.msra.mxu0 0.0
      %2335 = vmatprep.subr.mxu0 0.0
      %2336 = vmatpush1.msra.mxu0 0.0
      %2337 = vmatprep.subr.mxu0 0.0
      %2338 = vmatpush1.msra.mxu0 0.0
      %2339 = vmatprep.subr.mxu0 0.0
      %2340 = vmatpush1.msra.mxu0 0.0
      %2341 = vmatprep.subr.mxu0 0.0
      %2342 = vmatpush1.msra.mxu0 0.0
      %2343 = vmatprep.subr.mxu0 0.0
      %2344 = vmatpush1.msra.mxu0 0.0
      %2345 = vmatprep.subr.mxu0 0.0
      %2346 = vmatpush1.msra.mxu0 0.0
      %2347 = vmatprep.subr.mxu0 0.0
      %2348 = vmatpush1.msra.mxu0 0.0
      %2349 = vmatprep.subr.mxu0 0.0
      %2350 = vmatpush1.msra.mxu0 0.0
      %2351 = vmatprep.subr.mxu0 0.0
      %2352 = vmatpush1.msra.mxu0 0.0
      %2353 = vmatprep.subr.mxu0 0.0
      %2354 = vmatpush1.msra.mxu0 0.0
      %2355 = vmatprep.subr.mxu0 0.0
      %2356 = vmatpush1.msra.mxu0 0.0
      %2357 = vmatprep.subr.mxu0 0.0
      %2358 = vmatpush1.msra.mxu0 0.0
      %2359 = vmatprep.subr.mxu0 0.0
      %2360 = vmatpush1.msra.mxu0 0.0
      %2361 = vmatprep.subr.mxu0 0.0
      %2362 = vmatpush1.msra.mxu0 0.0
      %2363 = vmatprep.subr.mxu0 0.0
      %2364 = vmatpush1.msra.mxu0 0.0
      %2365 = vmatprep.subr.mxu0 0.0
      %2366 = vmatpush1.msra.mxu0 0.0
      %2367 = vmatprep.subr.mxu0 0.0
      %2368 = vmatpush1.msra.mxu0 0.0
      %2369 = vmatprep.subr.mxu0 0.0
      %2370 = vmatpush1.msra.mxu0 0.0
      %2371 = vmatprep.subr.mxu0 0.0
      %2372 = vmatpush1.msra.mxu0 0.0
      %2373 = vmatprep.subr.mxu0 0.0
      %2374 = vmatpush1.msra.mxu0 0.0
      %2375 = vmatprep.subr.mxu0 0.0
      %2376 = vmatpush1.msra.mxu0 0.0
      %2377 = vmatprep.subr.mxu0 0.0
      %2378 = vmatpush1.msra.mxu0 0.0
      %2379 = vmatprep.mubr.f32.mxu0 0.0
      %2380 = vmatmul.mubr.f32.gmra.mrb[0].mxu0 %v2309
      %v2381 = vpop.f32.mrb[0].mxu0
      %v2382 = vadd.f32 0.0, %v2381
      %v2383 = vpop.f32.mrb[0].mxu0
      %v2384 = vadd.f32 0.0, %v2383
      %2385 = vdwg.mxu0
      %v2386 = vld [vmem:[%s9] sm:$0xff]
      %v2387 = vld [vmem:[%s9 + $0x8] sm:$0xff]
      %v2388 = vld [vmem:[%s9 + $0x10] sm:$0x1]
      %v2390 = vsel %vm2307, %v2386, 0
      %v2393 = vsel %vm2307, %v2387, 0
      %v2396 = vsel %vm2307, %v2388, 0
      %2398 = vmatprep.subr.mxu0 %v2313
      %2399 = vmatpush1.msra.mxu0 %v2311
      %2400 = vmatprep.subr.mxu0 0.0
      %2401 = vmatpush1.msra.mxu0 0.0
      %2402 = vmatprep.subr.mxu0 0.0
      %2403 = vmatpush1.msra.mxu0 0.0
      %2404 = vmatprep.subr.mxu0 0.0
      %2405 = vmatpush1.msra.mxu0 0.0
      %2406 = vmatprep.subr.mxu0 0.0
      %2407 = vmatpush1.msra.mxu0 0.0
      %2408 = vmatprep.subr.mxu0 0.0
      %2409 = vmatpush1.msra.mxu0 0.0
      %2410 = vmatprep.subr.mxu0 0.0
      %2411 = vmatpush1.msra.mxu0 0.0
      %2412 = vmatprep.subr.mxu0 0.0
      %2413 = vmatpush1.msra.mxu0 0.0
      %2414 = vmatprep.subr.mxu0 0.0
      %2415 = vmatpush1.msra.mxu0 0.0
      %2416 = vmatprep.subr.mxu0 0.0
      %2417 = vmatpush1.msra.mxu0 0.0
      %2418 = vmatprep.subr.mxu0 0.0
      %2419 = vmatpush1.msra.mxu0 0.0
      %2420 = vmatprep.subr.mxu0 0.0
      %2421 = vmatpush1.msra.mxu0 0.0
      %2422 = vmatprep.subr.mxu0 0.0
      %2423 = vmatpush1.msra.mxu0 0.0
      %2424 = vmatprep.subr.mxu0 0.0
      %2425 = vmatpush1.msra.mxu0 0.0
      %2426 = vmatprep.subr.mxu0 0.0
      %2427 = vmatpush1.msra.mxu0 0.0
      %2428 = vmatprep.subr.mxu0 0.0
      %2429 = vmatpush1.msra.mxu0 0.0
      %2430 = vmatprep.subr.mxu0 0.0
      %2431 = vmatpush1.msra.mxu0 0.0
      %2432 = vmatprep.subr.mxu0 0.0
      %2433 = vmatpush1.msra.mxu0 0.0
      %2434 = vmatprep.subr.mxu0 0.0
      %2435 = vmatpush1.msra.mxu0 0.0
      %2436 = vmatprep.subr.mxu0 0.0
      %2437 = vmatpush1.msra.mxu0 0.0
      %2438 = vmatprep.subr.mxu0 0.0
      %2439 = vmatpush1.msra.mxu0 0.0
      %2440 = vmatprep.subr.mxu0 0.0
      %2441 = vmatpush1.msra.mxu0 0.0
      %2442 = vmatprep.subr.mxu0 0.0
      %2443 = vmatpush1.msra.mxu0 0.0
      %2444 = vmatprep.subr.mxu0 0.0
      %2445 = vmatpush1.msra.mxu0 0.0
      %2446 = vmatprep.subr.mxu0 0.0
      %2447 = vmatpush1.msra.mxu0 0.0
      %2448 = vmatprep.subr.mxu0 0.0
      %2449 = vmatpush1.msra.mxu0 0.0
      %2450 = vmatprep.subr.mxu0 0.0
      %2451 = vmatpush1.msra.mxu0 0.0
      %2452 = vmatprep.subr.mxu0 0.0
      %2453 = vmatpush1.msra.mxu0 0.0
      %2454 = vmatprep.subr.mxu0 0.0
      %2455 = vmatpush1.msra.mxu0 0.0
      %2456 = vmatprep.subr.mxu0 0.0
      %2457 = vmatpush1.msra.mxu0 0.0
      %2458 = vmatprep.subr.mxu0 0.0
      %2459 = vmatpush1.msra.mxu0 0.0
      %2460 = vmatprep.subr.mxu0 0.0
      %2461 = vmatpush1.msra.mxu0 0.0
      %2462 = vmatprep.mubr.f32.mxu0 0.0
      %2463 = vmatmul.mubr.f32.gmra.mrb[0].mxu0 %v2390
      %v2464 = vpop.f32.mrb[0].mxu0
      %v2465 = vadd.f32 0.0, %v2464
      %v2466 = vpop.f32.mrb[0].mxu0
      %v2467 = vadd.f32 0.0, %v2466
      %2468 = vmatprep.mubr.f32.mxu0 0.0
      %2469 = vmatmul.mubr.f32.gmra.mrb[0].mxu0 %v2393
      %v2470 = vpop.f32.mrb[0].mxu0
      %v2471 = vadd.f32 0.0, %v2470
      %v2472 = vpop.f32.mrb[0].mxu0
      %v2473 = vadd.f32 0.0, %v2472
      %2474 = vmatprep.mubr.f32.mxu0 0.0
      %2475 = vmatmul.mubr.f32.gmra.mrb[0].mxu0 %v2396
      %v2476 = vpop.f32.mrb[0].mxu0
      %v2477 = vadd.f32 0.0, %v2476
      %v2478 = vpop.f32.mrb[0].mxu0
      %v2479 = vadd.f32 0.0, %v2478
      %2480 = vdwg.mxu0
      %v2481 = vld [vmem:[%s10] sm:$0xff]
      %v2482 = vld [vmem:[%s10 + $0x8] sm:$0xff]
      %v2483 = vld [vmem:[%s10 + $0x10] sm:$0xff]
      %v2484 = vld [vmem:[%s10 + $0x18] sm:$0x3]
      %v2486 = vsel %vm2307, %v2481, 0
      %v2489 = vsel %vm2307, %v2482, 0
      %v2492 = vsel %vm2307, %v2483, 0
      %v2495 = vsel %vm2307, %v2484, 0
      %2497 = vmatprep.subr.mxu0 %v2313
      %2498 = vmatpush1.msra.mxu0 %v2311
      %2499 = vmatprep.subr.mxu0 0.0
      %2500 = vmatpush1.msra.mxu0 0.0
      %2501 = vmatprep.subr.mxu0 0.0
      %2502 = vmatpush1.msra.mxu0 0.0
      %2503 = vmatprep.subr.mxu0 0.0
      %2504 = vmatpush1.msra.mxu0 0.0
      %2505 = vmatprep.subr.mxu0 0.0
      %2506 = vmatpush1.msra.mxu0 0.0
      %2507 = vmatprep.subr.mxu0 0.0
      %2508 = vmatpush1.msra.mxu0 0.0
      %2509 = vmatprep.subr.mxu0 0.0
      %2510 = vmatpush1.msra.mxu0 0.0
      %2511 = vmatprep.subr.mxu0 0.0
      %2512 = vmatpush1.msra.mxu0 0.0
      %2513 = vmatprep.subr.mxu0 0.0
      %2514 = vmatpush1.msra.mxu0 0.0
      %2515 = vmatprep.subr.mxu0 0.0
      %2516 = vmatpush1.msra.mxu0 0.0
      %2517 = vmatprep.subr.mxu0 0.0
      %2518 = vmatpush1.msra.mxu0 0.0
      %2519 = vmatprep.subr.mxu0 0.0
      %2520 = vmatpush1.msra.mxu0 0.0
      %2521 = vmatprep.subr.mxu0 0.0
      %2522 = vmatpush1.msra.mxu0 0.0
      %2523 = vmatprep.subr.mxu0 0.0
      %2524 = vmatpush1.msra.mxu0 0.0
      %2525 = vmatprep.subr.mxu0 0.0
      %2526 = vmatpush1.msra.mxu0 0.0
      %2527 = vmatprep.subr.mxu0 0.0
      %2528 = vmatpush1.msra.mxu0 0.0
      %2529 = vmatprep.subr.mxu0 0.0
      %2530 = vmatpush1.msra.mxu0 0.0
      %2531 = vmatprep.subr.mxu0 0.0
      %2532 = vmatpush1.msra.mxu0 0.0
      %2533 = vmatprep.subr.mxu0 0.0
      %2534 = vmatpush1.msra.mxu0 0.0
      %2535 = vmatprep.subr.mxu0 0.0
      %2536 = vmatpush1.msra.mxu0 0.0
      %2537 = vmatprep.subr.mxu0 0.0
      %2538 = vmatpush1.msra.mxu0 0.0
      %2539 = vmatprep.subr.mxu0 0.0
      %2540 = vmatpush1.msra.mxu0 0.0
      %2541 = vmatprep.subr.mxu0 0.0
      %2542 = vmatpush1.msra.mxu0 0.0
      %2543 = vmatprep.subr.mxu0 0.0
      %2544 = vmatpush1.msra.mxu0 0.0
      %2545 = vmatprep.subr.mxu0 0.0
      %2546 = vmatpush1.msra.mxu0 0.0
      %2547 = vmatprep.subr.mxu0 0.0
      %2548 = vmatpush1.msra.mxu0 0.0
      %2549 = vmatprep.subr.mxu0 0.0
      %2550 = vmatpush1.msra.mxu0 0.0
      %2551 = vmatprep.subr.mxu0 0.0
      %2552 = vmatpush1.msra.mxu0 0.0
      %2553 = vmatprep.subr.mxu0 0.0
      %2554 = vmatpush1.msra.mxu0 0.0
      %2555 = vmatprep.subr.mxu0 0.0
      %2556 = vmatpush1.msra.mxu0 0.0
      %2557 = vmatprep.subr.mxu0 0.0
      %2558 = vmatpush1.msra.mxu0 0.0
      %2559 = vmatprep.subr.mxu0 0.0
      %2560 = vmatpush1.msra.mxu0 0.0
      %2561 = vmatprep.mubr.f32.mxu0 0.0
      %2562 = vmatmul.mubr.f32.gmra.mrb[0].mxu0 %v2486
      %v2563 = vpop.f32.mrb[0].mxu0
      %v2564 = vadd.f32 0.0, %v2563
      %v2565 = vpop.f32.mrb[0].mxu0
      %v2566 = vadd.f32 0.0, %v2565
      %2567 = vmatprep.mubr.f32.mxu0 0.0
      %2568 = vmatmul.mubr.f32.gmra.mrb[0].mxu0 %v2489
      %v2569 = vpop.f32.mrb[0].mxu0
      %v2570 = vadd.f32 0.0, %v2569
      %v2571 = vpop.f32.mrb[0].mxu0
      %v2572 = vadd.f32 0.0, %v2571
      %2573 = vmatprep.mubr.f32.mxu0 0.0
      %2574 = vmatmul.mubr.f32.gmra.mrb[0].mxu0 %v2492
      %v2575 = vpop.f32.mrb[0].mxu0
      %v2576 = vadd.f32 0.0, %v2575
      %v2577 = vpop.f32.mrb[0].mxu0
      %v2578 = vadd.f32 0.0, %v2577
      %2579 = vmatprep.mubr.f32.mxu0 0.0
      %2580 = vmatmul.mubr.f32.gmra.mrb[0].mxu0 %v2495
      %v2581 = vpop.f32.mrb[0].mxu0
      %v2582 = vadd.f32 0.0, %v2581
      %v2583 = vpop.f32.mrb[0].mxu0
      %v2584 = vadd.f32 0.0, %v2583
      %2585 = vdwg.mxu0
      %v2586 = vld [vmem:[%s11] sm:$0xff]
      %2588 = vset.pattern.permute.xlu0 0
      %2589 = vperm.xlu0 %2588, %v2586
      %v2590 = vpop.permute.xlu0 %2589
      %v2592 = vmul.f32 %v2590, %v947
      %v2593 = vmul.f32 %v2590, %v948
      %v2594 = vadd.f32 %v2592, %v2382
      %v2595 = vadd.f32 %v2593, %v2384
      %v2596 = vld [vmem:[%s12] sm:$0xff]
      %2598 = vset.pattern.permute.xlu0 0
      %2599 = vperm.xlu0 %2598, %v2596
      %v2600 = vpop.permute.xlu0 %2599
      %v2602 = vadd.f32 %v2594, %v2600
      %v2603 = vadd.f32 %v2595, %v2600
      %v2604 = vmax.f32 %v2602, 0.0
      %v2605 = vmax.f32 %v2603, 0.0
      %2606 = vst [vmem:[%s548] sm:$0xff] %v2604
      %2607 = vst [vmem:[%s548 + $0x8] sm:$0xff] %v2605
      %v2608 = vld [vmem:[%s13] sm:$0xff]
      %v2609 = vld [vmem:[%s13 + $0x8] sm:$0xff]
      %v2610 = vld [vmem:[%s13 + $0x10] sm:$0x1]
      %2612 = vset.pattern.permute.xlu0 0
      %2613 = vperm.xlu0 %2612, %v2608
      %v2614 = vpop.permute.xlu0 %2613
      %2617 = vset.pattern.permute.xlu0 0
      %2618 = vperm.xlu0 %2617, %v2609
      %v2619 = vpop.permute.xlu0 %2618
      %2622 = vset.pattern.permute.xlu0 0
      %2623 = vperm.xlu0 %2622, %v2610
      %v2624 = vpop.permute.xlu0 %2623
      %v2626 = vmul.f32 %v2614, %v1362
      %v2627 = vmul.f32 %v2614, %v1363
      %v2628 = vmul.f32 %v2619, %v1364
      %v2629 = vmul.f32 %v2619, %v1365
      %v2630 = vmul.f32 %v2624, %v1366
      %v2631 = vmul.f32 %v2624, %v1367
      %v2632 = vadd.f32 %v2626, %v2465
      %v2633 = vadd.f32 %v2627, %v2467
      %v2634 = vadd.f32 %v2628, %v2471
      %v2635 = vadd.f32 %v2629, %v2473
      %v2636 = vadd.f32 %v2630, %v2477
      %v2637 = vadd.f32 %v2631, %v2479
      %v2638 = vld [vmem:[%s14] sm:$0xff]
      %v2639 = vld [vmem:[%s14 + $0x8] sm:$0xff]
      %v2640 = vld [vmem:[%s14 + $0x10] sm:$0x1]
      %2642 = vset.pattern.permute.xlu0 0
      %2643 = vperm.xlu0 %2642, %v2638
      %v2644 = vpop.permute.xlu0 %2643
      %2647 = vset.pattern.permute.xlu0 0
      %2648 = vperm.xlu0 %2647, %v2639
      %v2649 = vpop.permute.xlu0 %2648
      %2652 = vset.pattern.permute.xlu0 0
      %2653 = vperm.xlu0 %2652, %v2640
      %v2654 = vpop.permute.xlu0 %2653
      %v2656 = vadd.f32 %v2632, %v2644
      %v2657 = vadd.f32 %v2633, %v2644
      %v2658 = vadd.f32 %v2634, %v2649
      %v2659 = vadd.f32 %v2635, %v2649
      %v2660 = vadd.f32 %v2636, %v2654
      %v2661 = vadd.f32 %v2637, %v2654
      %v2662 = vmax.f32 %v2656, 0.0
      %v2663 = vmax.f32 %v2657, 0.0
      %v2664 = vmax.f32 %v2658, 0.0
      %v2665 = vmax.f32 %v2659, 0.0
      %v2666 = vmax.f32 %v2660, 0.0
      %v2667 = vmax.f32 %v2661, 0.0
      %2668 = vst [vmem:[%s548 + $0x10] sm:$0xff] %v2662
      %2669 = vst [vmem:[%s548 + $0x18] sm:$0xff] %v2663
      %2670 = vst [vmem:[%s548 + $0x20] sm:$0xff] %v2664
      %2671 = vst [vmem:[%s548 + $0x28] sm:$0xff] %v2665
      %2672 = vst [vmem:[%s548 + $0x30] sm:$0x1] %v2666
      %2673 = vst [vmem:[%s548 + $0x38] sm:$0x1] %v2667
      %v2674 = vld [vmem:[%s15] sm:$0xff]
      %v2675 = vld [vmem:[%s15 + $0x8] sm:$0xff]
      %v2676 = vld [vmem:[%s15 + $0x10] sm:$0xff]
      %v2677 = vld [vmem:[%s15 + $0x18] sm:$0x3]
      %2679 = vset.pattern.permute.xlu0 0
      %2680 = vperm.xlu0 %2679, %v2674
      %v2681 = vpop.permute.xlu0 %2680
      %2684 = vset.pattern.permute.xlu0 0
      %2685 = vperm.xlu0 %2684, %v2675
      %v2686 = vpop.permute.xlu0 %2685
      %2689 = vset.pattern.permute.xlu0 0
      %2690 = vperm.xlu0 %2689, %v2676
      %v2691 = vpop.permute.xlu0 %2690
      %2694 = vset.pattern.permute.xlu0 0
      %2695 = vperm.xlu0 %2694, %v2677
      %v2696 = vpop.permute.xlu0 %2695
      %v2698 = vmul.f32 %v2681, %v2297
      %v2699 = vmul.f32 %v2681, %v2298
      %v2700 = vmul.f32 %v2686, %v2299
      %v2701 = vmul.f32 %v2686, %v2300
      %v2702 = vmul.f32 %v2691, %v2301
      %v2703 = vmul.f32 %v2691, %v2302
      %v2704 = vmul.f32 %v2696, %v2303
      %v2705 = vmul.f32 %v2696, %v2304
      %v2706 = vadd.f32 %v2698, %v2564
      %v2707 = vadd.f32 %v2699, %v2566
      %v2708 = vadd.f32 %v2700, %v2570
      %v2709 = vadd.f32 %v2701, %v2572
      %v2710 = vadd.f32 %v2702, %v2576
      %v2711 = vadd.f32 %v2703, %v2578
      %v2712 = vadd.f32 %v2704, %v2582
      %v2713 = vadd.f32 %v2705, %v2584
      %v2714 = vld [vmem:[%s16] sm:$0xff]
      %v2715 = vld [vmem:[%s16 + $0x8] sm:$0xff]
      %v2716 = vld [vmem:[%s16 + $0x10] sm:$0xff]
      %v2717 = vld [vmem:[%s16 + $0x18] sm:$0x3]
      %2719 = vset.pattern.permute.xlu0 0
      %2720 = vperm.xlu0 %2719, %v2714
      %v2721 = vpop.permute.xlu0 %2720
      %2724 = vset.pattern.permute.xlu0 0
      %2725 = vperm.xlu0 %2724, %v2715
      %v2726 = vpop.permute.xlu0 %2725
      %2729 = vset.pattern.permute.xlu0 0
      %2730 = vperm.xlu0 %2729, %v2716
      %v2731 = vpop.permute.xlu0 %2730
      %2734 = vset.pattern.permute.xlu0 0
      %2735 = vperm.xlu0 %2734, %v2717
      %v2736 = vpop.permute.xlu0 %2735
      %v2738 = vadd.f32 %v2706, %v2721
      %v2739 = vadd.f32 %v2707, %v2721
      %v2740 = vadd.f32 %v2708, %v2726
      %v2741 = vadd.f32 %v2709, %v2726
      %v2742 = vadd.f32 %v2710, %v2731
      %v2743 = vadd.f32 %v2711, %v2731
      %v2744 = vadd.f32 %v2712, %v2736
      %v2745 = vadd.f32 %v2713, %v2736
      %v2746 = vmax.f32 %v2738, 0.0
      %v2747 = vmax.f32 %v2739, 0.0
      %v2748 = vmax.f32 %v2740, 0.0
      %v2749 = vmax.f32 %v2741, 0.0
      %v2750 = vmax.f32 %v2742, 0.0
      %v2751 = vmax.f32 %v2743, 0.0
      %v2752 = vmax.f32 %v2744, 0.0
      %v2753 = vmax.f32 %v2745, 0.0
      %v2762 = vrot.slane %v2746, 7
      %v2763 = vrot.slane %v2747, 7
      %v2764 = vrot.slane %v2748, 7
      %v2765 = vsel %vm1457, %v2762, %v2764
      %v2766 = vrot.slane %v2749, 7
      %v2767 = vsel %vm1457, %v2763, %v2766
      %v2768 = vrot.slane %v2750, 7
      %v2769 = vsel %vm1457, %v2764, %v2768
      %v2770 = vrot.slane %v2751, 7
      %v2771 = vsel %vm1457, %v2766, %v2770
      %v2772 = vrot.slane %v2752, 7
      %v2773 = vsel %vm1457, %v2768, %v2772
      %v2774 = vrot.slane %v2753, 7
      %v2775 = vsel %vm1457, %v2770, %v2774
      %2784 = vst [vmem:[%s548 + $0x30] sm:$0xfe] %v2762
      %2785 = vst [vmem:[%s548 + $0x38] sm:$0xfe] %v2763
      %2786 = vst [vmem:[%s548 + $0x40] sm:$0xff] %v2765
      %2787 = vst [vmem:[%s548 + $0x48] sm:$0xff] %v2767
      %2788 = vst [vmem:[%s548 + $0x50] sm:$0xff] %v2769
      %2789 = vst [vmem:[%s548 + $0x58] sm:$0xff] %v2771
      %2790 = vst [vmem:[%s548 + $0x60] sm:$0x7] %v2773
      %2791 = vst [vmem:[%s548 + $0x68] sm:$0x7] %v2775
      %p2792 = scmp.lt.s32.totalorder %s28, 1
      %s2793 = scalar_select %p2792, %s28, 1
      %s2794 = smul.addr %s2793, 14
      %s2795 = smul.addr %s2794, 8
      %s2796 = scalar_lea.vmem %s17, %s2795
      // Predicated region
      $region89: #{multiresblock_forward.1} parent=87 // pred_check
        %p2797 = pneg %p408
      $region90: #{multiresblock_forward.1} parent=87 // pred_check_branch
        %2799 = sbr.rel (%p2797) target = $region92
      $region91: #{multiresblock_forward.1} parent=87 // pred_region
        _
      $region92: #{multiresblock_forward.1} parent=87 // pred_fallthru
        _
    $region88: #{multiresblock_forward.1} parent=5 // pred_fallthru
      _
    %p2800 = scmp.le.s32.totalorder 2, %s23
    // Predicated region
    $region93: #{multiresblock_forward.1} parent=5 // pred_check
      %p2801 = pneg %p2800
    $region94: #{multiresblock_forward.1} parent=5 // pred_check_branch
      %2803 = sbr.rel (%p2801) target = $region96
    $region95: #{multiresblock_forward.1} parent=5 // pred_region
      %s2804 = ssub.s32 %s23, 2
      // Predicated region
      $region97: #{multiresblock_forward.1} parent=95 // pred_check
        %p2805 = pneg %p414
      $region98: #{multiresblock_forward.1} parent=95 // pred_check_branch
        %2807 = sbr.rel (%p2805) target = $region100
      $region99: #{multiresblock_forward.1} parent=95 // pred_region
        %p2808 = scmp.lt.s32.totalorder %s29, 1
        %s2809 = scalar_select %p2808, %s29, 1
        %s2810 = smul.addr %s2809, 14
        %s2811 = smul.addr %s2810, 8
        %s2812 = scalar_lea.vmem %s17, %s2811
      $region100: #{multiresblock_forward.1} parent=95 // pred_fallthru
        _
    $region96: #{multiresblock_forward.1} parent=5 // pred_fallthru
      _
  $region6: #{multiresblock_forward.1} parent=0 // loop_footer
    %s27 = sadd.s32 1, %s23
  $region7: #{multiresblock_forward.1} parent=0 // loop_footer_branch
    %22 = sbr.rel target = $region3
  $region8: #{multiresblock_forward.1} parent=0 // loop_exit
    _

</llo_original>
